<compile_context>
chip_gen: v7x
topology: tpu7x:2x2x1
jax: 0.10.0
libtpu: 0.0.40
codegen_flags: <defaults>
</compile_context>

<pallas_src>
import functools

import jax
import jax.numpy as jnp
from jax import lax
from jax.experimental import pallas as pl
from jax.experimental.pallas import tpu as pltpu


def _round_up(x, m):
    return ((x + m - 1) // m) * m


def _pick_tile(c, candidates=(256, 128)):
    for t in candidates:
        if c % t == 0:
            return t
    return c


def _aspp_conv_kernel(x_ref, w_ref, scale_ref, bias_ref, o_ref, acc_ref, *,
                      H, W, K, dilation):
    """Grid = (N, Cout_tiles, Cin_tiles); Cin (axis 2) is the reduction axis.

    x_ref:     (1, Hp, Wp, cin_t)      zero-padded input tile (NHWC, bf16)
    w_ref:     (K, K, cin_t, cout_t)   conv weights (bf16)
    scale_ref: (1, cout_t)             folded BN scale  = gamma / sqrt(var+eps)
    bias_ref:  (1, cout_t)             folded BN bias   = beta - mean * scale
    o_ref:     (1, H, W, cout_t)       output tile (NHWC, f32, lane-dense)
    acc_ref:   (H*W, cout_t)           f32 VMEM scratch accumulator
    """
    ci = pl.program_id(2)

    @pl.when(ci == 0)
    def _():
        acc_ref[...] = jnp.zeros_like(acc_ref)

    cin_t = x_ref.shape[-1]
    acc = acc_ref[...]
    # Dilated conv as a sum of K*K shifted-window matmuls on the MXU
    # (bf16 operands, f32 accumulation).
    for kh in range(K):
        ho = kh * dilation
        for kw in range(K):
            wo = kw * dilation
            patch = x_ref[0, ho:ho + H, wo:wo + W, :]           # (H, W, cin_t)
            acc = acc + jnp.dot(
                patch.reshape(H * W, cin_t),
                w_ref[kh, kw],                                   # (cin_t, cout_t)
                preferred_element_type=jnp.float32,
            )
    acc_ref[...] = acc

    @pl.when(ci == pl.num_programs(2) - 1)
    def _():
        y = acc * scale_ref[0] + bias_ref[0]                     # fused BN
        y = jnp.maximum(y, 0.0)                                  # ReLU
        o_ref[0] = y.reshape(H, W, -1).astype(o_ref.dtype)


def aspp_conv_forward(x_nchw, weight_oikk, gamma, beta, running_mean,
                      running_var, *, padding, dilation, eps=1e-5):
    """ASPPConv forward.  x_nchw: (N, Cin, H, W) float32 (PyTorch layout)."""
    N, Cin, H, W = x_nchw.shape
    Cout, Cin_w, K, K2 = weight_oikk.shape
    assert Cin_w == Cin and K == K2

    Hp = H + 2 * padding
    Wp = W + 2 * padding
    H_out = H + 2 * padding - dilation * (K - 1)
    W_out = W + 2 * padding - dilation * (K - 1)

    # Lane-dense output: pad Cout up to a multiple of 128.
    Cout_p = _round_up(Cout, 128)

    # ---- glue (plain JAX): layout, halo padding, BN folding, bf16 cast ----
    # TODO(synk): keep activations NHWC end-to-end and handle the conv halo
    # inside the kernel (index_map window + masked taps) to avoid the
    # transpose + jnp.pad HBM round trips.
    x = jnp.transpose(x_nchw, (0, 2, 3, 1))                      # NHWC
    x = jnp.pad(x, ((0, 0), (padding, padding), (padding, padding), (0, 0)))
    x = x.astype(jnp.bfloat16)

    w = jnp.transpose(weight_oikk, (2, 3, 1, 0))                 # (K,K,Cin,Cout)
    scale = gamma / jnp.sqrt(running_var + eps)
    bias = beta - running_mean * scale
    if Cout_p != Cout:
        w = jnp.pad(w, ((0, 0), (0, 0), (0, 0), (0, Cout_p - Cout)))
        scale = jnp.pad(scale, ((0, Cout_p - Cout),))
        bias = jnp.pad(bias, ((0, Cout_p - Cout),))
    w = w.astype(jnp.bfloat16)
    scale = scale.reshape(1, Cout_p).astype(jnp.float32)
    bias = bias.reshape(1, Cout_p).astype(jnp.float32)

    # Channel tiling (Cin is the pipelined reduction axis).
    cin_tile = _pick_tile(Cin)
    cout_tile = _pick_tile(Cout_p)
    n_ci = Cin // cin_tile
    n_co = Cout_p // cout_tile
    # TODO(synk): spatial (H) tiling with halo for very large feature maps.

    # VMEM budget for the chosen tiles (double-buffered in/out + scratch).
    bytes_x = Hp * Wp * cin_tile * 2
    bytes_w = K * K * cin_tile * cout_tile * 2
    bytes_out = H_out * W_out * cout_tile * 4
    bytes_sb = 2 * 1 * cout_tile * 4
    bytes_scratch = H_out * W_out * cout_tile * 4
    need = 2 * (bytes_x + bytes_w + bytes_out + bytes_sb) + bytes_scratch
    vmem_limit = int(min(max(2 * need, 32 * 1024 * 1024), 64 * 1024 * 1024))

    cost = pl.CostEstimate(
        flops=2 * N * H_out * W_out * K * K * Cin * Cout_p,
        transcendentals=0,
        bytes_accessed=(N * Hp * Wp * Cin * 2
                        + K * K * Cin * Cout_p * 2
                        + N * H_out * W_out * Cout_p * 4),
    )

    kernel = functools.partial(
        _aspp_conv_kernel, H=H_out, W=W_out, K=K, dilation=dilation)

    out_nhwc = pl.pallas_call(
        kernel,
        out_shape=jax.ShapeDtypeStruct((N, H_out, W_out, Cout_p), jnp.float32),
        grid_spec=pltpu.PrefetchScalarGridSpec(
            num_scalar_prefetch=0,
            grid=(N, n_co, n_ci),
            in_specs=[
                pl.BlockSpec((1, Hp, Wp, cin_tile),
                             lambda n, co, ci: (n, 0, 0, ci)),
                pl.BlockSpec((K, K, cin_tile, cout_tile),
                             lambda n, co, ci: (0, 0, ci, co)),
                pl.BlockSpec((1, cout_tile), lambda n, co, ci: (0, co)),
                pl.BlockSpec((1, cout_tile), lambda n, co, ci: (0, co)),
            ],
            out_specs=pl.BlockSpec((1, H_out, W_out, cout_tile),
                                   lambda n, co, ci: (n, 0, 0, co)),
            scratch_shapes=[pltpu.VMEM((H_out * W_out, cout_tile),
                                       jnp.float32)],
        ),
        compiler_params=pltpu.CompilerParams(
            dimension_semantics=("parallel", "parallel", "arbitrary"),
            vmem_limit_bytes=vmem_limit),
        cost_estimate=cost,
    )(x, w, scale, bias)

    out_nhwc = out_nhwc[..., :Cout]                              # drop lane pad
    return jnp.transpose(out_nhwc, (0, 3, 1, 2))                 # back to NCHW


def _reference(x_nchw, weight_oikk, gamma, beta, running_mean, running_var,
               *, padding, dilation, eps=1e-5):
    y = lax.conv_general_dilated(
        x_nchw, weight_oikk,
        window_strides=(1, 1),
        padding=((padding, padding), (padding, padding)),
        rhs_dilation=(dilation, dilation),
        dimension_numbers=("NCHW", "OIHW", "NCHW"))
    scale = (gamma / jnp.sqrt(running_var + eps)).reshape(1, -1, 1, 1)
    bias = (beta - running_mean * gamma / jnp.sqrt(running_var + eps)
            ).reshape(1, -1, 1, 1)
    return jnp.maximum(y * scale + bias, 0.0)


if __name__ == "__main__":
    # Small ASPP branch: inplanes=4, outplanes=8, kernel_size=3,
    # padding=dilation=2 (atrous).
    N, Cin, H, W = 2, 4, 16, 16
    Cout, K, padding, dilation = 8, 3, 2, 2

    key = jax.random.PRNGKey(0)
    kx, kw, kg, kb, km, kv = jax.random.split(key, 6)

    x = jax.random.normal(kx, (N, Cin, H, W), dtype=jnp.float32)
    weight = jax.random.normal(kw, (Cout, Cin, K, K), dtype=jnp.float32) * 0.1
    gamma = jax.random.uniform(kg, (Cout,), minval=0.5, maxval=1.5,
                               dtype=jnp.float32)
    beta = jax.random.normal(kb, (Cout,), dtype=jnp.float32) * 0.1
    running_mean = jax.random.normal(km, (Cout,), dtype=jnp.float32) * 0.1
    running_var = jax.random.uniform(kv, (Cout,), minval=0.5, maxval=1.5,
                                     dtype=jnp.float32)

    out = aspp_conv_forward(x, weight, gamma, beta, running_mean, running_var,
                            padding=padding, dilation=dilation)
    out = jax.block_until_ready(out)

    ref = _reference(x, weight, gamma, beta, running_mean, running_var,
                     padding=padding, dilation=dilation)
    assert out.shape == ref.shape, (out.shape, ref.shape)
    # bf16 MXU operands (f32 accumulation) vs f32 reference -> relaxed tol.
    assert jnp.allclose(out, ref, atol=5e-2, rtol=5e-2), "mismatch vs reference"

    print("KERNEL_OK")
</pallas_src>

<mosaic_0001>
module attributes {stable_mosaic.version = 11 : i64} {
  func.func @_aspp_conv_kernel(%arg0: i32, %arg1: i32, %arg2: i32, %arg3: memref<1x20x20x4xbf16, #tpu.memory_space<vmem>>, %arg4: memref<3x3x4x128xbf16, #tpu.memory_space<vmem>>, %arg5: memref<1x128xf32, #tpu.memory_space<vmem>>, %arg6: memref<1x128xf32, #tpu.memory_space<vmem>>, %arg7: memref<1x16x16x128xf32, #tpu.memory_space<vmem>>, %arg8: memref<256x128xf32, #tpu.memory_space<vmem>>) attributes {dimension_semantics = [#tpu.dimension_semantics<parallel>, #tpu.dimension_semantics<parallel>, #tpu.dimension_semantics<arbitrary>], iteration_bounds = array<i64: 2, 1, 1>, scalar_prefetch = 0 : i64, scratch_operands = 1 : i64, tpu.core_type = #tpu.core_type<tc>, window_params = [{transform_indices = @transform_0, window_bounds = array<i64: 1, 20, 20, 4>}, {transform_indices = @transform_1, window_bounds = array<i64: 3, 3, 4, 128>}, {transform_indices = @transform_2, window_bounds = array<i64: 1, 128>}, {transform_indices = @transform_3, window_bounds = array<i64: 1, 128>}, {transform_indices = @transform_4, window_bounds = array<i64: 1, 16, 16, 128>}]} {
    %c0_i32 = arith.constant 0 : i32
    %0 = arith.cmpi eq, %arg2, %c0_i32 : i32
    %1 = arith.extui %0 : i1 to i32
    %c0_i32_0 = arith.constant 0 : i32
    %2 = arith.cmpi ne, %1, %c0_i32_0 : i32
    scf.if %2 {
      %cst_83 = arith.constant 0.000000e+00 : f32
      %71 = vector.broadcast %cst_83 : f32 to vector<256x128xf32>
      %c0_84 = arith.constant 0 : index
      %c0_85 = arith.constant 0 : index
      %72 = vector.load %arg8[%c0_84, %c0_85] : memref<256x128xf32, #tpu.memory_space<vmem>>, vector<256x128xf32>
      tpu.vector_store %arg8[%c0_84, %c0_85], %71 {strides = array<i32>} : memref<256x128xf32, #tpu.memory_space<vmem>>, vector<256x128xf32>,
    } else {
    }
    %c0 = arith.constant 0 : index
    %c0_1 = arith.constant 0 : index
    %3 = vector.load %arg8[%c0, %c0_1] : memref<256x128xf32, #tpu.memory_space<vmem>>, vector<256x128xf32>
    %c0_2 = arith.constant 0 : index
    %c0_3 = arith.constant 0 : index
    %c0_4 = arith.constant 0 : index
    %c0_5 = arith.constant 0 : index
    %4 = vector.load %arg3[%c0_2, %c0_3, %c0_4, %c0_5] : memref<1x20x20x4xbf16, #tpu.memory_space<vmem>>, vector<1x16x16x4xbf16>
    %5 = vector.shape_cast %4 : vector<1x16x16x4xbf16> to vector<16x16x4xbf16>
    %6 = vector.shape_cast %5 : vector<16x16x4xbf16> to vector<256x4xbf16>
    %c0_6 = arith.constant 0 : index
    %c0_7 = arith.constant 0 : index
    %c0_8 = arith.constant 0 : index
    %c0_9 = arith.constant 0 : index
    %7 = vector.load %arg4[%c0_6, %c0_7, %c0_8, %c0_9] : memref<3x3x4x128xbf16, #tpu.memory_space<vmem>>, vector<1x1x4x128xbf16>
    %8 = vector.shape_cast %7 : vector<1x1x4x128xbf16> to vector<4x128xbf16>
    %cst = arith.constant dense<0.000000e+00> : vector<256x128xf32>
    %9 = tpu.matmul %6, %8, %cst {dimension_numbers = #tpu.dot_dimension_numbers<[1], [0], [0], [1], [0, 0, 1, 1], [], []>} : vector<256x4xbf16>, vector<4x128xbf16>, vector<256x128xf32> -> vector<256x128xf32>
    %10 = arith.addf %3, %9 : vector<256x128xf32>
    %c0_10 = arith.constant 0 : index
    %c0_11 = arith.constant 0 : index
    %c2 = arith.constant 2 : index
    %c0_12 = arith.constant 0 : index
    %11 = vector.load %arg3[%c0_10, %c0_11, %c2, %c0_12] : memref<1x20x20x4xbf16, #tpu.memory_space<vmem>>, vector<1x16x16x4xbf16>
    %12 = vector.shape_cast %11 : vector<1x16x16x4xbf16> to vector<16x16x4xbf16>
    %13 = vector.shape_cast %12 : vector<16x16x4xbf16> to vector<256x4xbf16>
    %c0_13 = arith.constant 0 : index
    %c1 = arith.constant 1 : index
    %c0_14 = arith.constant 0 : index
    %c0_15 = arith.constant 0 : index
    %14 = vector.load %arg4[%c0_13, %c1, %c0_14, %c0_15] : memref<3x3x4x128xbf16, #tpu.memory_space<vmem>>, vector<1x1x4x128xbf16>
    %15 = vector.shape_cast %14 : vector<1x1x4x128xbf16> to vector<4x128xbf16>
    %cst_16 = arith.constant dense<0.000000e+00> : vector<256x128xf32>
    %16 = tpu.matmul %13, %15, %cst_16 {dimension_numbers = #tpu.dot_dimension_numbers<[1], [0], [0], [1], [0, 0, 1, 1], [], []>} : vector<256x4xbf16>, vector<4x128xbf16>, vector<256x128xf32> -> vector<256x128xf32>
    %17 = arith.addf %10, %16 : vector<256x128xf32>
    %c0_17 = arith.constant 0 : index
    %c0_18 = arith.constant 0 : index
    %c4 = arith.constant 4 : index
    %c0_19 = arith.constant 0 : index
    %18 = vector.load %arg3[%c0_17, %c0_18, %c4, %c0_19] : memref<1x20x20x4xbf16, #tpu.memory_space<vmem>>, vector<1x16x16x4xbf16>
    %19 = vector.shape_cast %18 : vector<1x16x16x4xbf16> to vector<16x16x4xbf16>
    %20 = vector.shape_cast %19 : vector<16x16x4xbf16> to vector<256x4xbf16>
    %c0_20 = arith.constant 0 : index
    %c2_21 = arith.constant 2 : index
    %c0_22 = arith.constant 0 : index
    %c0_23 = arith.constant 0 : index
    %21 = vector.load %arg4[%c0_20, %c2_21, %c0_22, %c0_23] : memref<3x3x4x128xbf16, #tpu.memory_space<vmem>>, vector<1x1x4x128xbf16>
    %22 = vector.shape_cast %21 : vector<1x1x4x128xbf16> to vector<4x128xbf16>
    %cst_24 = arith.constant dense<0.000000e+00> : vector<256x128xf32>
    %23 = tpu.matmul %20, %22, %cst_24 {dimension_numbers = #tpu.dot_dimension_numbers<[1], [0], [0], [1], [0, 0, 1, 1], [], []>} : vector<256x4xbf16>, vector<4x128xbf16>, vector<256x128xf32> -> vector<256x128xf32>
    %24 = arith.addf %17, %23 : vector<256x128xf32>
    %c0_25 = arith.constant 0 : index
    %c2_26 = arith.constant 2 : index
    %c0_27 = arith.constant 0 : index
    %c0_28 = arith.constant 0 : index
    %25 = vector.load %arg3[%c0_25, %c2_26, %c0_27, %c0_28] : memref<1x20x20x4xbf16, #tpu.memory_space<vmem>>, vector<1x16x16x4xbf16>
    %26 = vector.shape_cast %25 : vector<1x16x16x4xbf16> to vector<16x16x4xbf16>
    %27 = vector.shape_cast %26 : vector<16x16x4xbf16> to vector<256x4xbf16>
    %c1_29 = arith.constant 1 : index
    %c0_30 = arith.constant 0 : index
    %c0_31 = arith.constant 0 : index
    %c0_32 = arith.constant 0 : index
    %28 = vector.load %arg4[%c1_29, %c0_30, %c0_31, %c0_32] : memref<3x3x4x128xbf16, #tpu.memory_space<vmem>>, vector<1x1x4x128xbf16>
    %29 = vector.shape_cast %28 : vector<1x1x4x128xbf16> to vector<4x128xbf16>
    %cst_33 = arith.constant dense<0.000000e+00> : vector<256x128xf32>
    %30 = tpu.matmul %27, %29, %cst_33 {dimension_numbers = #tpu.dot_dimension_numbers<[1], [0], [0], [1], [0, 0, 1, 1], [], []>} : vector<256x4xbf16>, vector<4x128xbf16>, vector<256x128xf32> -> vector<256x128xf32>
    %31 = arith.addf %24, %30 : vector<256x128xf32>
    %c0_34 = arith.constant 0 : index
    %c2_35 = arith.constant 2 : index
    %c2_36 = arith.constant 2 : index
    %c0_37 = arith.constant 0 : index
    %32 = vector.load %arg3[%c0_34, %c2_35, %c2_36, %c0_37] : memref<1x20x20x4xbf16, #tpu.memory_space<vmem>>, vector<1x16x16x4xbf16>
    %33 = vector.shape_cast %32 : vector<1x16x16x4xbf16> to vector<16x16x4xbf16>
    %34 = vector.shape_cast %33 : vector<16x16x4xbf16> to vector<256x4xbf16>
    %c1_38 = arith.constant 1 : index
    %c1_39 = arith.constant 1 : index
    %c0_40 = arith.constant 0 : index
    %c0_41 = arith.constant 0 : index
    %35 = vector.load %arg4[%c1_38, %c1_39, %c0_40, %c0_41] : memref<3x3x4x128xbf16, #tpu.memory_space<vmem>>, vector<1x1x4x128xbf16>
    %36 = vector.shape_cast %35 : vector<1x1x4x128xbf16> to vector<4x128xbf16>
    %cst_42 = arith.constant dense<0.000000e+00> : vector<256x128xf32>
    %37 = tpu.matmul %34, %36, %cst_42 {dimension_numbers = #tpu.dot_dimension_numbers<[1], [0], [0], [1], [0, 0, 1, 1], [], []>} : vector<256x4xbf16>, vector<4x128xbf16>, vector<256x128xf32> -> vector<256x128xf32>
    %38 = arith.addf %31, %37 : vector<256x128xf32>
    %c0_43 = arith.constant 0 : index
    %c2_44 = arith.constant 2 : index
    %c4_45 = arith.constant 4 : index
    %c0_46 = arith.constant 0 : index
    %39 = vector.load %arg3[%c0_43, %c2_44, %c4_45, %c0_46] : memref<1x20x20x4xbf16, #tpu.memory_space<vmem>>, vector<1x16x16x4xbf16>
    %40 = vector.shape_cast %39 : vector<1x16x16x4xbf16> to vector<16x16x4xbf16>
    %41 = vector.shape_cast %40 : vector<16x16x4xbf16> to vector<256x4xbf16>
    %c1_47 = arith.constant 1 : index
    %c2_48 = arith.constant 2 : index
    %c0_49 = arith.constant 0 : index
    %c0_50 = arith.constant 0 : index
    %42 = vector.load %arg4[%c1_47, %c2_48, %c0_49, %c0_50] : memref<3x3x4x128xbf16, #tpu.memory_space<vmem>>, vector<1x1x4x128xbf16>
    %43 = vector.shape_cast %42 : vector<1x1x4x128xbf16> to vector<4x128xbf16>
    %cst_51 = arith.constant dense<0.000000e+00> : vector<256x128xf32>
    %44 = tpu.matmul %41, %43, %cst_51 {dimension_numbers = #tpu.dot_dimension_numbers<[1], [0], [0], [1], [0, 0, 1, 1], [], []>} : vector<256x4xbf16>, vector<4x128xbf16>, vector<256x128xf32> -> vector<256x128xf32>
    %45 = arith.addf %38, %44 : vector<256x128xf32>
    %c0_52 = arith.constant 0 : index
    %c4_53 = arith.constant 4 : index
    %c0_54 = arith.constant 0 : index
    %c0_55 = arith.constant 0 : index
    %46 = vector.load %arg3[%c0_52, %c4_53, %c0_54, %c0_55] : memref<1x20x20x4xbf16, #tpu.memory_space<vmem>>, vector<1x16x16x4xbf16>
    %47 = vector.shape_cast %46 : vector<1x16x16x4xbf16> to vector<16x16x4xbf16>
    %48 = vector.shape_cast %47 : vector<16x16x4xbf16> to vector<256x4xbf16>
    %c2_56 = arith.constant 2 : index
    %c0_57 = arith.constant 0 : index
    %c0_58 = arith.constant 0 : index
    %c0_59 = arith.constant 0 : index
    %49 = vector.load %arg4[%c2_56, %c0_57, %c0_58, %c0_59] : memref<3x3x4x128xbf16, #tpu.memory_space<vmem>>, vector<1x1x4x128xbf16>
    %50 = vector.shape_cast %49 : vector<1x1x4x128xbf16> to vector<4x128xbf16>
    %cst_60 = arith.constant dense<0.000000e+00> : vector<256x128xf32>
    %51 = tpu.matmul %48, %50, %cst_60 {dimension_numbers = #tpu.dot_dimension_numbers<[1], [0], [0], [1], [0, 0, 1, 1], [], []>} : vector<256x4xbf16>, vector<4x128xbf16>, vector<256x128xf32> -> vector<256x128xf32>
    %52 = arith.addf %45, %51 : vector<256x128xf32>
    %c0_61 = arith.constant 0 : index
    %c4_62 = arith.constant 4 : index
    %c2_63 = arith.constant 2 : index
    %c0_64 = arith.constant 0 : index
    %53 = vector.load %arg3[%c0_61, %c4_62, %c2_63, %c0_64] : memref<1x20x20x4xbf16, #tpu.memory_space<vmem>>, vector<1x16x16x4xbf16>
    %54 = vector.shape_cast %53 : vector<1x16x16x4xbf16> to vector<16x16x4xbf16>
    %55 = vector.shape_cast %54 : vector<16x16x4xbf16> to vector<256x4xbf16>
    %c2_65 = arith.constant 2 : index
    %c1_66 = arith.constant 1 : index
    %c0_67 = arith.constant 0 : index
    %c0_68 = arith.constant 0 : index
    %56 = vector.load %arg4[%c2_65, %c1_66, %c0_67, %c0_68] : memref<3x3x4x128xbf16, #tpu.memory_space<vmem>>, vector<1x1x4x128xbf16>
    %57 = vector.shape_cast %56 : vector<1x1x4x128xbf16> to vector<4x128xbf16>
    %cst_69 = arith.constant dense<0.000000e+00> : vector<256x128xf32>
    %58 = tpu.matmul %55, %57, %cst_69 {dimension_numbers = #tpu.dot_dimension_numbers<[1], [0], [0], [1], [0, 0, 1, 1], [], []>} : vector<256x4xbf16>, vector<4x128xbf16>, vector<256x128xf32> -> vector<256x128xf32>
    %59 = arith.addf %52, %58 : vector<256x128xf32>
    %c0_70 = arith.constant 0 : index
    %c4_71 = arith.constant 4 : index
    %c4_72 = arith.constant 4 : index
    %c0_73 = arith.constant 0 : index
    %60 = vector.load %arg3[%c0_70, %c4_71, %c4_72, %c0_73] : memref<1x20x20x4xbf16, #tpu.memory_space<vmem>>, vector<1x16x16x4xbf16>
    %61 = vector.shape_cast %60 : vector<1x16x16x4xbf16> to vector<16x16x4xbf16>
    %62 = vector.shape_cast %61 : vector<16x16x4xbf16> to vector<256x4xbf16>
    %c2_74 = arith.constant 2 : index
    %c2_75 = arith.constant 2 : index
    %c0_76 = arith.constant 0 : index
    %c0_77 = arith.constant 0 : index
    %63 = vector.load %arg4[%c2_74, %c2_75, %c0_76, %c0_77] : memref<3x3x4x128xbf16, #tpu.memory_space<vmem>>, vector<1x1x4x128xbf16>
    %64 = vector.shape_cast %63 : vector<1x1x4x128xbf16> to vector<4x128xbf16>
    %cst_78 = arith.constant dense<0.000000e+00> : vector<256x128xf32>
    %65 = tpu.matmul %62, %64, %cst_78 {dimension_numbers = #tpu.dot_dimension_numbers<[1], [0], [0], [1], [0, 0, 1, 1], [], []>} : vector<256x4xbf16>, vector<4x128xbf16>, vector<256x128xf32> -> vector<256x128xf32>
    %66 = arith.addf %59, %65 : vector<256x128xf32>
    %c0_79 = arith.constant 0 : index
    %c0_80 = arith.constant 0 : index
    %67 = vector.load %arg8[%c0_79, %c0_80] : memref<256x128xf32, #tpu.memory_space<vmem>>, vector<256x128xf32>
    tpu.vector_store %arg8[%c0_79, %c0_80], %66 {strides = array<i32>} : memref<256x128xf32, #tpu.memory_space<vmem>>, vector<256x128xf32>,
    %c0_i32_81 = arith.constant 0 : i32
    %68 = arith.cmpi eq, %arg2, %c0_i32_81 : i32
    %69 = arith.extui %68 : i1 to i32
    %c0_i32_82 = arith.constant 0 : i32
    %70 = arith.cmpi ne, %69, %c0_i32_82 : i32
    scf.if %70 {
      %c0_83 = arith.constant 0 : index
      %c0_84 = arith.constant 0 : index
      %71 = vector.load %arg5[%c0_83, %c0_84] : memref<1x128xf32, #tpu.memory_space<vmem>>, vector<1x128xf32>
      %72 = vector.shape_cast %71 : vector<1x128xf32> to vector<128xf32>
      %73 = vector.shape_cast %72 : vector<128xf32> to vector<1x128xf32>
      %74 = vector.broadcast %73 : vector<1x128xf32> to vector<256x128xf32>
      %75 = arith.mulf %66, %74 : vector<256x128xf32>
      %c0_85 = arith.constant 0 : index
      %c0_86 = arith.constant 0 : index
      %76 = vector.load %arg6[%c0_85, %c0_86] : memref<1x128xf32, #tpu.memory_space<vmem>>, vector<1x128xf32>
      %77 = vector.shape_cast %76 : vector<1x128xf32> to vector<128xf32>
      %78 = vector.shape_cast %77 : vector<128xf32> to vector<1x128xf32>
      %79 = vector.broadcast %78 : vector<1x128xf32> to vector<256x128xf32>
      %80 = arith.addf %75, %79 : vector<256x128xf32>
      %cst_87 = arith.constant 0.000000e+00 : f32
      %81 = vector.broadcast %cst_87 : f32 to vector<256x128xf32>
      %82 = arith.maximumf %80, %81 : vector<256x128xf32>
      %83 = vector.shape_cast %82 : vector<256x128xf32> to vector<16x16x128xf32>
      %c0_88 = arith.constant 0 : index
      %c0_89 = arith.constant 0 : index
      %c0_90 = arith.constant 0 : index
      %c0_91 = arith.constant 0 : index
      %84 = vector.load %arg7[%c0_88, %c0_89, %c0_90, %c0_91] : memref<1x16x16x128xf32, #tpu.memory_space<vmem>>, vector<1x16x16x128xf32>
      %85 = vector.shape_cast %84 : vector<1x16x16x128xf32> to vector<16x16x128xf32>
      %86 = vector.shape_cast %83 : vector<16x16x128xf32> to vector<1x16x16x128xf32>
      tpu.vector_store %arg7[%c0_88, %c0_89, %c0_90, %c0_91], %86 {strides = array<i32>} : memref<1x16x16x128xf32, #tpu.memory_space<vmem>>, vector<1x16x16x128xf32>,
    } else {
    }
    return
  }
  func.func @transform_0(%arg0: i32, %arg1: i32, %arg2: i32) -> (i32, i32, i32, i32) {
    %c0_i32 = arith.constant 0 : i32
    %c0_i32_0 = arith.constant 0 : i32
    %c0_i32_1 = arith.constant 0 : i32
    return %arg0, %c0_i32, %c0_i32_0, %arg2 : i32, i32, i32, i32
  }
  func.func @transform_1(%arg0: i32, %arg1: i32, %arg2: i32) -> (i32, i32, i32, i32) {
    %c0_i32 = arith.constant 0 : i32
    %c0_i32_0 = arith.constant 0 : i32
    %c0_i32_1 = arith.constant 0 : i32
    return %c0_i32, %c0_i32_0, %arg2, %arg1 : i32, i32, i32, i32
  }
  func.func @transform_2(%arg0: i32, %arg1: i32, %arg2: i32) -> (i32, i32) {
    %c0_i32 = arith.constant 0 : i32
    %c0_i32_0 = arith.constant 0 : i32
    return %c0_i32, %arg1 : i32, i32
  }
  func.func @transform_3(%arg0: i32, %arg1: i32, %arg2: i32) -> (i32, i32) {
    %c0_i32 = arith.constant 0 : i32
    %c0_i32_0 = arith.constant 0 : i32
    return %c0_i32, %arg1 : i32, i32
  }
  func.func @transform_4(%arg0: i32, %arg1: i32, %arg2: i32) -> (i32, i32, i32, i32) {
    %c0_i32 = arith.constant 0 : i32
    %c0_i32_0 = arith.constant 0 : i32
    %c0_i32_1 = arith.constant 0 : i32
    return %arg0, %c0_i32, %c0_i32_0, %arg1 : i32, i32, i32, i32
  }
}

</mosaic_0001>

<llo_original>
// kernel: tpu_custom_call.1
$region0: #{tpu_custom_call.1}
  #allocation0 [shape = 'u32[]', space=smem, size = 0x4, offset = 0x4, fixed_abs, tag = 'smem constant byte address 0x4 - core index']
  #allocation1 [shape = 'u32[144,128]{1,0:T(1,128)}', space=vmem, size = 0x12000, scoped, tag = 'internal scratch']
  #allocation2 [shape = 'f32[256,128]{1,0:T(8,128)}', space=vmem, size = 0x20000, scoped, tag = 'scratch operand']
  %s0 = inlined_call_operand.vmem [shape: bf16[2,20,20,4], index: 0, kind: input, shape index: {}]
  %s1 = inlined_call_operand.vmem [shape: bf16[3,3,4,128], index: 1, kind: input, shape index: {}]
  %s2 = inlined_call_operand.vmem [shape: f32[1,128], index: 2, kind: input, shape index: {}]
  %s3 = inlined_call_operand.vmem [shape: f32[1,128], index: 3, kind: input, shape index: {}]
  %s4 = inlined_call_operand.hbm [shape: f32[2,16,16,128], index: 4, kind: output, shape index: {}]
  %s5 = sld [smem:[#allocation0]]
  $region57: #{tpu_custom_call.1} parent=0
    _
  %s7 = ssub.s32 1, %s5
  %s8 = scalar_select 0, %s7, %s5
  $region1: #{tpu_custom_call.1} parent=0
    #allocation3 [shape = 'u8[262144]{0}', space=vmem, size = 0x40000, scoped, tag = 'output window, operand 0']
    #allocation4 [shape = 's32[2]{0}', space=sflag, size = 0x8, scoped, tag = 'scoped memory for tpu_custom_call.1']
    %9 = vsyncpa [#allocation4], 0
    %s10 = scalar_lea.sflag [#allocation4], 1
    %11 = vsyncpa %s10, 0
    loop: start=0, step=1, limit=4
    $region2: #{tpu_custom_call.1} parent=1 // loop_pre_header
      _
    $region3: #{tpu_custom_call.1} parent=1 // loop_header
      %s13 = sphi 0, %s17
      %p14 = scmp.ge.s32.totalorder %s13, 4
      %s20 = sphi 0, %s39
      %s21 = sphi 0, %s35
      %s22 = sphi 0, %s31
      %s23 = sphi 0, %s20
      %s24 = sphi 0, %s21
      %s25 = sphi 0, %s22
      %s26 = sphi 0, %s23
      %s27 = sphi 0, %s24
      %s28 = sphi 0, %s25
      %s44 = sphi 0, %s46
      %s47 = sphi 0, %s44
      %s48 = sphi 0, %s47
      %s64 = sphi 0, %s48
      %s72 = sphi 0, %s74
      %s75 = sphi 0, %s72
      %s76 = sphi 0, %s75
      %s92 = sphi 0, %s76
      %s98 = sphi 0, %s100
      %s101 = sphi 0, %s98
      %s102 = sphi 0, %s101
      %s118 = sphi 0, %s102
      %s124 = sphi 0, %s126
      %s127 = sphi 0, %s124
      %s128 = sphi 0, %s127
      %s144 = sphi 0, %s128
      %s152 = sphi 0, %s154
      %s155 = sphi 0, %s152
      %s156 = sphi 0, %s155
      %s172 = sphi 0, %s156
    $region4: #{tpu_custom_call.1} parent=1 // loop_header_branch
      %16 = sbr.rel (%p14) target = $region8
    $region5: #{tpu_custom_call.1} parent=1 // loop_body
      %s18 = ssub.s32 %s13, 1
      %s19 = ssub.s32 %s13, 2
      %s29 = sadd.s32 1, %s22
      %p30 = scmp.ge.s32.totalorder %s29, 1
      %s31 = scalar_select %p30, 0, %s29
      %s32 = sadd.s32 1, %s21
      %s33 = scalar_select %p30, %s32, %s21
      %p34 = scmp.ge.s32.totalorder %s33, 1
      %s35 = scalar_select %p34, 0, %s33
      %s36 = sadd.s32 1, %s20
      %s37 = scalar_select %p34, %s36, %s20
      %p38 = scmp.ge.s32.totalorder %s37, 2
      %s39 = scalar_select %p38, 0, %s37
      %s40 = ssub.s32 %s20, %s39
      %s41 = ssub.s32 %s22, %s31
      %s42 = sor.u32 %s40, %s41
      %p43 = scmp.eq.s32.totalorder %s42, 0
      %s45 = sadd.s32 %s44, 1
      %s46 = scalar_select %p43, %s44, %s45
      %p49 = pneg %p43
      %p50 = scmp.eq.s32.totalorder %s13, 1
      %p51 = por %p49, %p50
      %p52 = scmp.ne.s32.totalorder %s44, %s47
      %p53 = scmp.eq.s32.totalorder %s13, 0
      %p54 = por %p52, %p53
      %p55 = scmp.ne.s32.totalorder %s44, %s47
      %p56 = scmp.eq.s32.totalorder %s18, 1
      %p57 = por %p55, %p56
      %p58 = scmp.ne.s32.totalorder %s47, %s48
      %p59 = scmp.eq.s32.totalorder %s18, 0
      %p60 = por %p58, %p59
      %p61 = scmp.ne.s32.totalorder %s47, %s48
      %p62 = scmp.eq.s32.totalorder %s19, 1
      %p63 = por %p61, %p62
      %p65 = scmp.ne.s32.totalorder %s48, %s64
      %p66 = scmp.eq.s32.totalorder %s19, 0
      %p67 = por %p65, %p66
      %s68 = ssub.s32 %s22, %s31
      %s69 = ssub.s32 %s21, %s35
      %s70 = sor.u32 %s68, %s69
      %p71 = scmp.eq.s32.totalorder %s70, 0
      %s73 = sadd.s32 %s72, 1
      %s74 = scalar_select %p71, %s72, %s73
      %p77 = pneg %p71
      %p78 = scmp.eq.s32.totalorder %s13, 1
      %p79 = por %p77, %p78
      %p80 = scmp.ne.s32.totalorder %s72, %s75
      %p81 = scmp.eq.s32.totalorder %s13, 0
      %p82 = por %p80, %p81
      %p83 = scmp.ne.s32.totalorder %s72, %s75
      %p84 = scmp.eq.s32.totalorder %s18, 1
      %p85 = por %p83, %p84
      %p86 = scmp.ne.s32.totalorder %s75, %s76
      %p87 = scmp.eq.s32.totalorder %s18, 0
      %p88 = por %p86, %p87
      %p89 = scmp.ne.s32.totalorder %s75, %s76
      %p90 = scmp.eq.s32.totalorder %s19, 1
      %p91 = por %p89, %p90
      %p93 = scmp.ne.s32.totalorder %s76, %s92
      %p94 = scmp.eq.s32.totalorder %s19, 0
      %p95 = por %p93, %p94
      %s96 = ssub.s32 %s21, %s35
      %p97 = scmp.eq.s32.totalorder %s96, 0
      %s99 = sadd.s32 %s98, 1
      %s100 = scalar_select %p97, %s98, %s99
      %p103 = pneg %p97
      %p104 = scmp.eq.s32.totalorder %s13, 1
      %p105 = por %p103, %p104
      %p106 = scmp.ne.s32.totalorder %s98, %s101
      %p107 = scmp.eq.s32.totalorder %s13, 0
      %p108 = por %p106, %p107
      %p109 = scmp.ne.s32.totalorder %s98, %s101
      %p110 = scmp.eq.s32.totalorder %s18, 1
      %p111 = por %p109, %p110
      %p112 = scmp.ne.s32.totalorder %s101, %s102
      %p113 = scmp.eq.s32.totalorder %s18, 0
      %p114 = por %p112, %p113
      %p115 = scmp.ne.s32.totalorder %s101, %s102
      %p116 = scmp.eq.s32.totalorder %s19, 1
      %p117 = por %p115, %p116
      %p119 = scmp.ne.s32.totalorder %s102, %s118
      %p120 = scmp.eq.s32.totalorder %s19, 0
      %p121 = por %p119, %p120
      %s122 = ssub.s32 %s21, %s35
      %p123 = scmp.eq.s32.totalorder %s122, 0
      %s125 = sadd.s32 %s124, 1
      %s126 = scalar_select %p123, %s124, %s125
      %p129 = pneg %p123
      %p130 = scmp.eq.s32.totalorder %s13, 1
      %p131 = por %p129, %p130
      %p132 = scmp.ne.s32.totalorder %s124, %s127
      %p133 = scmp.eq.s32.totalorder %s13, 0
      %p134 = por %p132, %p133
      %p135 = scmp.ne.s32.totalorder %s124, %s127
      %p136 = scmp.eq.s32.totalorder %s18, 1
      %p137 = por %p135, %p136
      %p138 = scmp.ne.s32.totalorder %s127, %s128
      %p139 = scmp.eq.s32.totalorder %s18, 0
      %p140 = por %p138, %p139
      %p141 = scmp.ne.s32.totalorder %s127, %s128
      %p142 = scmp.eq.s32.totalorder %s19, 1
      %p143 = por %p141, %p142
      %p145 = scmp.ne.s32.totalorder %s128, %s144
      %p146 = scmp.eq.s32.totalorder %s19, 0
      %p147 = por %p145, %p146
      %s148 = ssub.s32 %s20, %s39
      %s149 = ssub.s32 %s21, %s35
      %s150 = sor.u32 %s148, %s149
      %p151 = scmp.eq.s32.totalorder %s150, 0
      %s153 = sadd.s32 %s152, 1
      %s154 = scalar_select %p151, %s152, %s153
      %p157 = pneg %p151
      %p158 = scmp.eq.s32.totalorder %s13, 1
      %p159 = por %p157, %p158
      %p160 = scmp.ne.s32.totalorder %s152, %s155
      %p161 = scmp.eq.s32.totalorder %s13, 0
      %p162 = por %p160, %p161
      %p163 = scmp.ne.s32.totalorder %s152, %s155
      %p164 = scmp.eq.s32.totalorder %s18, 1
      %p165 = por %p163, %p164
      %p166 = scmp.ne.s32.totalorder %s155, %s156
      %p167 = scmp.eq.s32.totalorder %s18, 0
      %p168 = por %p166, %p167
      %p169 = scmp.ne.s32.totalorder %s155, %s156
      %p170 = scmp.eq.s32.totalorder %s19, 1
      %p171 = por %p169, %p170
      %p173 = scmp.ne.s32.totalorder %s156, %s172
      %p174 = scmp.eq.s32.totalorder %s19, 0
      %p175 = por %p173, %p174
      %p176 = scmp.le.s32.totalorder 1, %s13
      %p177 = scmp.lt.s32.totalorder %s13, 3
      %p178 = pnand %p176, %p177
      %p179 = pneg %p178
      // Predicated region
      $region9: #{tpu_custom_call.1} parent=5 // pred_check
        _
      $region10: #{tpu_custom_call.1} parent=5 // pred_check_branch
        %181 = sbr.rel (%p178) target = $region12
      $region11: #{tpu_custom_call.1} parent=5 // pred_region
        %s182 = ssub.s32 %s13, 1
        // Predicated region
        $region13: #{tpu_custom_call.1} parent=11 // pred_check
          %p183 = pneg %p88
        $region14: #{tpu_custom_call.1} parent=11 // pred_check_branch
          %185 = sbr.rel (%p183) target = $region16
        $region15: #{tpu_custom_call.1} parent=11 // pred_region
          %p186 = scmp.lt.s32.totalorder %s25, 0
          %s187 = scalar_select %p186, %s25, 0
          %p188 = scmp.lt.s32.totalorder %s24, 0
          %s189 = scalar_select %p188, %s24, 0
          %s190 = sadd.s32 %s189, %s187
          %s191 = smul.addr %s190, 2
          %s192 = scalar_lea.vmem %s1, %s191
        $region16: #{tpu_custom_call.1} parent=11 // pred_fallthru
          _
        // Predicated region
        $region17: #{tpu_custom_call.1} parent=11 // pred_check
          %p193 = pneg %p114
        $region18: #{tpu_custom_call.1} parent=11 // pred_check_branch
          %195 = sbr.rel (%p193) target = $region20
        $region19: #{tpu_custom_call.1} parent=11 // pred_region
          %p196 = scmp.lt.s32.totalorder %s24, 0
          %s197 = scalar_select %p196, %s24, 0
          %s198 = scalar_lea.vmem %s2, %s197
        $region20: #{tpu_custom_call.1} parent=11 // pred_fallthru
          _
        // Predicated region
        $region21: #{tpu_custom_call.1} parent=11 // pred_check
          %p199 = pneg %p140
        $region22: #{tpu_custom_call.1} parent=11 // pred_check_branch
          %201 = sbr.rel (%p199) target = $region24
        $region23: #{tpu_custom_call.1} parent=11 // pred_region
          %p202 = scmp.lt.s32.totalorder %s24, 0
          %s203 = scalar_select %p202, %s24, 0
          %s204 = scalar_lea.vmem %s3, %s203
        $region24: #{tpu_custom_call.1} parent=11 // pred_fallthru
          _
      $region12: #{tpu_custom_call.1} parent=5 // pred_fallthru
        _
      %p205 = scmp.lt.s32.totalorder %s13, 2
      // Predicated region
      $region25: #{tpu_custom_call.1} parent=5 // pred_check
        %p206 = pneg %p205
      $region26: #{tpu_custom_call.1} parent=5 // pred_check_branch
        %208 = sbr.rel (%p206) target = $region28
      $region27: #{tpu_custom_call.1} parent=5 // pred_region
        // Predicated region
        $region29: #{tpu_custom_call.1} parent=27 // pred_check
          %p209 = pneg %p54
        $region30: #{tpu_custom_call.1} parent=27 // pred_check_branch
          %211 = sbr.rel (%p209) target = $region32
        $region31: #{tpu_custom_call.1} parent=27 // pred_region
          %p212 = scmp.lt.s32.totalorder %s20, 1
          %s213 = scalar_select %p212, %s20, 1
          %p214 = scmp.lt.s32.totalorder %s22, 0
          %s215 = scalar_select %p214, %s22, 0
          %s216 = smul.addr %s213, 60
          %s217 = sadd.s32 %s215, %s216
          %s218 = smul.addr %s217, 4
          %s219 = scalar_lea.vmem %s0, %s218
        $region32: #{tpu_custom_call.1} parent=27 // pred_fallthru
          _
      $region28: #{tpu_custom_call.1} parent=5 // pred_fallthru
        _
      %p220 = scmp.le.s32.totalorder 1, %s13
      %p221 = scmp.lt.s32.totalorder %s13, 3
      %p222 = pnand %p220, %p221
      %p223 = pneg %p222
      // Predicated region
      $region33: #{tpu_custom_call.1} parent=5 // pred_check
        _
      $region34: #{tpu_custom_call.1} parent=5 // pred_check_branch
        %225 = sbr.rel (%p222) target = $region36
      $region35: #{tpu_custom_call.1} parent=5 // pred_region
        %s226 = ssub.s32 %s13, 1
        %p227 = scmp.lt.s32.totalorder %s23, 1
        %s228 = scalar_select %p227, %s23, 1
        %p229 = scmp.lt.s32.totalorder %s25, 0
        %s230 = scalar_select %p229, %s25, 0
        %s231 = smul.addr %s228, 60
        %s232 = sadd.s32 %s230, %s231
        %s233 = smul.addr %s232, 4
        %s234 = scalar_lea.vmem %s0, %s233
        %p235 = pneg %p60
        %p236 = pneg %p57
        %p237 = scmp.lt.s32.totalorder %s25, 0
        %s238 = scalar_select %p237, %s25, 0
        %p239 = scmp.lt.s32.totalorder %s24, 0
        %s240 = scalar_select %p239, %s24, 0
        %s241 = sadd.s32 %s240, %s238
        %s242 = smul.addr %s241, 2
        %s243 = scalar_lea.vmem %s1, %s242
        %p244 = pneg %p88
        %p245 = pneg %p85
        %p246 = scmp.lt.s32.totalorder %s24, 0
        %s247 = scalar_select %p246, %s24, 0
        %s248 = scalar_lea.vmem %s2, %s247
        %p249 = pneg %p114
        %p250 = pneg %p111
        %p251 = scmp.lt.s32.totalorder %s24, 0
        %s252 = scalar_select %p251, %s24, 0
        %s253 = scalar_lea.vmem %s3, %s252
        %p254 = pneg %p140
        %p255 = pneg %p137
        %p256 = pneg %p168
        %p257 = pneg %p165
        %s258 = sand.u32 %s155, 1
        %s259 = scalar_lea.sflag [#allocation4], %s258
        %s260 = sand.u32 %s155, 1
        %s261 = smul.addr %s260, 256
        %s262 = scalar_lea.vmem [#allocation3], %s261
        %p263 = scmp.lt.s32.totalorder %s23, 1
        %s264 = scalar_select %p263, %s23, 1
        %p265 = scmp.lt.s32.totalorder %s25, 0
        %s266 = scalar_select %p265, %s25, 0
        %s267 = smul.addr %s264, 60
        %s268 = sadd.s32 %s266, %s267
        %s269 = smul.addr %s268, 4
        %s270 = scalar_lea.vmem %s0, %s269
        %p271 = scmp.lt.s32.totalorder %s25, 0
        %s272 = scalar_select %p271, %s25, 0
        %p273 = scmp.lt.s32.totalorder %s24, 0
        %s274 = scalar_select %p273, %s24, 0
        %s275 = sadd.s32 %s274, %s272
        %s276 = smul.addr %s275, 2
        %s277 = scalar_lea.vmem %s1, %s276
        %p278 = scmp.lt.s32.totalorder %s24, 0
        %s279 = scalar_select %p278, %s24, 0
        %s280 = scalar_lea.vmem %s2, %s279
        %p281 = scmp.lt.s32.totalorder %s24, 0
        %s282 = scalar_select %p281, %s24, 0
        %s283 = scalar_lea.vmem %s3, %s282
        %p285 = scmp.eq.s32.totalorder %s25, 0
        // Predicated region
        $region37: #{tpu_custom_call.1} parent=35 // pred_check
          %p286 = pneg %p285
        $region38: #{tpu_custom_call.1} parent=35 // pred_check_branch
          %288 = sbr.rel (%p286) target = $region40
        $region39: #{tpu_custom_call.1} parent=35 // pred_region
          %289 = vst [vmem:[#allocation2] sm:$0xff] 0.0
          %290 = vst [vmem:[#allocation2 + $0x8] sm:$0xff] 0.0
          %291 = vst [vmem:[#allocation2 + $0x10] sm:$0xff] 0.0
          %292 = vst [vmem:[#allocation2 + $0x18] sm:$0xff] 0.0
          %293 = vst [vmem:[#allocation2 + $0x20] sm:$0xff] 0.0
          %294 = vst [vmem:[#allocation2 + $0x28] sm:$0xff] 0.0
          %295 = vst [vmem:[#allocation2 + $0x30] sm:$0xff] 0.0
          %296 = vst [vmem:[#allocation2 + $0x38] sm:$0xff] 0.0
          %297 = vst [vmem:[#allocation2 + $0x40] sm:$0xff] 0.0
          %298 = vst [vmem:[#allocation2 + $0x48] sm:$0xff] 0.0
          %299 = vst [vmem:[#allocation2 + $0x50] sm:$0xff] 0.0
          %300 = vst [vmem:[#allocation2 + $0x58] sm:$0xff] 0.0
          %301 = vst [vmem:[#allocation2 + $0x60] sm:$0xff] 0.0
          %302 = vst [vmem:[#allocation2 + $0x68] sm:$0xff] 0.0
          %303 = vst [vmem:[#allocation2 + $0x70] sm:$0xff] 0.0
          %304 = vst [vmem:[#allocation2 + $0x78] sm:$0xff] 0.0
          %305 = vst [vmem:[#allocation2 + $0x80] sm:$0xff] 0.0
          %306 = vst [vmem:[#allocation2 + $0x88] sm:$0xff] 0.0
          %307 = vst [vmem:[#allocation2 + $0x90] sm:$0xff] 0.0
          %308 = vst [vmem:[#allocation2 + $0x98] sm:$0xff] 0.0
          %309 = vst [vmem:[#allocation2 + $0xa0] sm:$0xff] 0.0
          %310 = vst [vmem:[#allocation2 + $0xa8] sm:$0xff] 0.0
          %311 = vst [vmem:[#allocation2 + $0xb0] sm:$0xff] 0.0
          %312 = vst [vmem:[#allocation2 + $0xb8] sm:$0xff] 0.0
          %313 = vst [vmem:[#allocation2 + $0xc0] sm:$0xff] 0.0
          %314 = vst [vmem:[#allocation2 + $0xc8] sm:$0xff] 0.0
          %315 = vst [vmem:[#allocation2 + $0xd0] sm:$0xff] 0.0
          %316 = vst [vmem:[#allocation2 + $0xd8] sm:$0xff] 0.0
          %317 = vst [vmem:[#allocation2 + $0xe0] sm:$0xff] 0.0
          %318 = vst [vmem:[#allocation2 + $0xe8] sm:$0xff] 0.0
          %319 = vst [vmem:[#allocation2 + $0xf0] sm:$0xff] 0.0
          %320 = vst [vmem:[#allocation2 + $0xf8] sm:$0xff] 0.0
        $region40: #{tpu_custom_call.1} parent=35 // pred_fallthru
          _
        %v321 = vld [vmem:[#allocation2] sm:$0xff]
        %v322 = vld [vmem:[#allocation2 + $0x8] sm:$0xff]
        %v323 = vld [vmem:[#allocation2 + $0x10] sm:$0xff]
        %v324 = vld [vmem:[#allocation2 + $0x18] sm:$0xff]
        %v325 = vld [vmem:[#allocation2 + $0x20] sm:$0xff]
        %v326 = vld [vmem:[#allocation2 + $0x28] sm:$0xff]
        %v327 = vld [vmem:[#allocation2 + $0x30] sm:$0xff]
        %v328 = vld [vmem:[#allocation2 + $0x38] sm:$0xff]
        %v329 = vld [vmem:[#allocation2 + $0x40] sm:$0xff]
        %v330 = vld [vmem:[#allocation2 + $0x48] sm:$0xff]
        %v331 = vld [vmem:[#allocation2 + $0x50] sm:$0xff]
        %v332 = vld [vmem:[#allocation2 + $0x58] sm:$0xff]
        %v333 = vld [vmem:[#allocation2 + $0x60] sm:$0xff]
        %v334 = vld [vmem:[#allocation2 + $0x68] sm:$0xff]
        %v335 = vld [vmem:[#allocation2 + $0x70] sm:$0xff]
        %v336 = vld [vmem:[#allocation2 + $0x78] sm:$0xff]
        %v337 = vld [vmem:[#allocation2 + $0x80] sm:$0xff]
        %v338 = vld [vmem:[#allocation2 + $0x88] sm:$0xff]
        %v339 = vld [vmem:[#allocation2 + $0x90] sm:$0xff]
        %v340 = vld [vmem:[#allocation2 + $0x98] sm:$0xff]
        %v341 = vld [vmem:[#allocation2 + $0xa0] sm:$0xff]
        %v342 = vld [vmem:[#allocation2 + $0xa8] sm:$0xff]
        %v343 = vld [vmem:[#allocation2 + $0xb0] sm:$0xff]
        %v344 = vld [vmem:[#allocation2 + $0xb8] sm:$0xff]
        %v345 = vld [vmem:[#allocation2 + $0xc0] sm:$0xff]
        %v346 = vld [vmem:[#allocation2 + $0xc8] sm:$0xff]
        %v347 = vld [vmem:[#allocation2 + $0xd0] sm:$0xff]
        %v348 = vld [vmem:[#allocation2 + $0xd8] sm:$0xff]
        %v349 = vld [vmem:[#allocation2 + $0xe0] sm:$0xff]
        %v350 = vld [vmem:[#allocation2 + $0xe8] sm:$0xff]
        %v351 = vld [vmem:[#allocation2 + $0xf0] sm:$0xff]
        %v352 = vld [vmem:[#allocation2 + $0xf8] sm:$0xff]
        %v353 = vld [vmem:[%s270] sm:$0xf]
        %v354 = vld [vmem:[%s270 + $0x4] sm:$0xf]
        %v355 = vld [vmem:[%s270 + $0xc] sm:$0xf]
        %v356 = vld [vmem:[%s270 + $0x10] sm:$0xf]
        %v357 = vld [vmem:[%s270 + $0x18] sm:$0xf]
        %v358 = vld [vmem:[%s270 + $0x1c] sm:$0xf]
        %v359 = vld [vmem:[%s270 + $0x24] sm:$0xf]
        %v360 = vld [vmem:[%s270 + $0x28] sm:$0xf]
        %v361 = vld [vmem:[%s270 + $0x30] sm:$0xf]
        %v362 = vld [vmem:[%s270 + $0x34] sm:$0xf]
        %v363 = vld [vmem:[%s270 + $0x3c] sm:$0xf]
        %v364 = vld [vmem:[%s270 + $0x40] sm:$0xf]
        %v365 = vld [vmem:[%s270 + $0x48] sm:$0xf]
        %v366 = vld [vmem:[%s270 + $0x4c] sm:$0xf]
        %v367 = vld [vmem:[%s270 + $0x54] sm:$0xf]
        %v368 = vld [vmem:[%s270 + $0x58] sm:$0xf]
        %v369 = vld [vmem:[%s270 + $0x60] sm:$0xf]
        %v370 = vld [vmem:[%s270 + $0x64] sm:$0xf]
        %v371 = vld [vmem:[%s270 + $0x6c] sm:$0xf]
        %v372 = vld [vmem:[%s270 + $0x70] sm:$0xf]
        %v373 = vld [vmem:[%s270 + $0x78] sm:$0xf]
        %v374 = vld [vmem:[%s270 + $0x7c] sm:$0xf]
        %v375 = vld [vmem:[%s270 + $0x84] sm:$0xf]
        %v376 = vld [vmem:[%s270 + $0x88] sm:$0xf]
        %v377 = vld [vmem:[%s270 + $0x90] sm:$0xf]
        %v378 = vld [vmem:[%s270 + $0x94] sm:$0xf]
        %v379 = vld [vmem:[%s270 + $0x9c] sm:$0xf]
        %v380 = vld [vmem:[%s270 + $0xa0] sm:$0xf]
        %v381 = vld [vmem:[%s270 + $0xa8] sm:$0xf]
        %v382 = vld [vmem:[%s270 + $0xac] sm:$0xf]
        %v383 = vld [vmem:[%s270 + $0xb4] sm:$0xf]
        %v384 = vld [vmem:[%s270 + $0xb8] sm:$0xf]
        %v385 = vld [vmem:[%s277] sm:$0x3]
        %v418 = vunpack.c.l.b16 %v353
        %v419 = vunpack.c.l.b16 %v354
        %v420 = vunpack.c.l.b16 %v355
        %v421 = vunpack.c.l.b16 %v356
        %v422 = vunpack.c.l.b16 %v357
        %v423 = vunpack.c.l.b16 %v358
        %v424 = vunpack.c.l.b16 %v359
        %v425 = vunpack.c.l.b16 %v360
        %v426 = vunpack.c.l.b16 %v361
        %v427 = vunpack.c.l.b16 %v362
        %v428 = vunpack.c.l.b16 %v363
        %v429 = vunpack.c.l.b16 %v364
        %v430 = vunpack.c.l.b16 %v365
        %v431 = vunpack.c.l.b16 %v366
        %v432 = vunpack.c.l.b16 %v367
        %v433 = vunpack.c.l.b16 %v368
        %v434 = vunpack.c.l.b16 %v369
        %v435 = vunpack.c.l.b16 %v370
        %v436 = vunpack.c.l.b16 %v371
        %v437 = vunpack.c.l.b16 %v372
        %v438 = vunpack.c.l.b16 %v373
        %v439 = vunpack.c.l.b16 %v374
        %v440 = vunpack.c.l.b16 %v375
        %v441 = vunpack.c.l.b16 %v376
        %v442 = vunpack.c.l.b16 %v377
        %v443 = vunpack.c.l.b16 %v378
        %v444 = vunpack.c.l.b16 %v379
        %v445 = vunpack.c.l.b16 %v380
        %v446 = vunpack.c.l.b16 %v381
        %v447 = vunpack.c.l.b16 %v382
        %v448 = vunpack.c.l.b16 %v383
        %v449 = vunpack.c.l.b16 %v384
        %v450 = vpack.c.b16 %v419, %v418
        %v451 = vpack.c.b16 %v421, %v420
        %v452 = vpack.c.b16 %v423, %v422
        %v453 = vpack.c.b16 %v425, %v424
        %v454 = vpack.c.b16 %v427, %v426
        %v455 = vpack.c.b16 %v429, %v428
        %v456 = vpack.c.b16 %v431, %v430
        %v457 = vpack.c.b16 %v433, %v432
        %v458 = vpack.c.b16 %v435, %v434
        %v459 = vpack.c.b16 %v437, %v436
        %v460 = vpack.c.b16 %v439, %v438
        %v461 = vpack.c.b16 %v441, %v440
        %v462 = vpack.c.b16 %v443, %v442
        %v463 = vpack.c.b16 %v445, %v444
        %v464 = vpack.c.b16 %v447, %v446
        %v465 = vpack.c.b16 %v449, %v448
        %vm466 = vcmask 31744
        %v468 = vsel %vm466, %v450, 0
        %v471 = vsel %vm466, %v451, 0
        %v474 = vsel %vm466, %v452, 0
        %v477 = vsel %vm466, %v453, 0
        %v480 = vsel %vm466, %v454, 0
        %v483 = vsel %vm466, %v455, 0
        %v486 = vsel %vm466, %v456, 0
        %v489 = vsel %vm466, %v457, 0
        %v492 = vsel %vm466, %v458, 0
        %v495 = vsel %vm466, %v459, 0
        %v498 = vsel %vm466, %v460, 0
        %v501 = vsel %vm466, %v461, 0
        %v504 = vsel %vm466, %v462, 0
        %v507 = vsel %vm466, %v463, 0
        %v510 = vsel %vm466, %v464, 0
        %v513 = vsel %vm466, %v465, 0
        %vm515 = vcmask 1041408
        %v517 = vsel %vm515, %v385, 0
        %519 = vmatprep.subr.bf16.mxu0 0
        %520 = vmatpush1.bf16.msra.mxu0 %v517
        %521 = vmatprep.subr.bf16.mxu0 0
        %522 = vmatpush1.bf16.msra.mxu0 0
        %523 = vmatprep.subr.bf16.mxu0 0
        %524 = vmatpush1.bf16.msra.mxu0 0
        %525 = vmatprep.subr.bf16.mxu0 0
        %526 = vmatpush1.bf16.msra.mxu0 0
        %527 = vmatprep.subr.bf16.mxu0 0
        %528 = vmatpush1.bf16.msra.mxu0 0
        %529 = vmatprep.subr.bf16.mxu0 0
        %530 = vmatpush1.bf16.msra.mxu0 0
        %531 = vmatprep.subr.bf16.mxu0 0
        %532 = vmatpush1.bf16.msra.mxu0 0
        %533 = vmatprep.subr.bf16.mxu0 0
        %534 = vmatpush1.bf16.msra.mxu0 0
        %535 = vmatprep.subr.bf16.mxu0 0
        %536 = vmatpush1.bf16.msra.mxu0 0
        %537 = vmatprep.subr.bf16.mxu0 0
        %538 = vmatpush1.bf16.msra.mxu0 0
        %539 = vmatprep.subr.bf16.mxu0 0
        %540 = vmatpush1.bf16.msra.mxu0 0
        %541 = vmatprep.subr.bf16.mxu0 0
        %542 = vmatpush1.bf16.msra.mxu0 0
        %543 = vmatprep.subr.bf16.mxu0 0
        %544 = vmatpush1.bf16.msra.mxu0 0
        %545 = vmatprep.subr.bf16.mxu0 0
        %546 = vmatpush1.bf16.msra.mxu0 0
        %547 = vmatprep.subr.bf16.mxu0 0
        %548 = vmatpush1.bf16.msra.mxu0 0
        %549 = vmatprep.subr.bf16.mxu0 0
        %550 = vmatpush1.bf16.msra.mxu0 0
        %551 = vmatprep.mubr.bf16.mxu0 0
        %552 = vmatmul.mubr.bf16.gmra.mrb[0].mxu0 %v468
        %v553 = vpop.f32.mrb[0].mxu0
        %v554 = vadd.f32 0.0, %v553
        %v555 = vpop.f32.mrb[0].mxu0
        %v556 = vpop.f32.mrb[0].mxu0
        %v557 = vadd.f32 0.0, %v556
        %v558 = vpop.f32.mrb[0].mxu0
        %559 = vmatprep.mubr.bf16.mxu0 0
        %560 = vmatmul.mubr.bf16.gmra.mrb[0].mxu0 %v471
        %v561 = vpop.f32.mrb[0].mxu0
        %v562 = vadd.f32 0.0, %v561
        %v563 = vpop.f32.mrb[0].mxu0
        %v564 = vpop.f32.mrb[0].mxu0
        %v565 = vadd.f32 0.0, %v564
        %v566 = vpop.f32.mrb[0].mxu0
        %567 = vmatprep.mubr.bf16.mxu0 0
        %568 = vmatmul.mubr.bf16.gmra.mrb[0].mxu0 %v474
        %v569 = vpop.f32.mrb[0].mxu0
        %v570 = vadd.f32 0.0, %v569
        %v571 = vpop.f32.mrb[0].mxu0
        %v572 = vpop.f32.mrb[0].mxu0
        %v573 = vadd.f32 0.0, %v572
        %v574 = vpop.f32.mrb[0].mxu0
        %575 = vmatprep.mubr.bf16.mxu0 0
        %576 = vmatmul.mubr.bf16.gmra.mrb[0].mxu0 %v477
        %v577 = vpop.f32.mrb[0].mxu0
        %v578 = vadd.f32 0.0, %v577
        %v579 = vpop.f32.mrb[0].mxu0
        %v580 = vpop.f32.mrb[0].mxu0
        %v581 = vadd.f32 0.0, %v580
        %v582 = vpop.f32.mrb[0].mxu0
        %583 = vmatprep.mubr.bf16.mxu0 0
        %584 = vmatmul.mubr.bf16.gmra.mrb[0].mxu0 %v480
        %v585 = vpop.f32.mrb[0].mxu0
        %v586 = vadd.f32 0.0, %v585
        %v587 = vpop.f32.mrb[0].mxu0
        %v588 = vpop.f32.mrb[0].mxu0
        %v589 = vadd.f32 0.0, %v588
        %v590 = vpop.f32.mrb[0].mxu0
        %591 = vmatprep.mubr.bf16.mxu0 0
        %592 = vmatmul.mubr.bf16.gmra.mrb[0].mxu0 %v483
        %v593 = vpop.f32.mrb[0].mxu0
        %v594 = vadd.f32 0.0, %v593
        %v595 = vpop.f32.mrb[0].mxu0
        %v596 = vpop.f32.mrb[0].mxu0
        %v597 = vadd.f32 0.0, %v596
        %v598 = vpop.f32.mrb[0].mxu0
        %599 = vmatprep.mubr.bf16.mxu0 0
        %600 = vmatmul.mubr.bf16.gmra.mrb[0].mxu0 %v486
        %v601 = vpop.f32.mrb[0].mxu0
        %v602 = vadd.f32 0.0, %v601
        %v603 = vpop.f32.mrb[0].mxu0
        %v604 = vpop.f32.mrb[0].mxu0
        %v605 = vadd.f32 0.0, %v604
        %v606 = vpop.f32.mrb[0].mxu0
        %607 = vmatprep.mubr.bf16.mxu0 0
        %608 = vmatmul.mubr.bf16.gmra.mrb[0].mxu0 %v489
        %v609 = vpop.f32.mrb[0].mxu0
        %v610 = vadd.f32 0.0, %v609
        %v611 = vpop.f32.mrb[0].mxu0
        %v612 = vpop.f32.mrb[0].mxu0
        %v613 = vadd.f32 0.0, %v612
        %v614 = vpop.f32.mrb[0].mxu0
        %615 = vmatprep.mubr.bf16.mxu0 0
        %616 = vmatmul.mubr.bf16.gmra.mrb[0].mxu0 %v492
        %v617 = vpop.f32.mrb[0].mxu0
        %v618 = vadd.f32 0.0, %v617
        %v619 = vpop.f32.mrb[0].mxu0
        %v620 = vpop.f32.mrb[0].mxu0
        %v621 = vadd.f32 0.0, %v620
        %v622 = vpop.f32.mrb[0].mxu0
        %623 = vmatprep.mubr.bf16.mxu0 0
        %624 = vmatmul.mubr.bf16.gmra.mrb[0].mxu0 %v495
        %v625 = vpop.f32.mrb[0].mxu0
        %v626 = vadd.f32 0.0, %v625
        %v627 = vpop.f32.mrb[0].mxu0
        %v628 = vpop.f32.mrb[0].mxu0
        %v629 = vadd.f32 0.0, %v628
        %v630 = vpop.f32.mrb[0].mxu0
        %631 = vmatprep.mubr.bf16.mxu0 0
        %632 = vmatmul.mubr.bf16.gmra.mrb[0].mxu0 %v498
        %v633 = vpop.f32.mrb[0].mxu0
        %v634 = vadd.f32 0.0, %v633
        %v635 = vpop.f32.mrb[0].mxu0
        %v636 = vpop.f32.mrb[0].mxu0
        %v637 = vadd.f32 0.0, %v636
        %v638 = vpop.f32.mrb[0].mxu0
        %639 = vmatprep.mubr.bf16.mxu0 0
        %640 = vmatmul.mubr.bf16.gmra.mrb[0].mxu0 %v501
        %v641 = vpop.f32.mrb[0].mxu0
        %v642 = vadd.f32 0.0, %v641
        %v643 = vpop.f32.mrb[0].mxu0
        %v644 = vpop.f32.mrb[0].mxu0
        %v645 = vadd.f32 0.0, %v644
        %v646 = vpop.f32.mrb[0].mxu0
        %647 = vmatprep.mubr.bf16.mxu0 0
        %648 = vmatmul.mubr.bf16.gmra.mrb[0].mxu0 %v504
        %v649 = vpop.f32.mrb[0].mxu0
        %v650 = vadd.f32 0.0, %v649
        %v651 = vpop.f32.mrb[0].mxu0
        %v652 = vpop.f32.mrb[0].mxu0
        %v653 = vadd.f32 0.0, %v652
        %v654 = vpop.f32.mrb[0].mxu0
        %655 = vmatprep.mubr.bf16.mxu0 0
        %656 = vmatmul.mubr.bf16.gmra.mrb[0].mxu0 %v507
        %v657 = vpop.f32.mrb[0].mxu0
        %v658 = vadd.f32 0.0, %v657
        %v659 = vpop.f32.mrb[0].mxu0
        %v660 = vpop.f32.mrb[0].mxu0
        %v661 = vadd.f32 0.0, %v660
        %v662 = vpop.f32.mrb[0].mxu0
        %663 = vmatprep.mubr.bf16.mxu0 0
        %664 = vmatmul.mubr.bf16.gmra.mrb[0].mxu0 %v510
        %v665 = vpop.f32.mrb[0].mxu0
        %v666 = vadd.f32 0.0, %v665
        %v667 = vpop.f32.mrb[0].mxu0
        %v668 = vpop.f32.mrb[0].mxu0
        %v669 = vadd.f32 0.0, %v668
        %v670 = vpop.f32.mrb[0].mxu0
        %671 = vmatprep.mubr.bf16.mxu0 0
        %672 = vmatmul.mubr.bf16.gmra.mrb[0].mxu0 %v513
        %v673 = vpop.f32.mrb[0].mxu0
        %v674 = vadd.f32 0.0, %v673
        %v675 = vpop.f32.mrb[0].mxu0
        %v676 = vpop.f32.mrb[0].mxu0
        %v677 = vadd.f32 0.0, %v676
        %v678 = vpop.f32.mrb[0].mxu0
        %679 = vdwg.mxu0
        %v680 = vadd.f32 %v321, %v554
        %v681 = vadd.f32 %v322, %v557
        %v682 = vadd.f32 %v323, %v562
        %v683 = vadd.f32 %v324, %v565
        %v684 = vadd.f32 %v325, %v570
        %v685 = vadd.f32 %v326, %v573
        %v686 = vadd.f32 %v327, %v578
        %v687 = vadd.f32 %v328, %v581
        %v688 = vadd.f32 %v329, %v586
        %v689 = vadd.f32 %v330, %v589
        %v690 = vadd.f32 %v331, %v594
        %v691 = vadd.f32 %v332, %v597
        %v692 = vadd.f32 %v333, %v602
        %v693 = vadd.f32 %v334, %v605
        %v694 = vadd.f32 %v335, %v610
        %v695 = vadd.f32 %v336, %v613
        %v696 = vadd.f32 %v337, %v618
        %v697 = vadd.f32 %v338, %v621
        %v698 = vadd.f32 %v339, %v626
        %v699 = vadd.f32 %v340, %v629
        %v700 = vadd.f32 %v341, %v634
        %v701 = vadd.f32 %v342, %v637
        %v702 = vadd.f32 %v343, %v642
        %v703 = vadd.f32 %v344, %v645
        %v704 = vadd.f32 %v345, %v650
        %v705 = vadd.f32 %v346, %v653
        %v706 = vadd.f32 %v347, %v658
        %v707 = vadd.f32 %v348, %v661
        %v708 = vadd.f32 %v349, %v666
        %v709 = vadd.f32 %v350, %v669
        %v710 = vadd.f32 %v351, %v674
        %v711 = vadd.f32 %v352, %v677
        %v712 = vld [vmem:[%s270] sm:$0xe]
        %v713 = vld [vmem:[%s270 + $0x4] sm:$0xf]
        %v714 = vld [vmem:[%s270 + $0x8] sm:$0x1]
        %v715 = vld [vmem:[%s270 + $0xc] sm:$0xe]
        %v716 = vld [vmem:[%s270 + $0x10] sm:$0xf]
        %v717 = vld [vmem:[%s270 + $0x14] sm:$0x1]
        %v718 = vld [vmem:[%s270 + $0x18] sm:$0xe]
        %v719 = vld [vmem:[%s270 + $0x1c] sm:$0xf]
        %v720 = vld [vmem:[%s270 + $0x20] sm:$0x1]
        %v721 = vld [vmem:[%s270 + $0x24] sm:$0xe]
        %v722 = vld [vmem:[%s270 + $0x28] sm:$0xf]
        %v723 = vld [vmem:[%s270 + $0x2c] sm:$0x1]
        %v724 = vld [vmem:[%s270 + $0x30] sm:$0xe]
        %v725 = vld [vmem:[%s270 + $0x34] sm:$0xf]
        %v726 = vld [vmem:[%s270 + $0x38] sm:$0x1]
        %v727 = vld [vmem:[%s270 + $0x3c] sm:$0xe]
        %v728 = vld [vmem:[%s270 + $0x40] sm:$0xf]
        %v729 = vld [vmem:[%s270 + $0x44] sm:$0x1]
        %v730 = vld [vmem:[%s270 + $0x48] sm:$0xe]
        %v731 = vld [vmem:[%s270 + $0x4c] sm:$0xf]
        %v732 = vld [vmem:[%s270 + $0x50] sm:$0x1]
        %v733 = vld [vmem:[%s270 + $0x54] sm:$0xe]
        %v734 = vld [vmem:[%s270 + $0x58] sm:$0xf]
        %v735 = vld [vmem:[%s270 + $0x5c] sm:$0x1]
        %v736 = vld [vmem:[%s270 + $0x60] sm:$0xe]
        %v737 = vld [vmem:[%s270 + $0x64] sm:$0xf]
        %v738 = vld [vmem:[%s270 + $0x68] sm:$0x1]
        %v739 = vld [vmem:[%s270 + $0x6c] sm:$0xe]
        %v740 = vld [vmem:[%s270 + $0x70] sm:$0xf]
        %v741 = vld [vmem:[%s270 + $0x74] sm:$0x1]
        %v742 = vld [vmem:[%s270 + $0x78] sm:$0xe]
        %v743 = vld [vmem:[%s270 + $0x7c] sm:$0xf]
        %v744 = vld [vmem:[%s270 + $0x80] sm:$0x1]
        %v745 = vld [vmem:[%s270 + $0x84] sm:$0xe]
        %v746 = vld [vmem:[%s270 + $0x88] sm:$0xf]
        %v747 = vld [vmem:[%s270 + $0x8c] sm:$0x1]
        %v748 = vld [vmem:[%s270 + $0x90] sm:$0xe]
        %v749 = vld [vmem:[%s270 + $0x94] sm:$0xf]
        %v750 = vld [vmem:[%s270 + $0x98] sm:$0x1]
        %v751 = vld [vmem:[%s270 + $0x9c] sm:$0xe]
        %v752 = vld [vmem:[%s270 + $0xa0] sm:$0xf]
        %v753 = vld [vmem:[%s270 + $0xa4] sm:$0x1]
        %v754 = vld [vmem:[%s270 + $0xa8] sm:$0xe]
        %v755 = vld [vmem:[%s270 + $0xac] sm:$0xf]
        %v756 = vld [vmem:[%s270 + $0xb0] sm:$0x1]
        %v757 = vld [vmem:[%s270 + $0xb4] sm:$0xe]
        %v758 = vld [vmem:[%s270 + $0xb8] sm:$0xf]
        %v759 = vld [vmem:[%s270 + $0xbc] sm:$0x1]
        %vm808 = vcmask 1042432
        %vm809 = vcmask 1046532
        %vm810 = vmor %vm808, %vm809
        %v811 = vrot.slane %v712, 5
        %v812 = vrot.slane %v811, 4
        %v813 = vrot.slane %v713, 5
        %v814 = vsel %vm810, %v812, %v813
        %v815 = vrot.slane %v813, 4
        %v816 = vrot.slane %v714, 5
        %v817 = vsel %vm810, %v815, %v816
        %v818 = vrot.slane %v715, 5
        %v819 = vrot.slane %v818, 4
        %v820 = vrot.slane %v716, 5
        %v821 = vsel %vm810, %v819, %v820
        %v822 = vrot.slane %v820, 4
        %v823 = vrot.slane %v717, 5
        %v824 = vsel %vm810, %v822, %v823
        %v825 = vrot.slane %v718, 5
        %v826 = vrot.slane %v825, 4
        %v827 = vrot.slane %v719, 5
        %v828 = vsel %vm810, %v826, %v827
        %v829 = vrot.slane %v827, 4
        %v830 = vrot.slane %v720, 5
        %v831 = vsel %vm810, %v829, %v830
        %v832 = vrot.slane %v721, 5
        %v833 = vrot.slane %v832, 4
        %v834 = vrot.slane %v722, 5
        %v835 = vsel %vm810, %v833, %v834
        %v836 = vrot.slane %v834, 4
        %v837 = vrot.slane %v723, 5
        %v838 = vsel %vm810, %v836, %v837
        %v839 = vrot.slane %v724, 5
        %v840 = vrot.slane %v839, 4
        %v841 = vrot.slane %v725, 5
        %v842 = vsel %vm810, %v840, %v841
        %v843 = vrot.slane %v841, 4
        %v844 = vrot.slane %v726, 5
        %v845 = vsel %vm810, %v843, %v844
        %v846 = vrot.slane %v727, 5
        %v847 = vrot.slane %v846, 4
        %v848 = vrot.slane %v728, 5
        %v849 = vsel %vm810, %v847, %v848
        %v850 = vrot.slane %v848, 4
        %v851 = vrot.slane %v729, 5
        %v852 = vsel %vm810, %v850, %v851
        %v853 = vrot.slane %v730, 5
        %v854 = vrot.slane %v853, 4
        %v855 = vrot.slane %v731, 5
        %v856 = vsel %vm810, %v854, %v855
        %v857 = vrot.slane %v855, 4
        %v858 = vrot.slane %v732, 5
        %v859 = vsel %vm810, %v857, %v858
        %v860 = vrot.slane %v733, 5
        %v861 = vrot.slane %v860, 4
        %v862 = vrot.slane %v734, 5
        %v863 = vsel %vm810, %v861, %v862
        %v864 = vrot.slane %v862, 4
        %v865 = vrot.slane %v735, 5
        %v866 = vsel %vm810, %v864, %v865
        %v867 = vrot.slane %v736, 5
        %v868 = vrot.slane %v867, 4
        %v869 = vrot.slane %v737, 5
        %v870 = vsel %vm810, %v868, %v869
        %v871 = vrot.slane %v869, 4
        %v872 = vrot.slane %v738, 5
        %v873 = vsel %vm810, %v871, %v872
        %v874 = vrot.slane %v739, 5
        %v875 = vrot.slane %v874, 4
        %v876 = vrot.slane %v740, 5
        %v877 = vsel %vm810, %v875, %v876
        %v878 = vrot.slane %v876, 4
        %v879 = vrot.slane %v741, 5
        %v880 = vsel %vm810, %v878, %v879
        %v881 = vrot.slane %v742, 5
        %v882 = vrot.slane %v881, 4
        %v883 = vrot.slane %v743, 5
        %v884 = vsel %vm810, %v882, %v883
        %v885 = vrot.slane %v883, 4
        %v886 = vrot.slane %v744, 5
        %v887 = vsel %vm810, %v885, %v886
        %v888 = vrot.slane %v745, 5
        %v889 = vrot.slane %v888, 4
        %v890 = vrot.slane %v746, 5
        %v891 = vsel %vm810, %v889, %v890
        %v892 = vrot.slane %v890, 4
        %v893 = vrot.slane %v747, 5
        %v894 = vsel %vm810, %v892, %v893
        %v895 = vrot.slane %v748, 5
        %v896 = vrot.slane %v895, 4
        %v897 = vrot.slane %v749, 5
        %v898 = vsel %vm810, %v896, %v897
        %v899 = vrot.slane %v897, 4
        %v900 = vrot.slane %v750, 5
        %v901 = vsel %vm810, %v899, %v900
        %v902 = vrot.slane %v751, 5
        %v903 = vrot.slane %v902, 4
        %v904 = vrot.slane %v752, 5
        %v905 = vsel %vm810, %v903, %v904
        %v906 = vrot.slane %v904, 4
        %v907 = vrot.slane %v753, 5
        %v908 = vsel %vm810, %v906, %v907
        %v909 = vrot.slane %v754, 5
        %v910 = vrot.slane %v909, 4
        %v911 = vrot.slane %v755, 5
        %v912 = vsel %vm810, %v910, %v911
        %v913 = vrot.slane %v911, 4
        %v914 = vrot.slane %v756, 5
        %v915 = vsel %vm810, %v913, %v914
        %v916 = vrot.slane %v757, 5
        %v917 = vrot.slane %v916, 4
        %v918 = vrot.slane %v758, 5
        %v919 = vsel %vm810, %v917, %v918
        %v920 = vrot.slane %v918, 4
        %v921 = vrot.slane %v759, 5
        %v922 = vsel %vm810, %v920, %v921
        %s923 = scalar_lea.vmem %s277, 2
        %v924 = vld [vmem:[%s923] sm:$0x3]
        %v925 = vunpack.c.l.b16 %v814
        %v926 = vunpack.c.l.b16 %v817
        %v927 = vunpack.c.l.b16 %v821
        %v928 = vunpack.c.l.b16 %v824
        %v929 = vunpack.c.l.b16 %v828
        %v930 = vunpack.c.l.b16 %v831
        %v931 = vunpack.c.l.b16 %v835
        %v932 = vunpack.c.l.b16 %v838
        %v933 = vunpack.c.l.b16 %v842
        %v934 = vunpack.c.l.b16 %v845
        %v935 = vunpack.c.l.b16 %v849
        %v936 = vunpack.c.l.b16 %v852
        %v937 = vunpack.c.l.b16 %v856
        %v938 = vunpack.c.l.b16 %v859
        %v939 = vunpack.c.l.b16 %v863
        %v940 = vunpack.c.l.b16 %v866
        %v941 = vunpack.c.l.b16 %v870
        %v942 = vunpack.c.l.b16 %v873
        %v943 = vunpack.c.l.b16 %v877
        %v944 = vunpack.c.l.b16 %v880
        %v945 = vunpack.c.l.b16 %v884
        %v946 = vunpack.c.l.b16 %v887
        %v947 = vunpack.c.l.b16 %v891
        %v948 = vunpack.c.l.b16 %v894
        %v949 = vunpack.c.l.b16 %v898
        %v950 = vunpack.c.l.b16 %v901
        %v951 = vunpack.c.l.b16 %v905
        %v952 = vunpack.c.l.b16 %v908
        %v953 = vunpack.c.l.b16 %v912
        %v954 = vunpack.c.l.b16 %v915
        %v955 = vunpack.c.l.b16 %v919
        %v956 = vunpack.c.l.b16 %v922
        %v957 = vpack.c.b16 %v926, %v925
        %v958 = vpack.c.b16 %v928, %v927
        %v959 = vpack.c.b16 %v930, %v929
        %v960 = vpack.c.b16 %v932, %v931
        %v961 = vpack.c.b16 %v934, %v933
        %v962 = vpack.c.b16 %v936, %v935
        %v963 = vpack.c.b16 %v938, %v937
        %v964 = vpack.c.b16 %v940, %v939
        %v965 = vpack.c.b16 %v942, %v941
        %v966 = vpack.c.b16 %v944, %v943
        %v967 = vpack.c.b16 %v946, %v945
        %v968 = vpack.c.b16 %v948, %v947
        %v969 = vpack.c.b16 %v950, %v949
        %v970 = vpack.c.b16 %v952, %v951
        %v971 = vpack.c.b16 %v954, %v953
        %v972 = vpack.c.b16 %v956, %v955
        %v974 = vsel %vm466, %v957, 0
        %v977 = vsel %vm466, %v958, 0
        %v980 = vsel %vm466, %v959, 0
        %v983 = vsel %vm466, %v960, 0
        %v986 = vsel %vm466, %v961, 0
        %v989 = vsel %vm466, %v962, 0
        %v992 = vsel %vm466, %v963, 0
        %v995 = vsel %vm466, %v964, 0
        %v998 = vsel %vm466, %v965, 0
        %v1001 = vsel %vm466, %v966, 0
        %v1004 = vsel %vm466, %v967, 0
        %v1007 = vsel %vm466, %v968, 0
        %v1010 = vsel %vm466, %v969, 0
        %v1013 = vsel %vm466, %v970, 0
        %v1016 = vsel %vm466, %v971, 0
        %v1019 = vsel %vm466, %v972, 0
        %v1022 = vsel %vm515, %v924, 0
        %1024 = vmatprep.subr.bf16.mxu0 0
        %1025 = vmatpush1.bf16.msra.mxu0 %v1022
        %1026 = vmatprep.subr.bf16.mxu0 0
        %1027 = vmatpush1.bf16.msra.mxu0 0
        %1028 = vmatprep.subr.bf16.mxu0 0
        %1029 = vmatpush1.bf16.msra.mxu0 0
        %1030 = vmatprep.subr.bf16.mxu0 0
        %1031 = vmatpush1.bf16.msra.mxu0 0
        %1032 = vmatprep.subr.bf16.mxu0 0
        %1033 = vmatpush1.bf16.msra.mxu0 0
        %1034 = vmatprep.subr.bf16.mxu0 0
        %1035 = vmatpush1.bf16.msra.mxu0 0
        %1036 = vmatprep.subr.bf16.mxu0 0
        %1037 = vmatpush1.bf16.msra.mxu0 0
        %1038 = vmatprep.subr.bf16.mxu0 0
        %1039 = vmatpush1.bf16.msra.mxu0 0
        %1040 = vmatprep.subr.bf16.mxu0 0
        %1041 = vmatpush1.bf16.msra.mxu0 0
        %1042 = vmatprep.subr.bf16.mxu0 0
        %1043 = vmatpush1.bf16.msra.mxu0 0
        %1044 = vmatprep.subr.bf16.mxu0 0
        %1045 = vmatpush1.bf16.msra.mxu0 0
        %1046 = vmatprep.subr.bf16.mxu0 0
        %1047 = vmatpush1.bf16.msra.mxu0 0
        %1048 = vmatprep.subr.bf16.mxu0 0
        %1049 = vmatpush1.bf16.msra.mxu0 0
        %1050 = vmatprep.subr.bf16.mxu0 0
        %1051 = vmatpush1.bf16.msra.mxu0 0
        %1052 = vmatprep.subr.bf16.mxu0 0
        %1053 = vmatpush1.bf16.msra.mxu0 0
        %1054 = vmatprep.subr.bf16.mxu0 0
        %1055 = vmatpush1.bf16.msra.mxu0 0
        %1056 = vmatprep.mubr.bf16.mxu0 0
        %1057 = vmatmul.mubr.bf16.gmra.mrb[0].mxu0 %v974
        %v1058 = vpop.f32.mrb[0].mxu0
        %v1059 = vadd.f32 0.0, %v1058
        %v1060 = vpop.f32.mrb[0].mxu0
        %v1061 = vpop.f32.mrb[0].mxu0
        %v1062 = vadd.f32 0.0, %v1061
        %v1063 = vpop.f32.mrb[0].mxu0
        %1064 = vmatprep.mubr.bf16.mxu0 0
        %1065 = vmatmul.mubr.bf16.gmra.mrb[0].mxu0 %v977
        %v1066 = vpop.f32.mrb[0].mxu0
        %v1067 = vadd.f32 0.0, %v1066
        %v1068 = vpop.f32.mrb[0].mxu0
        %v1069 = vpop.f32.mrb[0].mxu0
        %v1070 = vadd.f32 0.0, %v1069
        %v1071 = vpop.f32.mrb[0].mxu0
        %1072 = vmatprep.mubr.bf16.mxu0 0
        %1073 = vmatmul.mubr.bf16.gmra.mrb[0].mxu0 %v980
        %v1074 = vpop.f32.mrb[0].mxu0
        %v1075 = vadd.f32 0.0, %v1074
        %v1076 = vpop.f32.mrb[0].mxu0
        %v1077 = vpop.f32.mrb[0].mxu0
        %v1078 = vadd.f32 0.0, %v1077
        %v1079 = vpop.f32.mrb[0].mxu0
        %1080 = vmatprep.mubr.bf16.mxu0 0
        %1081 = vmatmul.mubr.bf16.gmra.mrb[0].mxu0 %v983
        %v1082 = vpop.f32.mrb[0].mxu0
        %v1083 = vadd.f32 0.0, %v1082
        %v1084 = vpop.f32.mrb[0].mxu0
        %v1085 = vpop.f32.mrb[0].mxu0
        %v1086 = vadd.f32 0.0, %v1085
        %v1087 = vpop.f32.mrb[0].mxu0
        %1088 = vmatprep.mubr.bf16.mxu0 0
        %1089 = vmatmul.mubr.bf16.gmra.mrb[0].mxu0 %v986
        %v1090 = vpop.f32.mrb[0].mxu0
        %v1091 = vadd.f32 0.0, %v1090
        %v1092 = vpop.f32.mrb[0].mxu0
        %v1093 = vpop.f32.mrb[0].mxu0
        %v1094 = vadd.f32 0.0, %v1093
        %v1095 = vpop.f32.mrb[0].mxu0
        %1096 = vmatprep.mubr.bf16.mxu0 0
        %1097 = vmatmul.mubr.bf16.gmra.mrb[0].mxu0 %v989
        %v1098 = vpop.f32.mrb[0].mxu0
        %v1099 = vadd.f32 0.0, %v1098
        %v1100 = vpop.f32.mrb[0].mxu0
        %v1101 = vpop.f32.mrb[0].mxu0
        %v1102 = vadd.f32 0.0, %v1101
        %v1103 = vpop.f32.mrb[0].mxu0
        %1104 = vmatprep.mubr.bf16.mxu0 0
        %1105 = vmatmul.mubr.bf16.gmra.mrb[0].mxu0 %v992
        %v1106 = vpop.f32.mrb[0].mxu0
        %v1107 = vadd.f32 0.0, %v1106
        %v1108 = vpop.f32.mrb[0].mxu0
        %v1109 = vpop.f32.mrb[0].mxu0
        %v1110 = vadd.f32 0.0, %v1109
        %v1111 = vpop.f32.mrb[0].mxu0
        %1112 = vmatprep.mubr.bf16.mxu0 0
        %1113 = vmatmul.mubr.bf16.gmra.mrb[0].mxu0 %v995
        %v1114 = vpop.f32.mrb[0].mxu0
        %v1115 = vadd.f32 0.0, %v1114
        %v1116 = vpop.f32.mrb[0].mxu0
        %v1117 = vpop.f32.mrb[0].mxu0
        %v1118 = vadd.f32 0.0, %v1117
        %v1119 = vpop.f32.mrb[0].mxu0
        %1120 = vmatprep.mubr.bf16.mxu0 0
        %1121 = vmatmul.mubr.bf16.gmra.mrb[0].mxu0 %v998
        %v1122 = vpop.f32.mrb[0].mxu0
        %v1123 = vadd.f32 0.0, %v1122
        %v1124 = vpop.f32.mrb[0].mxu0
        %v1125 = vpop.f32.mrb[0].mxu0
        %v1126 = vadd.f32 0.0, %v1125
        %v1127 = vpop.f32.mrb[0].mxu0
        %1128 = vmatprep.mubr.bf16.mxu0 0
        %1129 = vmatmul.mubr.bf16.gmra.mrb[0].mxu0 %v1001
        %v1130 = vpop.f32.mrb[0].mxu0
        %v1131 = vadd.f32 0.0, %v1130
        %v1132 = vpop.f32.mrb[0].mxu0
        %v1133 = vpop.f32.mrb[0].mxu0
        %v1134 = vadd.f32 0.0, %v1133
        %v1135 = vpop.f32.mrb[0].mxu0
        %1136 = vmatprep.mubr.bf16.mxu0 0
        %1137 = vmatmul.mubr.bf16.gmra.mrb[0].mxu0 %v1004
        %v1138 = vpop.f32.mrb[0].mxu0
        %v1139 = vadd.f32 0.0, %v1138
        %v1140 = vpop.f32.mrb[0].mxu0
        %v1141 = vpop.f32.mrb[0].mxu0
        %v1142 = vadd.f32 0.0, %v1141
        %v1143 = vpop.f32.mrb[0].mxu0
        %1144 = vmatprep.mubr.bf16.mxu0 0
        %1145 = vmatmul.mubr.bf16.gmra.mrb[0].mxu0 %v1007
        %v1146 = vpop.f32.mrb[0].mxu0
        %v1147 = vadd.f32 0.0, %v1146
        %v1148 = vpop.f32.mrb[0].mxu0
        %v1149 = vpop.f32.mrb[0].mxu0
        %v1150 = vadd.f32 0.0, %v1149
        %v1151 = vpop.f32.mrb[0].mxu0
        %1152 = vmatprep.mubr.bf16.mxu0 0
        %1153 = vmatmul.mubr.bf16.gmra.mrb[0].mxu0 %v1010
        %v1154 = vpop.f32.mrb[0].mxu0
        %v1155 = vadd.f32 0.0, %v1154
        %v1156 = vpop.f32.mrb[0].mxu0
        %v1157 = vpop.f32.mrb[0].mxu0
        %v1158 = vadd.f32 0.0, %v1157
        %v1159 = vpop.f32.mrb[0].mxu0
        %1160 = vmatprep.mubr.bf16.mxu0 0
        %1161 = vmatmul.mubr.bf16.gmra.mrb[0].mxu0 %v1013
        %v1162 = vpop.f32.mrb[0].mxu0
        %v1163 = vadd.f32 0.0, %v1162
        %v1164 = vpop.f32.mrb[0].mxu0
        %v1165 = vpop.f32.mrb[0].mxu0
        %v1166 = vadd.f32 0.0, %v1165
        %v1167 = vpop.f32.mrb[0].mxu0
        %1168 = vmatprep.mubr.bf16.mxu0 0
        %1169 = vmatmul.mubr.bf16.gmra.mrb[0].mxu0 %v1016
        %v1170 = vpop.f32.mrb[0].mxu0
        %v1171 = vadd.f32 0.0, %v1170
        %v1172 = vpop.f32.mrb[0].mxu0
        %v1173 = vpop.f32.mrb[0].mxu0
        %v1174 = vadd.f32 0.0, %v1173
        %v1175 = vpop.f32.mrb[0].mxu0
        %1176 = vmatprep.mubr.bf16.mxu0 0
        %1177 = vmatmul.mubr.bf16.gmra.mrb[0].mxu0 %v1019
        %v1178 = vpop.f32.mrb[0].mxu0
        %v1179 = vadd.f32 0.0, %v1178
        %v1180 = vpop.f32.mrb[0].mxu0
        %v1181 = vpop.f32.mrb[0].mxu0
        %v1182 = vadd.f32 0.0, %v1181
        %v1183 = vpop.f32.mrb[0].mxu0
        %1184 = vdwg.mxu0
        %v1185 = vadd.f32 %v680, %v1059
        %v1186 = vadd.f32 %v681, %v1062
        %v1187 = vadd.f32 %v682, %v1067
        %v1188 = vadd.f32 %v683, %v1070
        %v1189 = vadd.f32 %v684, %v1075
        %v1190 = vadd.f32 %v685, %v1078
        %v1191 = vadd.f32 %v686, %v1083
        %v1192 = vadd.f32 %v687, %v1086
        %v1193 = vadd.f32 %v688, %v1091
        %v1194 = vadd.f32 %v689, %v1094
        %v1195 = vadd.f32 %v690, %v1099
        %v1196 = vadd.f32 %v691, %v1102
        %v1197 = vadd.f32 %v692, %v1107
        %v1198 = vadd.f32 %v693, %v1110
        %v1199 = vadd.f32 %v694, %v1115
        %v1200 = vadd.f32 %v695, %v1118
        %v1201 = vadd.f32 %v696, %v1123
        %v1202 = vadd.f32 %v697, %v1126
        %v1203 = vadd.f32 %v698, %v1131
        %v1204 = vadd.f32 %v699, %v1134
        %v1205 = vadd.f32 %v700, %v1139
        %v1206 = vadd.f32 %v701, %v1142
        %v1207 = vadd.f32 %v702, %v1147
        %v1208 = vadd.f32 %v703, %v1150
        %v1209 = vadd.f32 %v704, %v1155
        %v1210 = vadd.f32 %v705, %v1158
        %v1211 = vadd.f32 %v706, %v1163
        %v1212 = vadd.f32 %v707, %v1166
        %v1213 = vadd.f32 %v708, %v1171
        %v1214 = vadd.f32 %v709, %v1174
        %v1215 = vadd.f32 %v710, %v1179
        %v1216 = vadd.f32 %v711, %v1182
        %v1217 = vld [vmem:[%s270] sm:$0xc]
        %v1218 = vld [vmem:[%s270 + $0x8] sm:$0x3]
        %v1219 = vld [vmem:[%s270 + $0xc] sm:$0xc]
        %v1220 = vld [vmem:[%s270 + $0x14] sm:$0x3]
        %v1221 = vld [vmem:[%s270 + $0x18] sm:$0xc]
        %v1222 = vld [vmem:[%s270 + $0x20] sm:$0x3]
        %v1223 = vld [vmem:[%s270 + $0x24] sm:$0xc]
        %v1224 = vld [vmem:[%s270 + $0x2c] sm:$0x3]
        %v1225 = vld [vmem:[%s270 + $0x30] sm:$0xc]
        %v1226 = vld [vmem:[%s270 + $0x38] sm:$0x3]
        %v1227 = vld [vmem:[%s270 + $0x3c] sm:$0xc]
        %v1228 = vld [vmem:[%s270 + $0x44] sm:$0x3]
        %v1229 = vld [vmem:[%s270 + $0x48] sm:$0xc]
        %v1230 = vld [vmem:[%s270 + $0x50] sm:$0x3]
        %v1231 = vld [vmem:[%s270 + $0x54] sm:$0xc]
        %v1232 = vld [vmem:[%s270 + $0x5c] sm:$0x3]
        %v1233 = vld [vmem:[%s270 + $0x60] sm:$0xc]
        %v1234 = vld [vmem:[%s270 + $0x68] sm:$0x3]
        %v1235 = vld [vmem:[%s270 + $0x6c] sm:$0xc]
        %v1236 = vld [vmem:[%s270 + $0x74] sm:$0x3]
        %v1237 = vld [vmem:[%s270 + $0x78] sm:$0xc]
        %v1238 = vld [vmem:[%s270 + $0x80] sm:$0x3]
        %v1239 = vld [vmem:[%s270 + $0x84] sm:$0xc]
        %v1240 = vld [vmem:[%s270 + $0x8c] sm:$0x3]
        %v1241 = vld [vmem:[%s270 + $0x90] sm:$0xc]
        %v1242 = vld [vmem:[%s270 + $0x98] sm:$0x3]
        %v1243 = vld [vmem:[%s270 + $0x9c] sm:$0xc]
        %v1244 = vld [vmem:[%s270 + $0xa4] sm:$0x3]
        %v1245 = vld [vmem:[%s270 + $0xa8] sm:$0xc]
        %v1246 = vld [vmem:[%s270 + $0xb0] sm:$0x3]
        %v1247 = vld [vmem:[%s270 + $0xb4] sm:$0xc]
        %v1248 = vld [vmem:[%s270 + $0xbc] sm:$0x3]
        %vm1281 = vcmask 1041408
        %vm1282 = vcmask 1045508
        %vm1283 = vmor %vm1281, %vm1282
        %v1284 = vrot.slane %v1217, 6
        %v1285 = vrot.slane %v1284, 4
        %v1286 = vrot.slane %v713, 6
        %v1287 = vsel %vm1283, %v1285, %v1286
        %v1288 = vrot.slane %v1286, 4
        %v1289 = vrot.slane %v1218, 6
        %v1290 = vsel %vm1283, %v1288, %v1289
        %v1291 = vrot.slane %v1219, 6
        %v1292 = vrot.slane %v1291, 4
        %v1293 = vrot.slane %v716, 6
        %v1294 = vsel %vm1283, %v1292, %v1293
        %v1295 = vrot.slane %v1293, 4
        %v1296 = vrot.slane %v1220, 6
        %v1297 = vsel %vm1283, %v1295, %v1296
        %v1298 = vrot.slane %v1221, 6
        %v1299 = vrot.slane %v1298, 4
        %v1300 = vrot.slane %v719, 6
        %v1301 = vsel %vm1283, %v1299, %v1300
        %v1302 = vrot.slane %v1300, 4
        %v1303 = vrot.slane %v1222, 6
        %v1304 = vsel %vm1283, %v1302, %v1303
        %v1305 = vrot.slane %v1223, 6
        %v1306 = vrot.slane %v1305, 4
        %v1307 = vrot.slane %v722, 6
        %v1308 = vsel %vm1283, %v1306, %v1307
        %v1309 = vrot.slane %v1307, 4
        %v1310 = vrot.slane %v1224, 6
        %v1311 = vsel %vm1283, %v1309, %v1310
        %v1312 = vrot.slane %v1225, 6
        %v1313 = vrot.slane %v1312, 4
        %v1314 = vrot.slane %v725, 6
        %v1315 = vsel %vm1283, %v1313, %v1314
        %v1316 = vrot.slane %v1314, 4
        %v1317 = vrot.slane %v1226, 6
        %v1318 = vsel %vm1283, %v1316, %v1317
        %v1319 = vrot.slane %v1227, 6
        %v1320 = vrot.slane %v1319, 4
        %v1321 = vrot.slane %v728, 6
        %v1322 = vsel %vm1283, %v1320, %v1321
        %v1323 = vrot.slane %v1321, 4
        %v1324 = vrot.slane %v1228, 6
        %v1325 = vsel %vm1283, %v1323, %v1324
        %v1326 = vrot.slane %v1229, 6
        %v1327 = vrot.slane %v1326, 4
        %v1328 = vrot.slane %v731, 6
        %v1329 = vsel %vm1283, %v1327, %v1328
        %v1330 = vrot.slane %v1328, 4
        %v1331 = vrot.slane %v1230, 6
        %v1332 = vsel %vm1283, %v1330, %v1331
        %v1333 = vrot.slane %v1231, 6
        %v1334 = vrot.slane %v1333, 4
        %v1335 = vrot.slane %v734, 6
        %v1336 = vsel %vm1283, %v1334, %v1335
        %v1337 = vrot.slane %v1335, 4
        %v1338 = vrot.slane %v1232, 6
        %v1339 = vsel %vm1283, %v1337, %v1338
        %v1340 = vrot.slane %v1233, 6
        %v1341 = vrot.slane %v1340, 4
        %v1342 = vrot.slane %v737, 6
        %v1343 = vsel %vm1283, %v1341, %v1342
        %v1344 = vrot.slane %v1342, 4
        %v1345 = vrot.slane %v1234, 6
        %v1346 = vsel %vm1283, %v1344, %v1345
        %v1347 = vrot.slane %v1235, 6
        %v1348 = vrot.slane %v1347, 4
        %v1349 = vrot.slane %v740, 6
        %v1350 = vsel %vm1283, %v1348, %v1349
        %v1351 = vrot.slane %v1349, 4
        %v1352 = vrot.slane %v1236, 6
        %v1353 = vsel %vm1283, %v1351, %v1352
        %v1354 = vrot.slane %v1237, 6
        %v1355 = vrot.slane %v1354, 4
        %v1356 = vrot.slane %v743, 6
        %v1357 = vsel %vm1283, %v1355, %v1356
        %v1358 = vrot.slane %v1356, 4
        %v1359 = vrot.slane %v1238, 6
        %v1360 = vsel %vm1283, %v1358, %v1359
        %v1361 = vrot.slane %v1239, 6
        %v1362 = vrot.slane %v1361, 4
        %v1363 = vrot.slane %v746, 6
        %v1364 = vsel %vm1283, %v1362, %v1363
        %v1365 = vrot.slane %v1363, 4
        %v1366 = vrot.slane %v1240, 6
        %v1367 = vsel %vm1283, %v1365, %v1366
        %v1368 = vrot.slane %v1241, 6
        %v1369 = vrot.slane %v1368, 4
        %v1370 = vrot.slane %v749, 6
        %v1371 = vsel %vm1283, %v1369, %v1370
        %v1372 = vrot.slane %v1370, 4
        %v1373 = vrot.slane %v1242, 6
        %v1374 = vsel %vm1283, %v1372, %v1373
        %v1375 = vrot.slane %v1243, 6
        %v1376 = vrot.slane %v1375, 4
        %v1377 = vrot.slane %v752, 6
        %v1378 = vsel %vm1283, %v1376, %v1377
        %v1379 = vrot.slane %v1377, 4
        %v1380 = vrot.slane %v1244, 6
        %v1381 = vsel %vm1283, %v1379, %v1380
        %v1382 = vrot.slane %v1245, 6
        %v1383 = vrot.slane %v1382, 4
        %v1384 = vrot.slane %v755, 6
        %v1385 = vsel %vm1283, %v1383, %v1384
        %v1386 = vrot.slane %v1384, 4
        %v1387 = vrot.slane %v1246, 6
        %v1388 = vsel %vm1283, %v1386, %v1387
        %v1389 = vrot.slane %v1247, 6
        %v1390 = vrot.slane %v1389, 4
        %v1391 = vrot.slane %v758, 6
        %v1392 = vsel %vm1283, %v1390, %v1391
        %v1393 = vrot.slane %v1391, 4
        %v1394 = vrot.slane %v1248, 6
        %v1395 = vsel %vm1283, %v1393, %v1394
        %s1396 = scalar_lea.vmem %s277, 4
        %v1397 = vld [vmem:[%s1396] sm:$0x3]
        %v1398 = vunpack.c.l.b16 %v1287
        %v1399 = vunpack.c.l.b16 %v1290
        %v1400 = vunpack.c.l.b16 %v1294
        %v1401 = vunpack.c.l.b16 %v1297
        %v1402 = vunpack.c.l.b16 %v1301
        %v1403 = vunpack.c.l.b16 %v1304
        %v1404 = vunpack.c.l.b16 %v1308
        %v1405 = vunpack.c.l.b16 %v1311
        %v1406 = vunpack.c.l.b16 %v1315
        %v1407 = vunpack.c.l.b16 %v1318
        %v1408 = vunpack.c.l.b16 %v1322
        %v1409 = vunpack.c.l.b16 %v1325
        %v1410 = vunpack.c.l.b16 %v1329
        %v1411 = vunpack.c.l.b16 %v1332
        %v1412 = vunpack.c.l.b16 %v1336
        %v1413 = vunpack.c.l.b16 %v1339
        %v1414 = vunpack.c.l.b16 %v1343
        %v1415 = vunpack.c.l.b16 %v1346
        %v1416 = vunpack.c.l.b16 %v1350
        %v1417 = vunpack.c.l.b16 %v1353
        %v1418 = vunpack.c.l.b16 %v1357
        %v1419 = vunpack.c.l.b16 %v1360
        %v1420 = vunpack.c.l.b16 %v1364
        %v1421 = vunpack.c.l.b16 %v1367
        %v1422 = vunpack.c.l.b16 %v1371
        %v1423 = vunpack.c.l.b16 %v1374
        %v1424 = vunpack.c.l.b16 %v1378
        %v1425 = vunpack.c.l.b16 %v1381
        %v1426 = vunpack.c.l.b16 %v1385
        %v1427 = vunpack.c.l.b16 %v1388
        %v1428 = vunpack.c.l.b16 %v1392
        %v1429 = vunpack.c.l.b16 %v1395
        %v1430 = vpack.c.b16 %v1399, %v1398
        %v1431 = vpack.c.b16 %v1401, %v1400
        %v1432 = vpack.c.b16 %v1403, %v1402
        %v1433 = vpack.c.b16 %v1405, %v1404
        %v1434 = vpack.c.b16 %v1407, %v1406
        %v1435 = vpack.c.b16 %v1409, %v1408
        %v1436 = vpack.c.b16 %v1411, %v1410
        %v1437 = vpack.c.b16 %v1413, %v1412
        %v1438 = vpack.c.b16 %v1415, %v1414
        %v1439 = vpack.c.b16 %v1417, %v1416
        %v1440 = vpack.c.b16 %v1419, %v1418
        %v1441 = vpack.c.b16 %v1421, %v1420
        %v1442 = vpack.c.b16 %v1423, %v1422
        %v1443 = vpack.c.b16 %v1425, %v1424
        %v1444 = vpack.c.b16 %v1427, %v1426
        %v1445 = vpack.c.b16 %v1429, %v1428
        %v1447 = vsel %vm466, %v1430, 0
        %v1450 = vsel %vm466, %v1431, 0
        %v1453 = vsel %vm466, %v1432, 0
        %v1456 = vsel %vm466, %v1433, 0
        %v1459 = vsel %vm466, %v1434, 0
        %v1462 = vsel %vm466, %v1435, 0
        %v1465 = vsel %vm466, %v1436, 0
        %v1468 = vsel %vm466, %v1437, 0
        %v1471 = vsel %vm466, %v1438, 0
        %v1474 = vsel %vm466, %v1439, 0
        %v1477 = vsel %vm466, %v1440, 0
        %v1480 = vsel %vm466, %v1441, 0
        %v1483 = vsel %vm466, %v1442, 0
        %v1486 = vsel %vm466, %v1443, 0
        %v1489 = vsel %vm466, %v1444, 0
        %v1492 = vsel %vm466, %v1445, 0
        %v1495 = vsel %vm515, %v1397, 0
        %1497 = vmatprep.subr.bf16.mxu0 0
        %1498 = vmatpush1.bf16.msra.mxu0 %v1495
        %1499 = vmatprep.subr.bf16.mxu0 0
        %1500 = vmatpush1.bf16.msra.mxu0 0
        %1501 = vmatprep.subr.bf16.mxu0 0
        %1502 = vmatpush1.bf16.msra.mxu0 0
        %1503 = vmatprep.subr.bf16.mxu0 0
        %1504 = vmatpush1.bf16.msra.mxu0 0
        %1505 = vmatprep.subr.bf16.mxu0 0
        %1506 = vmatpush1.bf16.msra.mxu0 0
        %1507 = vmatprep.subr.bf16.mxu0 0
        %1508 = vmatpush1.bf16.msra.mxu0 0
        %1509 = vmatprep.subr.bf16.mxu0 0
        %1510 = vmatpush1.bf16.msra.mxu0 0
        %1511 = vmatprep.subr.bf16.mxu0 0
        %1512 = vmatpush1.bf16.msra.mxu0 0
        %1513 = vmatprep.subr.bf16.mxu0 0
        %1514 = vmatpush1.bf16.msra.mxu0 0
        %1515 = vmatprep.subr.bf16.mxu0 0
        %1516 = vmatpush1.bf16.msra.mxu0 0
        %1517 = vmatprep.subr.bf16.mxu0 0
        %1518 = vmatpush1.bf16.msra.mxu0 0
        %1519 = vmatprep.subr.bf16.mxu0 0
        %1520 = vmatpush1.bf16.msra.mxu0 0
        %1521 = vmatprep.subr.bf16.mxu0 0
        %1522 = vmatpush1.bf16.msra.mxu0 0
        %1523 = vmatprep.subr.bf16.mxu0 0
        %1524 = vmatpush1.bf16.msra.mxu0 0
        %1525 = vmatprep.subr.bf16.mxu0 0
        %1526 = vmatpush1.bf16.msra.mxu0 0
        %1527 = vmatprep.subr.bf16.mxu0 0
        %1528 = vmatpush1.bf16.msra.mxu0 0
        %1529 = vmatprep.mubr.bf16.mxu0 0
        %1530 = vmatmul.mubr.bf16.gmra.mrb[0].mxu0 %v1447
        %v1531 = vpop.f32.mrb[0].mxu0
        %v1532 = vadd.f32 0.0, %v1531
        %v1533 = vpop.f32.mrb[0].mxu0
        %v1534 = vpop.f32.mrb[0].mxu0
        %v1535 = vadd.f32 0.0, %v1534
        %v1536 = vpop.f32.mrb[0].mxu0
        %1537 = vmatprep.mubr.bf16.mxu0 0
        %1538 = vmatmul.mubr.bf16.gmra.mrb[0].mxu0 %v1450
        %v1539 = vpop.f32.mrb[0].mxu0
        %v1540 = vadd.f32 0.0, %v1539
        %v1541 = vpop.f32.mrb[0].mxu0
        %v1542 = vpop.f32.mrb[0].mxu0
        %v1543 = vadd.f32 0.0, %v1542
        %v1544 = vpop.f32.mrb[0].mxu0
        %1545 = vmatprep.mubr.bf16.mxu0 0
        %1546 = vmatmul.mubr.bf16.gmra.mrb[0].mxu0 %v1453
        %v1547 = vpop.f32.mrb[0].mxu0
        %v1548 = vadd.f32 0.0, %v1547
        %v1549 = vpop.f32.mrb[0].mxu0
        %v1550 = vpop.f32.mrb[0].mxu0
        %v1551 = vadd.f32 0.0, %v1550
        %v1552 = vpop.f32.mrb[0].mxu0
        %1553 = vmatprep.mubr.bf16.mxu0 0
        %1554 = vmatmul.mubr.bf16.gmra.mrb[0].mxu0 %v1456
        %v1555 = vpop.f32.mrb[0].mxu0
        %v1556 = vadd.f32 0.0, %v1555
        %v1557 = vpop.f32.mrb[0].mxu0
        %v1558 = vpop.f32.mrb[0].mxu0
        %v1559 = vadd.f32 0.0, %v1558
        %v1560 = vpop.f32.mrb[0].mxu0
        %1561 = vmatprep.mubr.bf16.mxu0 0
        %1562 = vmatmul.mubr.bf16.gmra.mrb[0].mxu0 %v1459
        %v1563 = vpop.f32.mrb[0].mxu0
        %v1564 = vadd.f32 0.0, %v1563
        %v1565 = vpop.f32.mrb[0].mxu0
        %v1566 = vpop.f32.mrb[0].mxu0
        %v1567 = vadd.f32 0.0, %v1566
        %v1568 = vpop.f32.mrb[0].mxu0
        %1569 = vmatprep.mubr.bf16.mxu0 0
        %1570 = vmatmul.mubr.bf16.gmra.mrb[0].mxu0 %v1462
        %v1571 = vpop.f32.mrb[0].mxu0
        %v1572 = vadd.f32 0.0, %v1571
        %v1573 = vpop.f32.mrb[0].mxu0
        %v1574 = vpop.f32.mrb[0].mxu0
        %v1575 = vadd.f32 0.0, %v1574
        %v1576 = vpop.f32.mrb[0].mxu0
        %1577 = vmatprep.mubr.bf16.mxu0 0
        %1578 = vmatmul.mubr.bf16.gmra.mrb[0].mxu0 %v1465
        %v1579 = vpop.f32.mrb[0].mxu0
        %v1580 = vadd.f32 0.0, %v1579
        %v1581 = vpop.f32.mrb[0].mxu0
        %v1582 = vpop.f32.mrb[0].mxu0
        %v1583 = vadd.f32 0.0, %v1582
        %v1584 = vpop.f32.mrb[0].mxu0
        %1585 = vmatprep.mubr.bf16.mxu0 0
        %1586 = vmatmul.mubr.bf16.gmra.mrb[0].mxu0 %v1468
        %v1587 = vpop.f32.mrb[0].mxu0
        %v1588 = vadd.f32 0.0, %v1587
        %v1589 = vpop.f32.mrb[0].mxu0
        %v1590 = vpop.f32.mrb[0].mxu0
        %v1591 = vadd.f32 0.0, %v1590
        %v1592 = vpop.f32.mrb[0].mxu0
        %1593 = vmatprep.mubr.bf16.mxu0 0
        %1594 = vmatmul.mubr.bf16.gmra.mrb[0].mxu0 %v1471
        %v1595 = vpop.f32.mrb[0].mxu0
        %v1596 = vadd.f32 0.0, %v1595
        %v1597 = vpop.f32.mrb[0].mxu0
        %v1598 = vpop.f32.mrb[0].mxu0
        %v1599 = vadd.f32 0.0, %v1598
        %v1600 = vpop.f32.mrb[0].mxu0
        %1601 = vmatprep.mubr.bf16.mxu0 0
        %1602 = vmatmul.mubr.bf16.gmra.mrb[0].mxu0 %v1474
        %v1603 = vpop.f32.mrb[0].mxu0
        %v1604 = vadd.f32 0.0, %v1603
        %v1605 = vpop.f32.mrb[0].mxu0
        %v1606 = vpop.f32.mrb[0].mxu0
        %v1607 = vadd.f32 0.0, %v1606
        %v1608 = vpop.f32.mrb[0].mxu0
        %1609 = vmatprep.mubr.bf16.mxu0 0
        %1610 = vmatmul.mubr.bf16.gmra.mrb[0].mxu0 %v1477
        %v1611 = vpop.f32.mrb[0].mxu0
        %v1612 = vadd.f32 0.0, %v1611
        %v1613 = vpop.f32.mrb[0].mxu0
        %v1614 = vpop.f32.mrb[0].mxu0
        %v1615 = vadd.f32 0.0, %v1614
        %v1616 = vpop.f32.mrb[0].mxu0
        %1617 = vmatprep.mubr.bf16.mxu0 0
        %1618 = vmatmul.mubr.bf16.gmra.mrb[0].mxu0 %v1480
        %v1619 = vpop.f32.mrb[0].mxu0
        %v1620 = vadd.f32 0.0, %v1619
        %v1621 = vpop.f32.mrb[0].mxu0
        %v1622 = vpop.f32.mrb[0].mxu0
        %v1623 = vadd.f32 0.0, %v1622
        %v1624 = vpop.f32.mrb[0].mxu0
        %1625 = vmatprep.mubr.bf16.mxu0 0
        %1626 = vmatmul.mubr.bf16.gmra.mrb[0].mxu0 %v1483
        %v1627 = vpop.f32.mrb[0].mxu0
        %v1628 = vadd.f32 0.0, %v1627
        %v1629 = vpop.f32.mrb[0].mxu0
        %v1630 = vpop.f32.mrb[0].mxu0
        %v1631 = vadd.f32 0.0, %v1630
        %v1632 = vpop.f32.mrb[0].mxu0
        %1633 = vmatprep.mubr.bf16.mxu0 0
        %1634 = vmatmul.mubr.bf16.gmra.mrb[0].mxu0 %v1486
        %v1635 = vpop.f32.mrb[0].mxu0
        %v1636 = vadd.f32 0.0, %v1635
        %v1637 = vpop.f32.mrb[0].mxu0
        %v1638 = vpop.f32.mrb[0].mxu0
        %v1639 = vadd.f32 0.0, %v1638
        %v1640 = vpop.f32.mrb[0].mxu0
        %1641 = vmatprep.mubr.bf16.mxu0 0
        %1642 = vmatmul.mubr.bf16.gmra.mrb[0].mxu0 %v1489
        %v1643 = vpop.f32.mrb[0].mxu0
        %v1644 = vadd.f32 0.0, %v1643
        %v1645 = vpop.f32.mrb[0].mxu0
        %v1646 = vpop.f32.mrb[0].mxu0
        %v1647 = vadd.f32 0.0, %v1646
        %v1648 = vpop.f32.mrb[0].mxu0
        %1649 = vmatprep.mubr.bf16.mxu0 0
        %1650 = vmatmul.mubr.bf16.gmra.mrb[0].mxu0 %v1492
        %v1651 = vpop.f32.mrb[0].mxu0
        %v1652 = vadd.f32 0.0, %v1651
        %v1653 = vpop.f32.mrb[0].mxu0
        %v1654 = vpop.f32.mrb[0].mxu0
        %v1655 = vadd.f32 0.0, %v1654
        %v1656 = vpop.f32.mrb[0].mxu0
        %1657 = vdwg.mxu0
        %v1658 = vadd.f32 %v1185, %v1532
        %v1659 = vadd.f32 %v1186, %v1535
        %v1660 = vadd.f32 %v1187, %v1540
        %v1661 = vadd.f32 %v1188, %v1543
        %v1662 = vadd.f32 %v1189, %v1548
        %v1663 = vadd.f32 %v1190, %v1551
        %v1664 = vadd.f32 %v1191, %v1556
        %v1665 = vadd.f32 %v1192, %v1559
        %v1666 = vadd.f32 %v1193, %v1564
        %v1667 = vadd.f32 %v1194, %v1567
        %v1668 = vadd.f32 %v1195, %v1572
        %v1669 = vadd.f32 %v1196, %v1575
        %v1670 = vadd.f32 %v1197, %v1580
        %v1671 = vadd.f32 %v1198, %v1583
        %v1672 = vadd.f32 %v1199, %v1588
        %v1673 = vadd.f32 %v1200, %v1591
        %v1674 = vadd.f32 %v1201, %v1596
        %v1675 = vadd.f32 %v1202, %v1599
        %v1676 = vadd.f32 %v1203, %v1604
        %v1677 = vadd.f32 %v1204, %v1607
        %v1678 = vadd.f32 %v1205, %v1612
        %v1679 = vadd.f32 %v1206, %v1615
        %v1680 = vadd.f32 %v1207, %v1620
        %v1681 = vadd.f32 %v1208, %v1623
        %v1682 = vadd.f32 %v1209, %v1628
        %v1683 = vadd.f32 %v1210, %v1631
        %v1684 = vadd.f32 %v1211, %v1636
        %v1685 = vadd.f32 %v1212, %v1639
        %v1686 = vadd.f32 %v1213, %v1644
        %v1687 = vadd.f32 %v1214, %v1647
        %v1688 = vadd.f32 %v1215, %v1652
        %v1689 = vadd.f32 %v1216, %v1655
        %s1690 = scalar_lea.vmem %s270, 24
        %v1691 = vld [vmem:[%s1690] sm:$0xf]
        %v1692 = vld [vmem:[%s1690 + $0x4] sm:$0xf]
        %v1693 = vld [vmem:[%s1690 + $0xc] sm:$0xf]
        %v1694 = vld [vmem:[%s1690 + $0x10] sm:$0xf]
        %v1695 = vld [vmem:[%s1690 + $0x18] sm:$0xf]
        %v1696 = vld [vmem:[%s1690 + $0x1c] sm:$0xf]
        %v1697 = vld [vmem:[%s1690 + $0x24] sm:$0xf]
        %v1698 = vld [vmem:[%s1690 + $0x28] sm:$0xf]
        %v1699 = vld [vmem:[%s1690 + $0x30] sm:$0xf]
        %v1700 = vld [vmem:[%s1690 + $0x34] sm:$0xf]
        %v1701 = vld [vmem:[%s1690 + $0x3c] sm:$0xf]
        %v1702 = vld [vmem:[%s1690 + $0x40] sm:$0xf]
        %v1703 = vld [vmem:[%s1690 + $0x48] sm:$0xf]
        %v1704 = vld [vmem:[%s1690 + $0x4c] sm:$0xf]
        %v1705 = vld [vmem:[%s1690 + $0x54] sm:$0xf]
        %v1706 = vld [vmem:[%s1690 + $0x58] sm:$0xf]
        %v1707 = vld [vmem:[%s1690 + $0x60] sm:$0xf]
        %v1708 = vld [vmem:[%s1690 + $0x64] sm:$0xf]
        %v1709 = vld [vmem:[%s1690 + $0x6c] sm:$0xf]
        %v1710 = vld [vmem:[%s1690 + $0x70] sm:$0xf]
        %v1711 = vld [vmem:[%s1690 + $0x78] sm:$0xf]
        %v1712 = vld [vmem:[%s1690 + $0x7c] sm:$0xf]
        %v1713 = vld [vmem:[%s1690 + $0x84] sm:$0xf]
        %v1714 = vld [vmem:[%s1690 + $0x88] sm:$0xf]
        %v1715 = vld [vmem:[%s1690 + $0x90] sm:$0xf]
        %v1716 = vld [vmem:[%s1690 + $0x94] sm:$0xf]
        %v1717 = vld [vmem:[%s1690 + $0x9c] sm:$0xf]
        %v1718 = vld [vmem:[%s1690 + $0xa0] sm:$0xf]
        %v1719 = vld [vmem:[%s1690 + $0xa8] sm:$0xf]
        %v1720 = vld [vmem:[%s1690 + $0xac] sm:$0xf]
        %v1721 = vld [vmem:[%s1690 + $0xb4] sm:$0xf]
        %v1722 = vld [vmem:[%s1690 + $0xb8] sm:$0xf]
        %s1723 = scalar_lea.vmem %s277, 6
        %v1724 = vld [vmem:[%s1723] sm:$0x3]
        %v1757 = vunpack.c.l.b16 %v1691
        %v1758 = vunpack.c.l.b16 %v1692
        %v1759 = vunpack.c.l.b16 %v1693
        %v1760 = vunpack.c.l.b16 %v1694
        %v1761 = vunpack.c.l.b16 %v1695
        %v1762 = vunpack.c.l.b16 %v1696
        %v1763 = vunpack.c.l.b16 %v1697
        %v1764 = vunpack.c.l.b16 %v1698
        %v1765 = vunpack.c.l.b16 %v1699
        %v1766 = vunpack.c.l.b16 %v1700
        %v1767 = vunpack.c.l.b16 %v1701
        %v1768 = vunpack.c.l.b16 %v1702
        %v1769 = vunpack.c.l.b16 %v1703
        %v1770 = vunpack.c.l.b16 %v1704
        %v1771 = vunpack.c.l.b16 %v1705
        %v1772 = vunpack.c.l.b16 %v1706
        %v1773 = vunpack.c.l.b16 %v1707
        %v1774 = vunpack.c.l.b16 %v1708
        %v1775 = vunpack.c.l.b16 %v1709
        %v1776 = vunpack.c.l.b16 %v1710
        %v1777 = vunpack.c.l.b16 %v1711
        %v1778 = vunpack.c.l.b16 %v1712
        %v1779 = vunpack.c.l.b16 %v1713
        %v1780 = vunpack.c.l.b16 %v1714
        %v1781 = vunpack.c.l.b16 %v1715
        %v1782 = vunpack.c.l.b16 %v1716
        %v1783 = vunpack.c.l.b16 %v1717
        %v1784 = vunpack.c.l.b16 %v1718
        %v1785 = vunpack.c.l.b16 %v1719
        %v1786 = vunpack.c.l.b16 %v1720
        %v1787 = vunpack.c.l.b16 %v1721
        %v1788 = vunpack.c.l.b16 %v1722
        %v1789 = vpack.c.b16 %v1758, %v1757
        %v1790 = vpack.c.b16 %v1760, %v1759
        %v1791 = vpack.c.b16 %v1762, %v1761
        %v1792 = vpack.c.b16 %v1764, %v1763
        %v1793 = vpack.c.b16 %v1766, %v1765
        %v1794 = vpack.c.b16 %v1768, %v1767
        %v1795 = vpack.c.b16 %v1770, %v1769
        %v1796 = vpack.c.b16 %v1772, %v1771
        %v1797 = vpack.c.b16 %v1774, %v1773
        %v1798 = vpack.c.b16 %v1776, %v1775
        %v1799 = vpack.c.b16 %v1778, %v1777
        %v1800 = vpack.c.b16 %v1780, %v1779
        %v1801 = vpack.c.b16 %v1782, %v1781
        %v1802 = vpack.c.b16 %v1784, %v1783
        %v1803 = vpack.c.b16 %v1786, %v1785
        %v1804 = vpack.c.b16 %v1788, %v1787
        %v1806 = vsel %vm466, %v1789, 0
        %v1809 = vsel %vm466, %v1790, 0
        %v1812 = vsel %vm466, %v1791, 0
        %v1815 = vsel %vm466, %v1792, 0
        %v1818 = vsel %vm466, %v1793, 0
        %v1821 = vsel %vm466, %v1794, 0
        %v1824 = vsel %vm466, %v1795, 0
        %v1827 = vsel %vm466, %v1796, 0
        %v1830 = vsel %vm466, %v1797, 0
        %v1833 = vsel %vm466, %v1798, 0
        %v1836 = vsel %vm466, %v1799, 0
        %v1839 = vsel %vm466, %v1800, 0
        %v1842 = vsel %vm466, %v1801, 0
        %v1845 = vsel %vm466, %v1802, 0
        %v1848 = vsel %vm466, %v1803, 0
        %v1851 = vsel %vm466, %v1804, 0
        %v1854 = vsel %vm515, %v1724, 0
        %1856 = vmatprep.subr.bf16.mxu0 0
        %1857 = vmatpush1.bf16.msra.mxu0 %v1854
        %1858 = vmatprep.subr.bf16.mxu0 0
        %1859 = vmatpush1.bf16.msra.mxu0 0
        %1860 = vmatprep.subr.bf16.mxu0 0
        %1861 = vmatpush1.bf16.msra.mxu0 0
        %1862 = vmatprep.subr.bf16.mxu0 0
        %1863 = vmatpush1.bf16.msra.mxu0 0
        %1864 = vmatprep.subr.bf16.mxu0 0
        %1865 = vmatpush1.bf16.msra.mxu0 0
        %1866 = vmatprep.subr.bf16.mxu0 0
        %1867 = vmatpush1.bf16.msra.mxu0 0
        %1868 = vmatprep.subr.bf16.mxu0 0
        %1869 = vmatpush1.bf16.msra.mxu0 0
        %1870 = vmatprep.subr.bf16.mxu0 0
        %1871 = vmatpush1.bf16.msra.mxu0 0
        %1872 = vmatprep.subr.bf16.mxu0 0
        %1873 = vmatpush1.bf16.msra.mxu0 0
        %1874 = vmatprep.subr.bf16.mxu0 0
        %1875 = vmatpush1.bf16.msra.mxu0 0
        %1876 = vmatprep.subr.bf16.mxu0 0
        %1877 = vmatpush1.bf16.msra.mxu0 0
        %1878 = vmatprep.subr.bf16.mxu0 0
        %1879 = vmatpush1.bf16.msra.mxu0 0
        %1880 = vmatprep.subr.bf16.mxu0 0
        %1881 = vmatpush1.bf16.msra.mxu0 0
        %1882 = vmatprep.subr.bf16.mxu0 0
        %1883 = vmatpush1.bf16.msra.mxu0 0
        %1884 = vmatprep.subr.bf16.mxu0 0
        %1885 = vmatpush1.bf16.msra.mxu0 0
        %1886 = vmatprep.subr.bf16.mxu0 0
        %1887 = vmatpush1.bf16.msra.mxu0 0
        %1888 = vmatprep.mubr.bf16.mxu0 0
        %1889 = vmatmul.mubr.bf16.gmra.mrb[0].mxu0 %v1806
        %v1890 = vpop.f32.mrb[0].mxu0
        %v1891 = vadd.f32 0.0, %v1890
        %v1892 = vpop.f32.mrb[0].mxu0
        %v1893 = vpop.f32.mrb[0].mxu0
        %v1894 = vadd.f32 0.0, %v1893
        %v1895 = vpop.f32.mrb[0].mxu0
        %1896 = vmatprep.mubr.bf16.mxu0 0
        %1897 = vmatmul.mubr.bf16.gmra.mrb[0].mxu0 %v1809
        %v1898 = vpop.f32.mrb[0].mxu0
        %v1899 = vadd.f32 0.0, %v1898
        %v1900 = vpop.f32.mrb[0].mxu0
        %v1901 = vpop.f32.mrb[0].mxu0
        %v1902 = vadd.f32 0.0, %v1901
        %v1903 = vpop.f32.mrb[0].mxu0
        %1904 = vmatprep.mubr.bf16.mxu0 0
        %1905 = vmatmul.mubr.bf16.gmra.mrb[0].mxu0 %v1812
        %v1906 = vpop.f32.mrb[0].mxu0
        %v1907 = vadd.f32 0.0, %v1906
        %v1908 = vpop.f32.mrb[0].mxu0
        %v1909 = vpop.f32.mrb[0].mxu0
        %v1910 = vadd.f32 0.0, %v1909
        %v1911 = vpop.f32.mrb[0].mxu0
        %1912 = vmatprep.mubr.bf16.mxu0 0
        %1913 = vmatmul.mubr.bf16.gmra.mrb[0].mxu0 %v1815
        %v1914 = vpop.f32.mrb[0].mxu0
        %v1915 = vadd.f32 0.0, %v1914
        %v1916 = vpop.f32.mrb[0].mxu0
        %v1917 = vpop.f32.mrb[0].mxu0
        %v1918 = vadd.f32 0.0, %v1917
        %v1919 = vpop.f32.mrb[0].mxu0
        %1920 = vmatprep.mubr.bf16.mxu0 0
        %1921 = vmatmul.mubr.bf16.gmra.mrb[0].mxu0 %v1818
        %v1922 = vpop.f32.mrb[0].mxu0
        %v1923 = vadd.f32 0.0, %v1922
        %v1924 = vpop.f32.mrb[0].mxu0
        %v1925 = vpop.f32.mrb[0].mxu0
        %v1926 = vadd.f32 0.0, %v1925
        %v1927 = vpop.f32.mrb[0].mxu0
        %1928 = vmatprep.mubr.bf16.mxu0 0
        %1929 = vmatmul.mubr.bf16.gmra.mrb[0].mxu0 %v1821
        %v1930 = vpop.f32.mrb[0].mxu0
        %v1931 = vadd.f32 0.0, %v1930
        %v1932 = vpop.f32.mrb[0].mxu0
        %v1933 = vpop.f32.mrb[0].mxu0
        %v1934 = vadd.f32 0.0, %v1933
        %v1935 = vpop.f32.mrb[0].mxu0
        %1936 = vmatprep.mubr.bf16.mxu0 0
        %1937 = vmatmul.mubr.bf16.gmra.mrb[0].mxu0 %v1824
        %v1938 = vpop.f32.mrb[0].mxu0
        %v1939 = vadd.f32 0.0, %v1938
        %v1940 = vpop.f32.mrb[0].mxu0
        %v1941 = vpop.f32.mrb[0].mxu0
        %v1942 = vadd.f32 0.0, %v1941
        %v1943 = vpop.f32.mrb[0].mxu0
        %1944 = vmatprep.mubr.bf16.mxu0 0
        %1945 = vmatmul.mubr.bf16.gmra.mrb[0].mxu0 %v1827
        %v1946 = vpop.f32.mrb[0].mxu0
        %v1947 = vadd.f32 0.0, %v1946
        %v1948 = vpop.f32.mrb[0].mxu0
        %v1949 = vpop.f32.mrb[0].mxu0
        %v1950 = vadd.f32 0.0, %v1949
        %v1951 = vpop.f32.mrb[0].mxu0
        %1952 = vmatprep.mubr.bf16.mxu0 0
        %1953 = vmatmul.mubr.bf16.gmra.mrb[0].mxu0 %v1830
        %v1954 = vpop.f32.mrb[0].mxu0
        %v1955 = vadd.f32 0.0, %v1954
        %v1956 = vpop.f32.mrb[0].mxu0
        %v1957 = vpop.f32.mrb[0].mxu0
        %v1958 = vadd.f32 0.0, %v1957
        %v1959 = vpop.f32.mrb[0].mxu0
        %1960 = vmatprep.mubr.bf16.mxu0 0
        %1961 = vmatmul.mubr.bf16.gmra.mrb[0].mxu0 %v1833
        %v1962 = vpop.f32.mrb[0].mxu0
        %v1963 = vadd.f32 0.0, %v1962
        %v1964 = vpop.f32.mrb[0].mxu0
        %v1965 = vpop.f32.mrb[0].mxu0
        %v1966 = vadd.f32 0.0, %v1965
        %v1967 = vpop.f32.mrb[0].mxu0
        %1968 = vmatprep.mubr.bf16.mxu0 0
        %1969 = vmatmul.mubr.bf16.gmra.mrb[0].mxu0 %v1836
        %v1970 = vpop.f32.mrb[0].mxu0
        %v1971 = vadd.f32 0.0, %v1970
        %v1972 = vpop.f32.mrb[0].mxu0
        %v1973 = vpop.f32.mrb[0].mxu0
        %v1974 = vadd.f32 0.0, %v1973
        %v1975 = vpop.f32.mrb[0].mxu0
        %1976 = vmatprep.mubr.bf16.mxu0 0
        %1977 = vmatmul.mubr.bf16.gmra.mrb[0].mxu0 %v1839
        %v1978 = vpop.f32.mrb[0].mxu0
        %v1979 = vadd.f32 0.0, %v1978
        %v1980 = vpop.f32.mrb[0].mxu0
        %v1981 = vpop.f32.mrb[0].mxu0
        %v1982 = vadd.f32 0.0, %v1981
        %v1983 = vpop.f32.mrb[0].mxu0
        %1984 = vmatprep.mubr.bf16.mxu0 0
        %1985 = vmatmul.mubr.bf16.gmra.mrb[0].mxu0 %v1842
        %v1986 = vpop.f32.mrb[0].mxu0
        %v1987 = vadd.f32 0.0, %v1986
        %v1988 = vpop.f32.mrb[0].mxu0
        %v1989 = vpop.f32.mrb[0].mxu0
        %v1990 = vadd.f32 0.0, %v1989
        %v1991 = vpop.f32.mrb[0].mxu0
        %1992 = vmatprep.mubr.bf16.mxu0 0
        %1993 = vmatmul.mubr.bf16.gmra.mrb[0].mxu0 %v1845
        %v1994 = vpop.f32.mrb[0].mxu0
        %v1995 = vadd.f32 0.0, %v1994
        %v1996 = vpop.f32.mrb[0].mxu0
        %v1997 = vpop.f32.mrb[0].mxu0
        %v1998 = vadd.f32 0.0, %v1997
        %v1999 = vpop.f32.mrb[0].mxu0
        %2000 = vmatprep.mubr.bf16.mxu0 0
        %2001 = vmatmul.mubr.bf16.gmra.mrb[0].mxu0 %v1848
        %v2002 = vpop.f32.mrb[0].mxu0
        %v2003 = vadd.f32 0.0, %v2002
        %v2004 = vpop.f32.mrb[0].mxu0
        %v2005 = vpop.f32.mrb[0].mxu0
        %v2006 = vadd.f32 0.0, %v2005
        %v2007 = vpop.f32.mrb[0].mxu0
        %2008 = vmatprep.mubr.bf16.mxu0 0
        %2009 = vmatmul.mubr.bf16.gmra.mrb[0].mxu0 %v1851
        %v2010 = vpop.f32.mrb[0].mxu0
        %v2011 = vadd.f32 0.0, %v2010
        %v2012 = vpop.f32.mrb[0].mxu0
        %v2013 = vpop.f32.mrb[0].mxu0
        %v2014 = vadd.f32 0.0, %v2013
        %v2015 = vpop.f32.mrb[0].mxu0
        %2016 = vdwg.mxu0
        %v2017 = vadd.f32 %v1658, %v1891
        %v2018 = vadd.f32 %v1659, %v1894
        %v2019 = vadd.f32 %v1660, %v1899
        %v2020 = vadd.f32 %v1661, %v1902
        %v2021 = vadd.f32 %v1662, %v1907
        %v2022 = vadd.f32 %v1663, %v1910
        %v2023 = vadd.f32 %v1664, %v1915
        %v2024 = vadd.f32 %v1665, %v1918
        %v2025 = vadd.f32 %v1666, %v1923
        %v2026 = vadd.f32 %v1667, %v1926
        %v2027 = vadd.f32 %v1668, %v1931
        %v2028 = vadd.f32 %v1669, %v1934
        %v2029 = vadd.f32 %v1670, %v1939
        %v2030 = vadd.f32 %v1671, %v1942
        %v2031 = vadd.f32 %v1672, %v1947
        %v2032 = vadd.f32 %v1673, %v1950
        %v2033 = vadd.f32 %v1674, %v1955
        %v2034 = vadd.f32 %v1675, %v1958
        %v2035 = vadd.f32 %v1676, %v1963
        %v2036 = vadd.f32 %v1677, %v1966
        %v2037 = vadd.f32 %v1678, %v1971
        %v2038 = vadd.f32 %v1679, %v1974
        %v2039 = vadd.f32 %v1680, %v1979
        %v2040 = vadd.f32 %v1681, %v1982
        %v2041 = vadd.f32 %v1682, %v1987
        %v2042 = vadd.f32 %v1683, %v1990
        %v2043 = vadd.f32 %v1684, %v1995
        %v2044 = vadd.f32 %v1685, %v1998
        %v2045 = vadd.f32 %v1686, %v2003
        %v2046 = vadd.f32 %v1687, %v2006
        %v2047 = vadd.f32 %v1688, %v2011
        %v2048 = vadd.f32 %v1689, %v2014
        %v2049 = vld [vmem:[%s1690] sm:$0xe]
        %v2050 = vld [vmem:[%s1690 + $0x4] sm:$0xf]
        %v2051 = vld [vmem:[%s1690 + $0x8] sm:$0x1]
        %v2052 = vld [vmem:[%s1690 + $0xc] sm:$0xe]
        %v2053 = vld [vmem:[%s1690 + $0x10] sm:$0xf]
        %v2054 = vld [vmem:[%s1690 + $0x14] sm:$0x1]
        %v2055 = vld [vmem:[%s1690 + $0x18] sm:$0xe]
        %v2056 = vld [vmem:[%s1690 + $0x1c] sm:$0xf]
        %v2057 = vld [vmem:[%s1690 + $0x20] sm:$0x1]
        %v2058 = vld [vmem:[%s1690 + $0x24] sm:$0xe]
        %v2059 = vld [vmem:[%s1690 + $0x28] sm:$0xf]
        %v2060 = vld [vmem:[%s1690 + $0x2c] sm:$0x1]
        %v2061 = vld [vmem:[%s1690 + $0x30] sm:$0xe]
        %v2062 = vld [vmem:[%s1690 + $0x34] sm:$0xf]
        %v2063 = vld [vmem:[%s1690 + $0x38] sm:$0x1]
        %v2064 = vld [vmem:[%s1690 + $0x3c] sm:$0xe]
        %v2065 = vld [vmem:[%s1690 + $0x40] sm:$0xf]
        %v2066 = vld [vmem:[%s1690 + $0x44] sm:$0x1]
        %v2067 = vld [vmem:[%s1690 + $0x48] sm:$0xe]
        %v2068 = vld [vmem:[%s1690 + $0x4c] sm:$0xf]
        %v2069 = vld [vmem:[%s1690 + $0x50] sm:$0x1]
        %v2070 = vld [vmem:[%s1690 + $0x54] sm:$0xe]
        %v2071 = vld [vmem:[%s1690 + $0x58] sm:$0xf]
        %v2072 = vld [vmem:[%s1690 + $0x5c] sm:$0x1]
        %v2073 = vld [vmem:[%s1690 + $0x60] sm:$0xe]
        %v2074 = vld [vmem:[%s1690 + $0x64] sm:$0xf]
        %v2075 = vld [vmem:[%s1690 + $0x68] sm:$0x1]
        %v2076 = vld [vmem:[%s1690 + $0x6c] sm:$0xe]
        %v2077 = vld [vmem:[%s1690 + $0x70] sm:$0xf]
        %v2078 = vld [vmem:[%s1690 + $0x74] sm:$0x1]
        %v2079 = vld [vmem:[%s1690 + $0x78] sm:$0xe]
        %v2080 = vld [vmem:[%s1690 + $0x7c] sm:$0xf]
        %v2081 = vld [vmem:[%s1690 + $0x80] sm:$0x1]
        %v2082 = vld [vmem:[%s1690 + $0x84] sm:$0xe]
        %v2083 = vld [vmem:[%s1690 + $0x88] sm:$0xf]
        %v2084 = vld [vmem:[%s1690 + $0x8c] sm:$0x1]
        %v2085 = vld [vmem:[%s1690 + $0x90] sm:$0xe]
        %v2086 = vld [vmem:[%s1690 + $0x94] sm:$0xf]
        %v2087 = vld [vmem:[%s1690 + $0x98] sm:$0x1]
        %v2088 = vld [vmem:[%s1690 + $0x9c] sm:$0xe]
        %v2089 = vld [vmem:[%s1690 + $0xa0] sm:$0xf]
        %v2090 = vld [vmem:[%s1690 + $0xa4] sm:$0x1]
        %v2091 = vld [vmem:[%s1690 + $0xa8] sm:$0xe]
        %v2092 = vld [vmem:[%s1690 + $0xac] sm:$0xf]
        %v2093 = vld [vmem:[%s1690 + $0xb0] sm:$0x1]
        %v2094 = vld [vmem:[%s1690 + $0xb4] sm:$0xe]
        %v2095 = vld [vmem:[%s1690 + $0xb8] sm:$0xf]
        %v2096 = vld [vmem:[%s1690 + $0xbc] sm:$0x1]
        %v2145 = vrot.slane %v2049, 5
        %v2146 = vrot.slane %v2145, 4
        %v2147 = vrot.slane %v2050, 5
        %v2148 = vsel %vm810, %v2146, %v2147
        %v2149 = vrot.slane %v2147, 4
        %v2150 = vrot.slane %v2051, 5
        %v2151 = vsel %vm810, %v2149, %v2150
        %v2152 = vrot.slane %v2052, 5
        %v2153 = vrot.slane %v2152, 4
        %v2154 = vrot.slane %v2053, 5
        %v2155 = vsel %vm810, %v2153, %v2154
        %v2156 = vrot.slane %v2154, 4
        %v2157 = vrot.slane %v2054, 5
        %v2158 = vsel %vm810, %v2156, %v2157
        %v2159 = vrot.slane %v2055, 5
        %v2160 = vrot.slane %v2159, 4
        %v2161 = vrot.slane %v2056, 5
        %v2162 = vsel %vm810, %v2160, %v2161
        %v2163 = vrot.slane %v2161, 4
        %v2164 = vrot.slane %v2057, 5
        %v2165 = vsel %vm810, %v2163, %v2164
        %v2166 = vrot.slane %v2058, 5
        %v2167 = vrot.slane %v2166, 4
        %v2168 = vrot.slane %v2059, 5
        %v2169 = vsel %vm810, %v2167, %v2168
        %v2170 = vrot.slane %v2168, 4
        %v2171 = vrot.slane %v2060, 5
        %v2172 = vsel %vm810, %v2170, %v2171
        %v2173 = vrot.slane %v2061, 5
        %v2174 = vrot.slane %v2173, 4
        %v2175 = vrot.slane %v2062, 5
        %v2176 = vsel %vm810, %v2174, %v2175
        %v2177 = vrot.slane %v2175, 4
        %v2178 = vrot.slane %v2063, 5
        %v2179 = vsel %vm810, %v2177, %v2178
        %v2180 = vrot.slane %v2064, 5
        %v2181 = vrot.slane %v2180, 4
        %v2182 = vrot.slane %v2065, 5
        %v2183 = vsel %vm810, %v2181, %v2182
        %v2184 = vrot.slane %v2182, 4
        %v2185 = vrot.slane %v2066, 5
        %v2186 = vsel %vm810, %v2184, %v2185
        %v2187 = vrot.slane %v2067, 5
        %v2188 = vrot.slane %v2187, 4
        %v2189 = vrot.slane %v2068, 5
        %v2190 = vsel %vm810, %v2188, %v2189
        %v2191 = vrot.slane %v2189, 4
        %v2192 = vrot.slane %v2069, 5
        %v2193 = vsel %vm810, %v2191, %v2192
        %v2194 = vrot.slane %v2070, 5
        %v2195 = vrot.slane %v2194, 4
        %v2196 = vrot.slane %v2071, 5
        %v2197 = vsel %vm810, %v2195, %v2196
        %v2198 = vrot.slane %v2196, 4
        %v2199 = vrot.slane %v2072, 5
        %v2200 = vsel %vm810, %v2198, %v2199
        %v2201 = vrot.slane %v2073, 5
        %v2202 = vrot.slane %v2201, 4
        %v2203 = vrot.slane %v2074, 5
        %v2204 = vsel %vm810, %v2202, %v2203
        %v2205 = vrot.slane %v2203, 4
        %v2206 = vrot.slane %v2075, 5
        %v2207 = vsel %vm810, %v2205, %v2206
        %v2208 = vrot.slane %v2076, 5
        %v2209 = vrot.slane %v2208, 4
        %v2210 = vrot.slane %v2077, 5
        %v2211 = vsel %vm810, %v2209, %v2210
        %v2212 = vrot.slane %v2210, 4
        %v2213 = vrot.slane %v2078, 5
        %v2214 = vsel %vm810, %v2212, %v2213
        %v2215 = vrot.slane %v2079, 5
        %v2216 = vrot.slane %v2215, 4
        %v2217 = vrot.slane %v2080, 5
        %v2218 = vsel %vm810, %v2216, %v2217
        %v2219 = vrot.slane %v2217, 4
        %v2220 = vrot.slane %v2081, 5
        %v2221 = vsel %vm810, %v2219, %v2220
        %v2222 = vrot.slane %v2082, 5
        %v2223 = vrot.slane %v2222, 4
        %v2224 = vrot.slane %v2083, 5
        %v2225 = vsel %vm810, %v2223, %v2224
        %v2226 = vrot.slane %v2224, 4
        %v2227 = vrot.slane %v2084, 5
        %v2228 = vsel %vm810, %v2226, %v2227
        %v2229 = vrot.slane %v2085, 5
        %v2230 = vrot.slane %v2229, 4
        %v2231 = vrot.slane %v2086, 5
        %v2232 = vsel %vm810, %v2230, %v2231
        %v2233 = vrot.slane %v2231, 4
        %v2234 = vrot.slane %v2087, 5
        %v2235 = vsel %vm810, %v2233, %v2234
        %v2236 = vrot.slane %v2088, 5
        %v2237 = vrot.slane %v2236, 4
        %v2238 = vrot.slane %v2089, 5
        %v2239 = vsel %vm810, %v2237, %v2238
        %v2240 = vrot.slane %v2238, 4
        %v2241 = vrot.slane %v2090, 5
        %v2242 = vsel %vm810, %v2240, %v2241
        %v2243 = vrot.slane %v2091, 5
        %v2244 = vrot.slane %v2243, 4
        %v2245 = vrot.slane %v2092, 5
        %v2246 = vsel %vm810, %v2244, %v2245
        %v2247 = vrot.slane %v2245, 4
        %v2248 = vrot.slane %v2093, 5
        %v2249 = vsel %vm810, %v2247, %v2248
        %v2250 = vrot.slane %v2094, 5
        %v2251 = vrot.slane %v2250, 4
        %v2252 = vrot.slane %v2095, 5
        %v2253 = vsel %vm810, %v2251, %v2252
        %v2254 = vrot.slane %v2252, 4
        %v2255 = vrot.slane %v2096, 5
        %v2256 = vsel %vm810, %v2254, %v2255
        %s2257 = scalar_lea.vmem %s277, 8
        %v2258 = vld [vmem:[%s2257] sm:$0x3]
        %v2259 = vunpack.c.l.b16 %v2148
        %v2260 = vunpack.c.l.b16 %v2151
        %v2261 = vunpack.c.l.b16 %v2155
        %v2262 = vunpack.c.l.b16 %v2158
        %v2263 = vunpack.c.l.b16 %v2162
        %v2264 = vunpack.c.l.b16 %v2165
        %v2265 = vunpack.c.l.b16 %v2169
        %v2266 = vunpack.c.l.b16 %v2172
        %v2267 = vunpack.c.l.b16 %v2176
        %v2268 = vunpack.c.l.b16 %v2179
        %v2269 = vunpack.c.l.b16 %v2183
        %v2270 = vunpack.c.l.b16 %v2186
        %v2271 = vunpack.c.l.b16 %v2190
        %v2272 = vunpack.c.l.b16 %v2193
        %v2273 = vunpack.c.l.b16 %v2197
        %v2274 = vunpack.c.l.b16 %v2200
        %v2275 = vunpack.c.l.b16 %v2204
        %v2276 = vunpack.c.l.b16 %v2207
        %v2277 = vunpack.c.l.b16 %v2211
        %v2278 = vunpack.c.l.b16 %v2214
        %v2279 = vunpack.c.l.b16 %v2218
        %v2280 = vunpack.c.l.b16 %v2221
        %v2281 = vunpack.c.l.b16 %v2225
        %v2282 = vunpack.c.l.b16 %v2228
        %v2283 = vunpack.c.l.b16 %v2232
        %v2284 = vunpack.c.l.b16 %v2235
        %v2285 = vunpack.c.l.b16 %v2239
        %v2286 = vunpack.c.l.b16 %v2242
        %v2287 = vunpack.c.l.b16 %v2246
        %v2288 = vunpack.c.l.b16 %v2249
        %v2289 = vunpack.c.l.b16 %v2253
        %v2290 = vunpack.c.l.b16 %v2256
        %v2291 = vpack.c.b16 %v2260, %v2259
        %v2292 = vpack.c.b16 %v2262, %v2261
        %v2293 = vpack.c.b16 %v2264, %v2263
        %v2294 = vpack.c.b16 %v2266, %v2265
        %v2295 = vpack.c.b16 %v2268, %v2267
        %v2296 = vpack.c.b16 %v2270, %v2269
        %v2297 = vpack.c.b16 %v2272, %v2271
        %v2298 = vpack.c.b16 %v2274, %v2273
        %v2299 = vpack.c.b16 %v2276, %v2275
        %v2300 = vpack.c.b16 %v2278, %v2277
        %v2301 = vpack.c.b16 %v2280, %v2279
        %v2302 = vpack.c.b16 %v2282, %v2281
        %v2303 = vpack.c.b16 %v2284, %v2283
        %v2304 = vpack.c.b16 %v2286, %v2285
        %v2305 = vpack.c.b16 %v2288, %v2287
        %v2306 = vpack.c.b16 %v2290, %v2289
        %v2308 = vsel %vm466, %v2291, 0
        %v2311 = vsel %vm466, %v2292, 0
        %v2314 = vsel %vm466, %v2293, 0
        %v2317 = vsel %vm466, %v2294, 0
        %v2320 = vsel %vm466, %v2295, 0
        %v2323 = vsel %vm466, %v2296, 0
        %v2326 = vsel %vm466, %v2297, 0
        %v2329 = vsel %vm466, %v2298, 0
        %v2332 = vsel %vm466, %v2299, 0
        %v2335 = vsel %vm466, %v2300, 0
        %v2338 = vsel %vm466, %v2301, 0
        %v2341 = vsel %vm466, %v2302, 0
        %v2344 = vsel %vm466, %v2303, 0
        %v2347 = vsel %vm466, %v2304, 0
        %v2350 = vsel %vm466, %v2305, 0
        %v2353 = vsel %vm466, %v2306, 0
        %v2356 = vsel %vm515, %v2258, 0
        %2358 = vmatprep.subr.bf16.mxu0 0
        %2359 = vmatpush1.bf16.msra.mxu0 %v2356
        %2360 = vmatprep.subr.bf16.mxu0 0
        %2361 = vmatpush1.bf16.msra.mxu0 0
        %2362 = vmatprep.subr.bf16.mxu0 0
        %2363 = vmatpush1.bf16.msra.mxu0 0
        %2364 = vmatprep.subr.bf16.mxu0 0
        %2365 = vmatpush1.bf16.msra.mxu0 0
        %2366 = vmatprep.subr.bf16.mxu0 0
        %2367 = vmatpush1.bf16.msra.mxu0 0
        %2368 = vmatprep.subr.bf16.mxu0 0
        %2369 = vmatpush1.bf16.msra.mxu0 0
        %2370 = vmatprep.subr.bf16.mxu0 0
        %2371 = vmatpush1.bf16.msra.mxu0 0
        %2372 = vmatprep.subr.bf16.mxu0 0
        %2373 = vmatpush1.bf16.msra.mxu0 0
        %2374 = vmatprep.subr.bf16.mxu0 0
        %2375 = vmatpush1.bf16.msra.mxu0 0
        %2376 = vmatprep.subr.bf16.mxu0 0
        %2377 = vmatpush1.bf16.msra.mxu0 0
        %2378 = vmatprep.subr.bf16.mxu0 0
        %2379 = vmatpush1.bf16.msra.mxu0 0
        %2380 = vmatprep.subr.bf16.mxu0 0
        %2381 = vmatpush1.bf16.msra.mxu0 0
        %2382 = vmatprep.subr.bf16.mxu0 0
        %2383 = vmatpush1.bf16.msra.mxu0 0
        %2384 = vmatprep.subr.bf16.mxu0 0
        %2385 = vmatpush1.bf16.msra.mxu0 0
        %2386 = vmatprep.subr.bf16.mxu0 0
        %2387 = vmatpush1.bf16.msra.mxu0 0
        %2388 = vmatprep.subr.bf16.mxu0 0
        %2389 = vmatpush1.bf16.msra.mxu0 0
        %2390 = vmatprep.mubr.bf16.mxu0 0
        %2391 = vmatmul.mubr.bf16.gmra.mrb[0].mxu0 %v2308
        %v2392 = vpop.f32.mrb[0].mxu0
        %v2393 = vadd.f32 0.0, %v2392
        %v2394 = vpop.f32.mrb[0].mxu0
        %v2395 = vpop.f32.mrb[0].mxu0
        %v2396 = vadd.f32 0.0, %v2395
        %v2397 = vpop.f32.mrb[0].mxu0
        %2398 = vmatprep.mubr.bf16.mxu0 0
        %2399 = vmatmul.mubr.bf16.gmra.mrb[0].mxu0 %v2311
        %v2400 = vpop.f32.mrb[0].mxu0
        %v2401 = vadd.f32 0.0, %v2400
        %v2402 = vpop.f32.mrb[0].mxu0
        %v2403 = vpop.f32.mrb[0].mxu0
        %v2404 = vadd.f32 0.0, %v2403
        %v2405 = vpop.f32.mrb[0].mxu0
        %2406 = vmatprep.mubr.bf16.mxu0 0
        %2407 = vmatmul.mubr.bf16.gmra.mrb[0].mxu0 %v2314
        %v2408 = vpop.f32.mrb[0].mxu0
        %v2409 = vadd.f32 0.0, %v2408
        %v2410 = vpop.f32.mrb[0].mxu0
        %v2411 = vpop.f32.mrb[0].mxu0
        %v2412 = vadd.f32 0.0, %v2411
        %v2413 = vpop.f32.mrb[0].mxu0
        %2414 = vmatprep.mubr.bf16.mxu0 0
        %2415 = vmatmul.mubr.bf16.gmra.mrb[0].mxu0 %v2317
        %v2416 = vpop.f32.mrb[0].mxu0
        %v2417 = vadd.f32 0.0, %v2416
        %v2418 = vpop.f32.mrb[0].mxu0
        %v2419 = vpop.f32.mrb[0].mxu0
        %v2420 = vadd.f32 0.0, %v2419
        %v2421 = vpop.f32.mrb[0].mxu0
        %2422 = vmatprep.mubr.bf16.mxu0 0
        %2423 = vmatmul.mubr.bf16.gmra.mrb[0].mxu0 %v2320
        %v2424 = vpop.f32.mrb[0].mxu0
        %v2425 = vadd.f32 0.0, %v2424
        %v2426 = vpop.f32.mrb[0].mxu0
        %v2427 = vpop.f32.mrb[0].mxu0
        %v2428 = vadd.f32 0.0, %v2427
        %v2429 = vpop.f32.mrb[0].mxu0
        %2430 = vmatprep.mubr.bf16.mxu0 0
        %2431 = vmatmul.mubr.bf16.gmra.mrb[0].mxu0 %v2323
        %v2432 = vpop.f32.mrb[0].mxu0
        %v2433 = vadd.f32 0.0, %v2432
        %v2434 = vpop.f32.mrb[0].mxu0
        %v2435 = vpop.f32.mrb[0].mxu0
        %v2436 = vadd.f32 0.0, %v2435
        %v2437 = vpop.f32.mrb[0].mxu0
        %2438 = vmatprep.mubr.bf16.mxu0 0
        %2439 = vmatmul.mubr.bf16.gmra.mrb[0].mxu0 %v2326
        %v2440 = vpop.f32.mrb[0].mxu0
        %v2441 = vadd.f32 0.0, %v2440
        %v2442 = vpop.f32.mrb[0].mxu0
        %v2443 = vpop.f32.mrb[0].mxu0
        %v2444 = vadd.f32 0.0, %v2443
        %v2445 = vpop.f32.mrb[0].mxu0
        %2446 = vmatprep.mubr.bf16.mxu0 0
        %2447 = vmatmul.mubr.bf16.gmra.mrb[0].mxu0 %v2329
        %v2448 = vpop.f32.mrb[0].mxu0
        %v2449 = vadd.f32 0.0, %v2448
        %v2450 = vpop.f32.mrb[0].mxu0
        %v2451 = vpop.f32.mrb[0].mxu0
        %v2452 = vadd.f32 0.0, %v2451
        %v2453 = vpop.f32.mrb[0].mxu0
        %2454 = vmatprep.mubr.bf16.mxu0 0
        %2455 = vmatmul.mubr.bf16.gmra.mrb[0].mxu0 %v2332
        %v2456 = vpop.f32.mrb[0].mxu0
        %v2457 = vadd.f32 0.0, %v2456
        %v2458 = vpop.f32.mrb[0].mxu0
        %v2459 = vpop.f32.mrb[0].mxu0
        %v2460 = vadd.f32 0.0, %v2459
        %v2461 = vpop.f32.mrb[0].mxu0
        %2462 = vmatprep.mubr.bf16.mxu0 0
        %2463 = vmatmul.mubr.bf16.gmra.mrb[0].mxu0 %v2335
        %v2464 = vpop.f32.mrb[0].mxu0
        %v2465 = vadd.f32 0.0, %v2464
        %v2466 = vpop.f32.mrb[0].mxu0
        %v2467 = vpop.f32.mrb[0].mxu0
        %v2468 = vadd.f32 0.0, %v2467
        %v2469 = vpop.f32.mrb[0].mxu0
        %2470 = vmatprep.mubr.bf16.mxu0 0
        %2471 = vmatmul.mubr.bf16.gmra.mrb[0].mxu0 %v2338
        %v2472 = vpop.f32.mrb[0].mxu0
        %v2473 = vadd.f32 0.0, %v2472
        %v2474 = vpop.f32.mrb[0].mxu0
        %v2475 = vpop.f32.mrb[0].mxu0
        %v2476 = vadd.f32 0.0, %v2475
        %v2477 = vpop.f32.mrb[0].mxu0
        %2478 = vmatprep.mubr.bf16.mxu0 0
        %2479 = vmatmul.mubr.bf16.gmra.mrb[0].mxu0 %v2341
        %v2480 = vpop.f32.mrb[0].mxu0
        %v2481 = vadd.f32 0.0, %v2480
        %v2482 = vpop.f32.mrb[0].mxu0
        %v2483 = vpop.f32.mrb[0].mxu0
        %v2484 = vadd.f32 0.0, %v2483
        %v2485 = vpop.f32.mrb[0].mxu0
        %2486 = vmatprep.mubr.bf16.mxu0 0
        %2487 = vmatmul.mubr.bf16.gmra.mrb[0].mxu0 %v2344
        %v2488 = vpop.f32.mrb[0].mxu0
        %v2489 = vadd.f32 0.0, %v2488
        %v2490 = vpop.f32.mrb[0].mxu0
        %v2491 = vpop.f32.mrb[0].mxu0
        %v2492 = vadd.f32 0.0, %v2491
        %v2493 = vpop.f32.mrb[0].mxu0
        %2494 = vmatprep.mubr.bf16.mxu0 0
        %2495 = vmatmul.mubr.bf16.gmra.mrb[0].mxu0 %v2347
        %v2496 = vpop.f32.mrb[0].mxu0
        %v2497 = vadd.f32 0.0, %v2496
        %v2498 = vpop.f32.mrb[0].mxu0
        %v2499 = vpop.f32.mrb[0].mxu0
        %v2500 = vadd.f32 0.0, %v2499
        %v2501 = vpop.f32.mrb[0].mxu0
        %2502 = vmatprep.mubr.bf16.mxu0 0
        %2503 = vmatmul.mubr.bf16.gmra.mrb[0].mxu0 %v2350
        %v2504 = vpop.f32.mrb[0].mxu0
        %v2505 = vadd.f32 0.0, %v2504
        %v2506 = vpop.f32.mrb[0].mxu0
        %v2507 = vpop.f32.mrb[0].mxu0
        %v2508 = vadd.f32 0.0, %v2507
        %v2509 = vpop.f32.mrb[0].mxu0
        %2510 = vmatprep.mubr.bf16.mxu0 0
        %2511 = vmatmul.mubr.bf16.gmra.mrb[0].mxu0 %v2353
        %v2512 = vpop.f32.mrb[0].mxu0
        %v2513 = vadd.f32 0.0, %v2512
        %v2514 = vpop.f32.mrb[0].mxu0
        %v2515 = vpop.f32.mrb[0].mxu0
        %v2516 = vadd.f32 0.0, %v2515
        %v2517 = vpop.f32.mrb[0].mxu0
        %2518 = vdwg.mxu0
        %v2519 = vadd.f32 %v2017, %v2393
        %v2520 = vadd.f32 %v2018, %v2396
        %v2521 = vadd.f32 %v2019, %v2401
        %v2522 = vadd.f32 %v2020, %v2404
        %v2523 = vadd.f32 %v2021, %v2409
        %v2524 = vadd.f32 %v2022, %v2412
        %v2525 = vadd.f32 %v2023, %v2417
        %v2526 = vadd.f32 %v2024, %v2420
        %v2527 = vadd.f32 %v2025, %v2425
        %v2528 = vadd.f32 %v2026, %v2428
        %v2529 = vadd.f32 %v2027, %v2433
        %v2530 = vadd.f32 %v2028, %v2436
        %v2531 = vadd.f32 %v2029, %v2441
        %v2532 = vadd.f32 %v2030, %v2444
        %v2533 = vadd.f32 %v2031, %v2449
        %v2534 = vadd.f32 %v2032, %v2452
        %v2535 = vadd.f32 %v2033, %v2457
        %v2536 = vadd.f32 %v2034, %v2460
        %v2537 = vadd.f32 %v2035, %v2465
        %v2538 = vadd.f32 %v2036, %v2468
        %v2539 = vadd.f32 %v2037, %v2473
        %v2540 = vadd.f32 %v2038, %v2476
        %v2541 = vadd.f32 %v2039, %v2481
        %v2542 = vadd.f32 %v2040, %v2484
        %v2543 = vadd.f32 %v2041, %v2489
        %v2544 = vadd.f32 %v2042, %v2492
        %v2545 = vadd.f32 %v2043, %v2497
        %v2546 = vadd.f32 %v2044, %v2500
        %v2547 = vadd.f32 %v2045, %v2505
        %v2548 = vadd.f32 %v2046, %v2508
        %v2549 = vadd.f32 %v2047, %v2513
        %v2550 = vadd.f32 %v2048, %v2516
        %v2551 = vld [vmem:[%s1690] sm:$0xc]
        %v2552 = vld [vmem:[%s1690 + $0x8] sm:$0x3]
        %v2553 = vld [vmem:[%s1690 + $0xc] sm:$0xc]
        %v2554 = vld [vmem:[%s1690 + $0x14] sm:$0x3]
        %v2555 = vld [vmem:[%s1690 + $0x18] sm:$0xc]
        %v2556 = vld [vmem:[%s1690 + $0x20] sm:$0x3]
        %v2557 = vld [vmem:[%s1690 + $0x24] sm:$0xc]
        %v2558 = vld [vmem:[%s1690 + $0x2c] sm:$0x3]
        %v2559 = vld [vmem:[%s1690 + $0x30] sm:$0xc]
        %v2560 = vld [vmem:[%s1690 + $0x38] sm:$0x3]
        %v2561 = vld [vmem:[%s1690 + $0x3c] sm:$0xc]
        %v2562 = vld [vmem:[%s1690 + $0x44] sm:$0x3]
        %v2563 = vld [vmem:[%s1690 + $0x48] sm:$0xc]
        %v2564 = vld [vmem:[%s1690 + $0x50] sm:$0x3]
        %v2565 = vld [vmem:[%s1690 + $0x54] sm:$0xc]
        %v2566 = vld [vmem:[%s1690 + $0x5c] sm:$0x3]
        %v2567 = vld [vmem:[%s1690 + $0x60] sm:$0xc]
        %v2568 = vld [vmem:[%s1690 + $0x68] sm:$0x3]
        %v2569 = vld [vmem:[%s1690 + $0x6c] sm:$0xc]
        %v2570 = vld [vmem:[%s1690 + $0x74] sm:$0x3]
        %v2571 = vld [vmem:[%s1690 + $0x78] sm:$0xc]
        %v2572 = vld [vmem:[%s1690 + $0x80] sm:$0x3]
        %v2573 = vld [vmem:[%s1690 + $0x84] sm:$0xc]
        %v2574 = vld [vmem:[%s1690 + $0x8c] sm:$0x3]
        %v2575 = vld [vmem:[%s1690 + $0x90] sm:$0xc]
        %v2576 = vld [vmem:[%s1690 + $0x98] sm:$0x3]
        %v2577 = vld [vmem:[%s1690 + $0x9c] sm:$0xc]
        %v2578 = vld [vmem:[%s1690 + $0xa4] sm:$0x3]
        %v2579 = vld [vmem:[%s1690 + $0xa8] sm:$0xc]
        %v2580 = vld [vmem:[%s1690 + $0xb0] sm:$0x3]
        %v2581 = vld [vmem:[%s1690 + $0xb4] sm:$0xc]
        %v2582 = vld [vmem:[%s1690 + $0xbc] sm:$0x3]
        %v2615 = vrot.slane %v2551, 6
        %v2616 = vrot.slane %v2615, 4
        %v2617 = vrot.slane %v2050, 6
        %v2618 = vsel %vm1283, %v2616, %v2617
        %v2619 = vrot.slane %v2617, 4
        %v2620 = vrot.slane %v2552, 6
        %v2621 = vsel %vm1283, %v2619, %v2620
        %v2622 = vrot.slane %v2553, 6
        %v2623 = vrot.slane %v2622, 4
        %v2624 = vrot.slane %v2053, 6
        %v2625 = vsel %vm1283, %v2623, %v2624
        %v2626 = vrot.slane %v2624, 4
        %v2627 = vrot.slane %v2554, 6
        %v2628 = vsel %vm1283, %v2626, %v2627
        %v2629 = vrot.slane %v2555, 6
        %v2630 = vrot.slane %v2629, 4
        %v2631 = vrot.slane %v2056, 6
        %v2632 = vsel %vm1283, %v2630, %v2631
        %v2633 = vrot.slane %v2631, 4
        %v2634 = vrot.slane %v2556, 6
        %v2635 = vsel %vm1283, %v2633, %v2634
        %v2636 = vrot.slane %v2557, 6
        %v2637 = vrot.slane %v2636, 4
        %v2638 = vrot.slane %v2059, 6
        %v2639 = vsel %vm1283, %v2637, %v2638
        %v2640 = vrot.slane %v2638, 4
        %v2641 = vrot.slane %v2558, 6
        %v2642 = vsel %vm1283, %v2640, %v2641
        %v2643 = vrot.slane %v2559, 6
        %v2644 = vrot.slane %v2643, 4
        %v2645 = vrot.slane %v2062, 6
        %v2646 = vsel %vm1283, %v2644, %v2645
        %v2647 = vrot.slane %v2645, 4
        %v2648 = vrot.slane %v2560, 6
        %v2649 = vsel %vm1283, %v2647, %v2648
        %v2650 = vrot.slane %v2561, 6
        %v2651 = vrot.slane %v2650, 4
        %v2652 = vrot.slane %v2065, 6
        %v2653 = vsel %vm1283, %v2651, %v2652
        %v2654 = vrot.slane %v2652, 4
        %v2655 = vrot.slane %v2562, 6
        %v2656 = vsel %vm1283, %v2654, %v2655
        %v2657 = vrot.slane %v2563, 6
        %v2658 = vrot.slane %v2657, 4
        %v2659 = vrot.slane %v2068, 6
        %v2660 = vsel %vm1283, %v2658, %v2659
        %v2661 = vrot.slane %v2659, 4
        %v2662 = vrot.slane %v2564, 6
        %v2663 = vsel %vm1283, %v2661, %v2662
        %v2664 = vrot.slane %v2565, 6
        %v2665 = vrot.slane %v2664, 4
        %v2666 = vrot.slane %v2071, 6
        %v2667 = vsel %vm1283, %v2665, %v2666
        %v2668 = vrot.slane %v2666, 4
        %v2669 = vrot.slane %v2566, 6
        %v2670 = vsel %vm1283, %v2668, %v2669
        %v2671 = vrot.slane %v2567, 6
        %v2672 = vrot.slane %v2671, 4
        %v2673 = vrot.slane %v2074, 6
        %v2674 = vsel %vm1283, %v2672, %v2673
        %v2675 = vrot.slane %v2673, 4
        %v2676 = vrot.slane %v2568, 6
        %v2677 = vsel %vm1283, %v2675, %v2676
        %v2678 = vrot.slane %v2569, 6
        %v2679 = vrot.slane %v2678, 4
        %v2680 = vrot.slane %v2077, 6
        %v2681 = vsel %vm1283, %v2679, %v2680
        %v2682 = vrot.slane %v2680, 4
        %v2683 = vrot.slane %v2570, 6
        %v2684 = vsel %vm1283, %v2682, %v2683
        %v2685 = vrot.slane %v2571, 6
        %v2686 = vrot.slane %v2685, 4
        %v2687 = vrot.slane %v2080, 6
        %v2688 = vsel %vm1283, %v2686, %v2687
        %v2689 = vrot.slane %v2687, 4
        %v2690 = vrot.slane %v2572, 6
        %v2691 = vsel %vm1283, %v2689, %v2690
        %v2692 = vrot.slane %v2573, 6
        %v2693 = vrot.slane %v2692, 4
        %v2694 = vrot.slane %v2083, 6
        %v2695 = vsel %vm1283, %v2693, %v2694
        %v2696 = vrot.slane %v2694, 4
        %v2697 = vrot.slane %v2574, 6
        %v2698 = vsel %vm1283, %v2696, %v2697
        %v2699 = vrot.slane %v2575, 6
        %v2700 = vrot.slane %v2699, 4
        %v2701 = vrot.slane %v2086, 6
        %v2702 = vsel %vm1283, %v2700, %v2701
        %v2703 = vrot.slane %v2701, 4
        %v2704 = vrot.slane %v2576, 6
        %v2705 = vsel %vm1283, %v2703, %v2704
        %v2706 = vrot.slane %v2577, 6
        %v2707 = vrot.slane %v2706, 4
        %v2708 = vrot.slane %v2089, 6
        %v2709 = vsel %vm1283, %v2707, %v2708
        %v2710 = vrot.slane %v2708, 4
        %v2711 = vrot.slane %v2578, 6
        %v2712 = vsel %vm1283, %v2710, %v2711
        %v2713 = vrot.slane %v2579, 6
        %v2714 = vrot.slane %v2713, 4
        %v2715 = vrot.slane %v2092, 6
        %v2716 = vsel %vm1283, %v2714, %v2715
        %v2717 = vrot.slane %v2715, 4
        %v2718 = vrot.slane %v2580, 6
        %v2719 = vsel %vm1283, %v2717, %v2718
        %v2720 = vrot.slane %v2581, 6
        %v2721 = vrot.slane %v2720, 4
        %v2722 = vrot.slane %v2095, 6
        %v2723 = vsel %vm1283, %v2721, %v2722
        %v2724 = vrot.slane %v2722, 4
        %v2725 = vrot.slane %v2582, 6
        %v2726 = vsel %vm1283, %v2724, %v2725
        %s2727 = scalar_lea.vmem %s277, 10
        %v2728 = vld [vmem:[%s2727] sm:$0x3]
        %v2729 = vunpack.c.l.b16 %v2618
        %v2730 = vunpack.c.l.b16 %v2621
        %v2731 = vunpack.c.l.b16 %v2625
        %v2732 = vunpack.c.l.b16 %v2628
        %v2733 = vunpack.c.l.b16 %v2632
        %v2734 = vunpack.c.l.b16 %v2635
        %v2735 = vunpack.c.l.b16 %v2639
        %v2736 = vunpack.c.l.b16 %v2642
        %v2737 = vunpack.c.l.b16 %v2646
        %v2738 = vunpack.c.l.b16 %v2649
        %v2739 = vunpack.c.l.b16 %v2653
        %v2740 = vunpack.c.l.b16 %v2656
        %v2741 = vunpack.c.l.b16 %v2660
        %v2742 = vunpack.c.l.b16 %v2663
        %v2743 = vunpack.c.l.b16 %v2667
        %v2744 = vunpack.c.l.b16 %v2670
        %v2745 = vunpack.c.l.b16 %v2674
        %v2746 = vunpack.c.l.b16 %v2677
        %v2747 = vunpack.c.l.b16 %v2681
        %v2748 = vunpack.c.l.b16 %v2684
        %v2749 = vunpack.c.l.b16 %v2688
        %v2750 = vunpack.c.l.b16 %v2691
        %v2751 = vunpack.c.l.b16 %v2695
        %v2752 = vunpack.c.l.b16 %v2698
        %v2753 = vunpack.c.l.b16 %v2702
        %v2754 = vunpack.c.l.b16 %v2705
        %v2755 = vunpack.c.l.b16 %v2709
        %v2756 = vunpack.c.l.b16 %v2712
        %v2757 = vunpack.c.l.b16 %v2716
        %v2758 = vunpack.c.l.b16 %v2719
        %v2759 = vunpack.c.l.b16 %v2723
        %v2760 = vunpack.c.l.b16 %v2726
        %v2761 = vpack.c.b16 %v2730, %v2729
        %v2762 = vpack.c.b16 %v2732, %v2731
        %v2763 = vpack.c.b16 %v2734, %v2733
        %v2764 = vpack.c.b16 %v2736, %v2735
        %v2765 = vpack.c.b16 %v2738, %v2737
        %v2766 = vpack.c.b16 %v2740, %v2739
        %v2767 = vpack.c.b16 %v2742, %v2741
        %v2768 = vpack.c.b16 %v2744, %v2743
        %v2769 = vpack.c.b16 %v2746, %v2745
        %v2770 = vpack.c.b16 %v2748, %v2747
        %v2771 = vpack.c.b16 %v2750, %v2749
        %v2772 = vpack.c.b16 %v2752, %v2751
        %v2773 = vpack.c.b16 %v2754, %v2753
        %v2774 = vpack.c.b16 %v2756, %v2755
        %v2775 = vpack.c.b16 %v2758, %v2757
        %v2776 = vpack.c.b16 %v2760, %v2759
        %v2778 = vsel %vm466, %v2761, 0
        %v2781 = vsel %vm466, %v2762, 0
        %v2784 = vsel %vm466, %v2763, 0
        %v2787 = vsel %vm466, %v2764, 0
        %v2790 = vsel %vm466, %v2765, 0
        %v2793 = vsel %vm466, %v2766, 0
        %v2796 = vsel %vm466, %v2767, 0
        %v2799 = vsel %vm466, %v2768, 0
        %v2802 = vsel %vm466, %v2769, 0
        %v2805 = vsel %vm466, %v2770, 0
        %v2808 = vsel %vm466, %v2771, 0
        %v2811 = vsel %vm466, %v2772, 0
        %v2814 = vsel %vm466, %v2773, 0
        %v2817 = vsel %vm466, %v2774, 0
        %v2820 = vsel %vm466, %v2775, 0
        %v2823 = vsel %vm466, %v2776, 0
        %v2826 = vsel %vm515, %v2728, 0
        %2828 = vmatprep.subr.bf16.mxu0 0
        %2829 = vmatpush1.bf16.msra.mxu0 %v2826
        %2830 = vmatprep.subr.bf16.mxu0 0
        %2831 = vmatpush1.bf16.msra.mxu0 0
        %2832 = vmatprep.subr.bf16.mxu0 0
        %2833 = vmatpush1.bf16.msra.mxu0 0
        %2834 = vmatprep.subr.bf16.mxu0 0
        %2835 = vmatpush1.bf16.msra.mxu0 0
        %2836 = vmatprep.subr.bf16.mxu0 0
        %2837 = vmatpush1.bf16.msra.mxu0 0
        %2838 = vmatprep.subr.bf16.mxu0 0
        %2839 = vmatpush1.bf16.msra.mxu0 0
        %2840 = vmatprep.subr.bf16.mxu0 0
        %2841 = vmatpush1.bf16.msra.mxu0 0
        %2842 = vmatprep.subr.bf16.mxu0 0
        %2843 = vmatpush1.bf16.msra.mxu0 0
        %2844 = vmatprep.subr.bf16.mxu0 0
        %2845 = vmatpush1.bf16.msra.mxu0 0
        %2846 = vmatprep.subr.bf16.mxu0 0
        %2847 = vmatpush1.bf16.msra.mxu0 0
        %2848 = vmatprep.subr.bf16.mxu0 0
        %2849 = vmatpush1.bf16.msra.mxu0 0
        %2850 = vmatprep.subr.bf16.mxu0 0
        %2851 = vmatpush1.bf16.msra.mxu0 0
        %2852 = vmatprep.subr.bf16.mxu0 0
        %2853 = vmatpush1.bf16.msra.mxu0 0
        %2854 = vmatprep.subr.bf16.mxu0 0
        %2855 = vmatpush1.bf16.msra.mxu0 0
        %2856 = vmatprep.subr.bf16.mxu0 0
        %2857 = vmatpush1.bf16.msra.mxu0 0
        %2858 = vmatprep.subr.bf16.mxu0 0
        %2859 = vmatpush1.bf16.msra.mxu0 0
        %2860 = vmatprep.mubr.bf16.mxu0 0
        %2861 = vmatmul.mubr.bf16.gmra.mrb[0].mxu0 %v2778
        %v2862 = vpop.f32.mrb[0].mxu0
        %v2863 = vadd.f32 0.0, %v2862
        %v2864 = vpop.f32.mrb[0].mxu0
        %v2865 = vpop.f32.mrb[0].mxu0
        %v2866 = vadd.f32 0.0, %v2865
        %v2867 = vpop.f32.mrb[0].mxu0
        %2868 = vmatprep.mubr.bf16.mxu0 0
        %2869 = vmatmul.mubr.bf16.gmra.mrb[0].mxu0 %v2781
        %v2870 = vpop.f32.mrb[0].mxu0
        %v2871 = vadd.f32 0.0, %v2870
        %v2872 = vpop.f32.mrb[0].mxu0
        %v2873 = vpop.f32.mrb[0].mxu0
        %v2874 = vadd.f32 0.0, %v2873
        %v2875 = vpop.f32.mrb[0].mxu0
        %2876 = vmatprep.mubr.bf16.mxu0 0
        %2877 = vmatmul.mubr.bf16.gmra.mrb[0].mxu0 %v2784
        %v2878 = vpop.f32.mrb[0].mxu0
        %v2879 = vadd.f32 0.0, %v2878
        %v2880 = vpop.f32.mrb[0].mxu0
        %v2881 = vpop.f32.mrb[0].mxu0
        %v2882 = vadd.f32 0.0, %v2881
        %v2883 = vpop.f32.mrb[0].mxu0
        %2884 = vmatprep.mubr.bf16.mxu0 0
        %2885 = vmatmul.mubr.bf16.gmra.mrb[0].mxu0 %v2787
        %v2886 = vpop.f32.mrb[0].mxu0
        %v2887 = vadd.f32 0.0, %v2886
        %v2888 = vpop.f32.mrb[0].mxu0
        %v2889 = vpop.f32.mrb[0].mxu0
        %v2890 = vadd.f32 0.0, %v2889
        %v2891 = vpop.f32.mrb[0].mxu0
        %2892 = vmatprep.mubr.bf16.mxu0 0
        %2893 = vmatmul.mubr.bf16.gmra.mrb[0].mxu0 %v2790
        %v2894 = vpop.f32.mrb[0].mxu0
        %v2895 = vadd.f32 0.0, %v2894
        %v2896 = vpop.f32.mrb[0].mxu0
        %v2897 = vpop.f32.mrb[0].mxu0
        %v2898 = vadd.f32 0.0, %v2897
        %v2899 = vpop.f32.mrb[0].mxu0
        %2900 = vmatprep.mubr.bf16.mxu0 0
        %2901 = vmatmul.mubr.bf16.gmra.mrb[0].mxu0 %v2793
        %v2902 = vpop.f32.mrb[0].mxu0
        %v2903 = vadd.f32 0.0, %v2902
        %v2904 = vpop.f32.mrb[0].mxu0
        %v2905 = vpop.f32.mrb[0].mxu0
        %v2906 = vadd.f32 0.0, %v2905
        %v2907 = vpop.f32.mrb[0].mxu0
        %2908 = vmatprep.mubr.bf16.mxu0 0
        %2909 = vmatmul.mubr.bf16.gmra.mrb[0].mxu0 %v2796
        %v2910 = vpop.f32.mrb[0].mxu0
        %v2911 = vadd.f32 0.0, %v2910
        %v2912 = vpop.f32.mrb[0].mxu0
        %v2913 = vpop.f32.mrb[0].mxu0
        %v2914 = vadd.f32 0.0, %v2913
        %v2915 = vpop.f32.mrb[0].mxu0
        %2916 = vmatprep.mubr.bf16.mxu0 0
        %2917 = vmatmul.mubr.bf16.gmra.mrb[0].mxu0 %v2799
        %v2918 = vpop.f32.mrb[0].mxu0
        %v2919 = vadd.f32 0.0, %v2918
        %v2920 = vpop.f32.mrb[0].mxu0
        %v2921 = vpop.f32.mrb[0].mxu0
        %v2922 = vadd.f32 0.0, %v2921
        %v2923 = vpop.f32.mrb[0].mxu0
        %2924 = vmatprep.mubr.bf16.mxu0 0
        %2925 = vmatmul.mubr.bf16.gmra.mrb[0].mxu0 %v2802
        %v2926 = vpop.f32.mrb[0].mxu0
        %v2927 = vadd.f32 0.0, %v2926
        %v2928 = vpop.f32.mrb[0].mxu0
        %v2929 = vpop.f32.mrb[0].mxu0
        %v2930 = vadd.f32 0.0, %v2929
        %v2931 = vpop.f32.mrb[0].mxu0
        %2932 = vmatprep.mubr.bf16.mxu0 0
        %2933 = vmatmul.mubr.bf16.gmra.mrb[0].mxu0 %v2805
        %v2934 = vpop.f32.mrb[0].mxu0
        %v2935 = vadd.f32 0.0, %v2934
        %v2936 = vpop.f32.mrb[0].mxu0
        %v2937 = vpop.f32.mrb[0].mxu0
        %v2938 = vadd.f32 0.0, %v2937
        %v2939 = vpop.f32.mrb[0].mxu0
        %2940 = vmatprep.mubr.bf16.mxu0 0
        %2941 = vmatmul.mubr.bf16.gmra.mrb[0].mxu0 %v2808
        %v2942 = vpop.f32.mrb[0].mxu0
        %v2943 = vadd.f32 0.0, %v2942
        %v2944 = vpop.f32.mrb[0].mxu0
        %v2945 = vpop.f32.mrb[0].mxu0
        %v2946 = vadd.f32 0.0, %v2945
        %v2947 = vpop.f32.mrb[0].mxu0
        %2948 = vmatprep.mubr.bf16.mxu0 0
        %2949 = vmatmul.mubr.bf16.gmra.mrb[0].mxu0 %v2811
        %v2950 = vpop.f32.mrb[0].mxu0
        %v2951 = vadd.f32 0.0, %v2950
        %v2952 = vpop.f32.mrb[0].mxu0
        %v2953 = vpop.f32.mrb[0].mxu0
        %v2954 = vadd.f32 0.0, %v2953
        %v2955 = vpop.f32.mrb[0].mxu0
        %2956 = vmatprep.mubr.bf16.mxu0 0
        %2957 = vmatmul.mubr.bf16.gmra.mrb[0].mxu0 %v2814
        %v2958 = vpop.f32.mrb[0].mxu0
        %v2959 = vadd.f32 0.0, %v2958
        %v2960 = vpop.f32.mrb[0].mxu0
        %v2961 = vpop.f32.mrb[0].mxu0
        %v2962 = vadd.f32 0.0, %v2961
        %v2963 = vpop.f32.mrb[0].mxu0
        %2964 = vmatprep.mubr.bf16.mxu0 0
        %2965 = vmatmul.mubr.bf16.gmra.mrb[0].mxu0 %v2817
        %v2966 = vpop.f32.mrb[0].mxu0
        %v2967 = vadd.f32 0.0, %v2966
        %v2968 = vpop.f32.mrb[0].mxu0
        %v2969 = vpop.f32.mrb[0].mxu0
        %v2970 = vadd.f32 0.0, %v2969
        %v2971 = vpop.f32.mrb[0].mxu0
        %2972 = vmatprep.mubr.bf16.mxu0 0
        %2973 = vmatmul.mubr.bf16.gmra.mrb[0].mxu0 %v2820
        %v2974 = vpop.f32.mrb[0].mxu0
        %v2975 = vadd.f32 0.0, %v2974
        %v2976 = vpop.f32.mrb[0].mxu0
        %v2977 = vpop.f32.mrb[0].mxu0
        %v2978 = vadd.f32 0.0, %v2977
        %v2979 = vpop.f32.mrb[0].mxu0
        %2980 = vmatprep.mubr.bf16.mxu0 0
        %2981 = vmatmul.mubr.bf16.gmra.mrb[0].mxu0 %v2823
        %v2982 = vpop.f32.mrb[0].mxu0
        %v2983 = vadd.f32 0.0, %v2982
        %v2984 = vpop.f32.mrb[0].mxu0
        %v2985 = vpop.f32.mrb[0].mxu0
        %v2986 = vadd.f32 0.0, %v2985
        %v2987 = vpop.f32.mrb[0].mxu0
        %2988 = vdwg.mxu0
        %v2989 = vadd.f32 %v2519, %v2863
        %v2990 = vadd.f32 %v2520, %v2866
        %v2991 = vadd.f32 %v2521, %v2871
        %v2992 = vadd.f32 %v2522, %v2874
        %v2993 = vadd.f32 %v2523, %v2879
        %v2994 = vadd.f32 %v2524, %v2882
        %v2995 = vadd.f32 %v2525, %v2887
        %v2996 = vadd.f32 %v2526, %v2890
        %v2997 = vadd.f32 %v2527, %v2895
        %v2998 = vadd.f32 %v2528, %v2898
        %v2999 = vadd.f32 %v2529, %v2903
        %v3000 = vadd.f32 %v2530, %v2906
        %v3001 = vadd.f32 %v2531, %v2911
        %v3002 = vadd.f32 %v2532, %v2914
        %v3003 = vadd.f32 %v2533, %v2919
        %v3004 = vadd.f32 %v2534, %v2922
        %v3005 = vadd.f32 %v2535, %v2927
        %v3006 = vadd.f32 %v2536, %v2930
        %v3007 = vadd.f32 %v2537, %v2935
        %v3008 = vadd.f32 %v2538, %v2938
        %v3009 = vadd.f32 %v2539, %v2943
        %v3010 = vadd.f32 %v2540, %v2946
        %v3011 = vadd.f32 %v2541, %v2951
        %v3012 = vadd.f32 %v2542, %v2954
        %v3013 = vadd.f32 %v2543, %v2959
        %v3014 = vadd.f32 %v2544, %v2962
        %v3015 = vadd.f32 %v2545, %v2967
        %v3016 = vadd.f32 %v2546, %v2970
        %v3017 = vadd.f32 %v2547, %v2975
        %v3018 = vadd.f32 %v2548, %v2978
        %v3019 = vadd.f32 %v2549, %v2983
        %v3020 = vadd.f32 %v2550, %v2986
        %s3021 = scalar_lea.vmem %s270, 48
        %v3022 = vld [vmem:[%s3021] sm:$0xf]
        %v3023 = vld [vmem:[%s3021 + $0x4] sm:$0xf]
        %v3024 = vld [vmem:[%s3021 + $0xc] sm:$0xf]
        %v3025 = vld [vmem:[%s3021 + $0x10] sm:$0xf]
        %v3026 = vld [vmem:[%s3021 + $0x18] sm:$0xf]
        %v3027 = vld [vmem:[%s3021 + $0x1c] sm:$0xf]
        %v3028 = vld [vmem:[%s3021 + $0x24] sm:$0xf]
        %v3029 = vld [vmem:[%s3021 + $0x28] sm:$0xf]
        %v3030 = vld [vmem:[%s3021 + $0x30] sm:$0xf]
        %v3031 = vld [vmem:[%s3021 + $0x34] sm:$0xf]
        %v3032 = vld [vmem:[%s3021 + $0x3c] sm:$0xf]
        %v3033 = vld [vmem:[%s3021 + $0x40] sm:$0xf]
        %v3034 = vld [vmem:[%s3021 + $0x48] sm:$0xf]
        %v3035 = vld [vmem:[%s3021 + $0x4c] sm:$0xf]
        %v3036 = vld [vmem:[%s3021 + $0x54] sm:$0xf]
        %v3037 = vld [vmem:[%s3021 + $0x58] sm:$0xf]
        %v3038 = vld [vmem:[%s3021 + $0x60] sm:$0xf]
        %v3039 = vld [vmem:[%s3021 + $0x64] sm:$0xf]
        %v3040 = vld [vmem:[%s3021 + $0x6c] sm:$0xf]
        %v3041 = vld [vmem:[%s3021 + $0x70] sm:$0xf]
        %v3042 = vld [vmem:[%s3021 + $0x78] sm:$0xf]
        %v3043 = vld [vmem:[%s3021 + $0x7c] sm:$0xf]
        %v3044 = vld [vmem:[%s3021 + $0x84] sm:$0xf]
        %v3045 = vld [vmem:[%s3021 + $0x88] sm:$0xf]
        %v3046 = vld [vmem:[%s3021 + $0x90] sm:$0xf]
        %v3047 = vld [vmem:[%s3021 + $0x94] sm:$0xf]
        %v3048 = vld [vmem:[%s3021 + $0x9c] sm:$0xf]
        %v3049 = vld [vmem:[%s3021 + $0xa0] sm:$0xf]
        %v3050 = vld [vmem:[%s3021 + $0xa8] sm:$0xf]
        %v3051 = vld [vmem:[%s3021 + $0xac] sm:$0xf]
        %v3052 = vld [vmem:[%s3021 + $0xb4] sm:$0xf]
        %v3053 = vld [vmem:[%s3021 + $0xb8] sm:$0xf]
        %s3054 = scalar_lea.vmem %s277, 12
        %v3055 = vld [vmem:[%s3054] sm:$0x3]
        %v3088 = vunpack.c.l.b16 %v3022
        %v3089 = vunpack.c.l.b16 %v3023
        %v3090 = vunpack.c.l.b16 %v3024
        %v3091 = vunpack.c.l.b16 %v3025
        %v3092 = vunpack.c.l.b16 %v3026
        %v3093 = vunpack.c.l.b16 %v3027
        %v3094 = vunpack.c.l.b16 %v3028
        %v3095 = vunpack.c.l.b16 %v3029
        %v3096 = vunpack.c.l.b16 %v3030
        %v3097 = vunpack.c.l.b16 %v3031
        %v3098 = vunpack.c.l.b16 %v3032
        %v3099 = vunpack.c.l.b16 %v3033
        %v3100 = vunpack.c.l.b16 %v3034
        %v3101 = vunpack.c.l.b16 %v3035
        %v3102 = vunpack.c.l.b16 %v3036
        %v3103 = vunpack.c.l.b16 %v3037
        %v3104 = vunpack.c.l.b16 %v3038
        %v3105 = vunpack.c.l.b16 %v3039
        %v3106 = vunpack.c.l.b16 %v3040
        %v3107 = vunpack.c.l.b16 %v3041
        %v3108 = vunpack.c.l.b16 %v3042
        %v3109 = vunpack.c.l.b16 %v3043
        %v3110 = vunpack.c.l.b16 %v3044
        %v3111 = vunpack.c.l.b16 %v3045
        %v3112 = vunpack.c.l.b16 %v3046
        %v3113 = vunpack.c.l.b16 %v3047
        %v3114 = vunpack.c.l.b16 %v3048
        %v3115 = vunpack.c.l.b16 %v3049
        %v3116 = vunpack.c.l.b16 %v3050
        %v3117 = vunpack.c.l.b16 %v3051
        %v3118 = vunpack.c.l.b16 %v3052
        %v3119 = vunpack.c.l.b16 %v3053
        %v3120 = vpack.c.b16 %v3089, %v3088
        %v3121 = vpack.c.b16 %v3091, %v3090
        %v3122 = vpack.c.b16 %v3093, %v3092
        %v3123 = vpack.c.b16 %v3095, %v3094
        %v3124 = vpack.c.b16 %v3097, %v3096
        %v3125 = vpack.c.b16 %v3099, %v3098
        %v3126 = vpack.c.b16 %v3101, %v3100
        %v3127 = vpack.c.b16 %v3103, %v3102
        %v3128 = vpack.c.b16 %v3105, %v3104
        %v3129 = vpack.c.b16 %v3107, %v3106
        %v3130 = vpack.c.b16 %v3109, %v3108
        %v3131 = vpack.c.b16 %v3111, %v3110
        %v3132 = vpack.c.b16 %v3113, %v3112
        %v3133 = vpack.c.b16 %v3115, %v3114
        %v3134 = vpack.c.b16 %v3117, %v3116
        %v3135 = vpack.c.b16 %v3119, %v3118
        %v3137 = vsel %vm466, %v3120, 0
        %v3140 = vsel %vm466, %v3121, 0
        %v3143 = vsel %vm466, %v3122, 0
        %v3146 = vsel %vm466, %v3123, 0
        %v3149 = vsel %vm466, %v3124, 0
        %v3152 = vsel %vm466, %v3125, 0
        %v3155 = vsel %vm466, %v3126, 0
        %v3158 = vsel %vm466, %v3127, 0
        %v3161 = vsel %vm466, %v3128, 0
        %v3164 = vsel %vm466, %v3129, 0
        %v3167 = vsel %vm466, %v3130, 0
        %v3170 = vsel %vm466, %v3131, 0
        %v3173 = vsel %vm466, %v3132, 0
        %v3176 = vsel %vm466, %v3133, 0
        %v3179 = vsel %vm466, %v3134, 0
        %v3182 = vsel %vm466, %v3135, 0
        %v3185 = vsel %vm515, %v3055, 0
        %3187 = vmatprep.subr.bf16.mxu0 0
        %3188 = vmatpush1.bf16.msra.mxu0 %v3185
        %3189 = vmatprep.subr.bf16.mxu0 0
        %3190 = vmatpush1.bf16.msra.mxu0 0
        %3191 = vmatprep.subr.bf16.mxu0 0
        %3192 = vmatpush1.bf16.msra.mxu0 0
        %3193 = vmatprep.subr.bf16.mxu0 0
        %3194 = vmatpush1.bf16.msra.mxu0 0
        %3195 = vmatprep.subr.bf16.mxu0 0
        %3196 = vmatpush1.bf16.msra.mxu0 0
        %3197 = vmatprep.subr.bf16.mxu0 0
        %3198 = vmatpush1.bf16.msra.mxu0 0
        %3199 = vmatprep.subr.bf16.mxu0 0
        %3200 = vmatpush1.bf16.msra.mxu0 0
        %3201 = vmatprep.subr.bf16.mxu0 0
        %3202 = vmatpush1.bf16.msra.mxu0 0
        %3203 = vmatprep.subr.bf16.mxu0 0
        %3204 = vmatpush1.bf16.msra.mxu0 0
        %3205 = vmatprep.subr.bf16.mxu0 0
        %3206 = vmatpush1.bf16.msra.mxu0 0
        %3207 = vmatprep.subr.bf16.mxu0 0
        %3208 = vmatpush1.bf16.msra.mxu0 0
        %3209 = vmatprep.subr.bf16.mxu0 0
        %3210 = vmatpush1.bf16.msra.mxu0 0
        %3211 = vmatprep.subr.bf16.mxu0 0
        %3212 = vmatpush1.bf16.msra.mxu0 0
        %3213 = vmatprep.subr.bf16.mxu0 0
        %3214 = vmatpush1.bf16.msra.mxu0 0
        %3215 = vmatprep.subr.bf16.mxu0 0
        %3216 = vmatpush1.bf16.msra.mxu0 0
        %3217 = vmatprep.subr.bf16.mxu0 0
        %3218 = vmatpush1.bf16.msra.mxu0 0
        %3219 = vmatprep.mubr.bf16.mxu0 0
        %3220 = vmatmul.mubr.bf16.gmra.mrb[0].mxu0 %v3137
        %v3221 = vpop.f32.mrb[0].mxu0
        %v3222 = vadd.f32 0.0, %v3221
        %v3223 = vpop.f32.mrb[0].mxu0
        %v3224 = vpop.f32.mrb[0].mxu0
        %v3225 = vadd.f32 0.0, %v3224
        %v3226 = vpop.f32.mrb[0].mxu0
        %3227 = vmatprep.mubr.bf16.mxu0 0
        %3228 = vmatmul.mubr.bf16.gmra.mrb[0].mxu0 %v3140
        %v3229 = vpop.f32.mrb[0].mxu0
        %v3230 = vadd.f32 0.0, %v3229
        %v3231 = vpop.f32.mrb[0].mxu0
        %v3232 = vpop.f32.mrb[0].mxu0
        %v3233 = vadd.f32 0.0, %v3232
        %v3234 = vpop.f32.mrb[0].mxu0
        %3235 = vmatprep.mubr.bf16.mxu0 0
        %3236 = vmatmul.mubr.bf16.gmra.mrb[0].mxu0 %v3143
        %v3237 = vpop.f32.mrb[0].mxu0
        %v3238 = vadd.f32 0.0, %v3237
        %v3239 = vpop.f32.mrb[0].mxu0
        %v3240 = vpop.f32.mrb[0].mxu0
        %v3241 = vadd.f32 0.0, %v3240
        %v3242 = vpop.f32.mrb[0].mxu0
        %3243 = vmatprep.mubr.bf16.mxu0 0
        %3244 = vmatmul.mubr.bf16.gmra.mrb[0].mxu0 %v3146
        %v3245 = vpop.f32.mrb[0].mxu0
        %v3246 = vadd.f32 0.0, %v3245
        %v3247 = vpop.f32.mrb[0].mxu0
        %v3248 = vpop.f32.mrb[0].mxu0
        %v3249 = vadd.f32 0.0, %v3248
        %v3250 = vpop.f32.mrb[0].mxu0
        %3251 = vmatprep.mubr.bf16.mxu0 0
        %3252 = vmatmul.mubr.bf16.gmra.mrb[0].mxu0 %v3149
        %v3253 = vpop.f32.mrb[0].mxu0
        %v3254 = vadd.f32 0.0, %v3253
        %v3255 = vpop.f32.mrb[0].mxu0
        %v3256 = vpop.f32.mrb[0].mxu0
        %v3257 = vadd.f32 0.0, %v3256
        %v3258 = vpop.f32.mrb[0].mxu0
        %3259 = vmatprep.mubr.bf16.mxu0 0
        %3260 = vmatmul.mubr.bf16.gmra.mrb[0].mxu0 %v3152
        %v3261 = vpop.f32.mrb[0].mxu0
        %v3262 = vadd.f32 0.0, %v3261
        %v3263 = vpop.f32.mrb[0].mxu0
        %v3264 = vpop.f32.mrb[0].mxu0
        %v3265 = vadd.f32 0.0, %v3264
        %v3266 = vpop.f32.mrb[0].mxu0
        %3267 = vmatprep.mubr.bf16.mxu0 0
        %3268 = vmatmul.mubr.bf16.gmra.mrb[0].mxu0 %v3155
        %v3269 = vpop.f32.mrb[0].mxu0
        %v3270 = vadd.f32 0.0, %v3269
        %v3271 = vpop.f32.mrb[0].mxu0
        %v3272 = vpop.f32.mrb[0].mxu0
        %v3273 = vadd.f32 0.0, %v3272
        %v3274 = vpop.f32.mrb[0].mxu0
        %3275 = vmatprep.mubr.bf16.mxu0 0
        %3276 = vmatmul.mubr.bf16.gmra.mrb[0].mxu0 %v3158
        %v3277 = vpop.f32.mrb[0].mxu0
        %v3278 = vadd.f32 0.0, %v3277
        %v3279 = vpop.f32.mrb[0].mxu0
        %v3280 = vpop.f32.mrb[0].mxu0
        %v3281 = vadd.f32 0.0, %v3280
        %v3282 = vpop.f32.mrb[0].mxu0
        %3283 = vmatprep.mubr.bf16.mxu0 0
        %3284 = vmatmul.mubr.bf16.gmra.mrb[0].mxu0 %v3161
        %v3285 = vpop.f32.mrb[0].mxu0
        %v3286 = vadd.f32 0.0, %v3285
        %v3287 = vpop.f32.mrb[0].mxu0
        %v3288 = vpop.f32.mrb[0].mxu0
        %v3289 = vadd.f32 0.0, %v3288
        %v3290 = vpop.f32.mrb[0].mxu0
        %3291 = vmatprep.mubr.bf16.mxu0 0
        %3292 = vmatmul.mubr.bf16.gmra.mrb[0].mxu0 %v3164
        %v3293 = vpop.f32.mrb[0].mxu0
        %v3294 = vadd.f32 0.0, %v3293
        %v3295 = vpop.f32.mrb[0].mxu0
        %v3296 = vpop.f32.mrb[0].mxu0
        %v3297 = vadd.f32 0.0, %v3296
        %v3298 = vpop.f32.mrb[0].mxu0
        %3299 = vmatprep.mubr.bf16.mxu0 0
        %3300 = vmatmul.mubr.bf16.gmra.mrb[0].mxu0 %v3167
        %v3301 = vpop.f32.mrb[0].mxu0
        %v3302 = vadd.f32 0.0, %v3301
        %v3303 = vpop.f32.mrb[0].mxu0
        %v3304 = vpop.f32.mrb[0].mxu0
        %v3305 = vadd.f32 0.0, %v3304
        %v3306 = vpop.f32.mrb[0].mxu0
        %3307 = vmatprep.mubr.bf16.mxu0 0
        %3308 = vmatmul.mubr.bf16.gmra.mrb[0].mxu0 %v3170
        %v3309 = vpop.f32.mrb[0].mxu0
        %v3310 = vadd.f32 0.0, %v3309
        %v3311 = vpop.f32.mrb[0].mxu0
        %v3312 = vpop.f32.mrb[0].mxu0
        %v3313 = vadd.f32 0.0, %v3312
        %v3314 = vpop.f32.mrb[0].mxu0
        %3315 = vmatprep.mubr.bf16.mxu0 0
        %3316 = vmatmul.mubr.bf16.gmra.mrb[0].mxu0 %v3173
        %v3317 = vpop.f32.mrb[0].mxu0
        %v3318 = vadd.f32 0.0, %v3317
        %v3319 = vpop.f32.mrb[0].mxu0
        %v3320 = vpop.f32.mrb[0].mxu0
        %v3321 = vadd.f32 0.0, %v3320
        %v3322 = vpop.f32.mrb[0].mxu0
        %3323 = vmatprep.mubr.bf16.mxu0 0
        %3324 = vmatmul.mubr.bf16.gmra.mrb[0].mxu0 %v3176
        %v3325 = vpop.f32.mrb[0].mxu0
        %v3326 = vadd.f32 0.0, %v3325
        %v3327 = vpop.f32.mrb[0].mxu0
        %v3328 = vpop.f32.mrb[0].mxu0
        %v3329 = vadd.f32 0.0, %v3328
        %v3330 = vpop.f32.mrb[0].mxu0
        %3331 = vmatprep.mubr.bf16.mxu0 0
        %3332 = vmatmul.mubr.bf16.gmra.mrb[0].mxu0 %v3179
        %v3333 = vpop.f32.mrb[0].mxu0
        %v3334 = vadd.f32 0.0, %v3333
        %v3335 = vpop.f32.mrb[0].mxu0
        %v3336 = vpop.f32.mrb[0].mxu0
        %v3337 = vadd.f32 0.0, %v3336
        %v3338 = vpop.f32.mrb[0].mxu0
        %3339 = vmatprep.mubr.bf16.mxu0 0
        %3340 = vmatmul.mubr.bf16.gmra.mrb[0].mxu0 %v3182
        %v3341 = vpop.f32.mrb[0].mxu0
        %v3342 = vadd.f32 0.0, %v3341
        %v3343 = vpop.f32.mrb[0].mxu0
        %v3344 = vpop.f32.mrb[0].mxu0
        %v3345 = vadd.f32 0.0, %v3344
        %v3346 = vpop.f32.mrb[0].mxu0
        %3347 = vdwg.mxu0
        %v3348 = vadd.f32 %v2989, %v3222
        %v3349 = vadd.f32 %v2990, %v3225
        %v3350 = vadd.f32 %v2991, %v3230
        %v3351 = vadd.f32 %v2992, %v3233
        %v3352 = vadd.f32 %v2993, %v3238
        %v3353 = vadd.f32 %v2994, %v3241
        %v3354 = vadd.f32 %v2995, %v3246
        %v3355 = vadd.f32 %v2996, %v3249
        %v3356 = vadd.f32 %v2997, %v3254
        %v3357 = vadd.f32 %v2998, %v3257
        %v3358 = vadd.f32 %v2999, %v3262
        %v3359 = vadd.f32 %v3000, %v3265
        %v3360 = vadd.f32 %v3001, %v3270
        %v3361 = vadd.f32 %v3002, %v3273
        %v3362 = vadd.f32 %v3003, %v3278
        %v3363 = vadd.f32 %v3004, %v3281
        %v3364 = vadd.f32 %v3005, %v3286
        %v3365 = vadd.f32 %v3006, %v3289
        %v3366 = vadd.f32 %v3007, %v3294
        %v3367 = vadd.f32 %v3008, %v3297
        %v3368 = vadd.f32 %v3009, %v3302
        %v3369 = vadd.f32 %v3010, %v3305
        %v3370 = vadd.f32 %v3011, %v3310
        %v3371 = vadd.f32 %v3012, %v3313
        %v3372 = vadd.f32 %v3013, %v3318
        %v3373 = vadd.f32 %v3014, %v3321
        %v3374 = vadd.f32 %v3015, %v3326
        %v3375 = vadd.f32 %v3016, %v3329
        %v3376 = vadd.f32 %v3017, %v3334
        %v3377 = vadd.f32 %v3018, %v3337
        %v3378 = vadd.f32 %v3019, %v3342
        %v3379 = vadd.f32 %v3020, %v3345
        %v3380 = vld [vmem:[%s3021] sm:$0xe]
        %v3381 = vld [vmem:[%s3021 + $0x4] sm:$0xf]
        %v3382 = vld [vmem:[%s3021 + $0x8] sm:$0x1]
        %v3383 = vld [vmem:[%s3021 + $0xc] sm:$0xe]
        %v3384 = vld [vmem:[%s3021 + $0x10] sm:$0xf]
        %v3385 = vld [vmem:[%s3021 + $0x14] sm:$0x1]
        %v3386 = vld [vmem:[%s3021 + $0x18] sm:$0xe]
        %v3387 = vld [vmem:[%s3021 + $0x1c] sm:$0xf]
        %v3388 = vld [vmem:[%s3021 + $0x20] sm:$0x1]
        %v3389 = vld [vmem:[%s3021 + $0x24] sm:$0xe]
        %v3390 = vld [vmem:[%s3021 + $0x28] sm:$0xf]
        %v3391 = vld [vmem:[%s3021 + $0x2c] sm:$0x1]
        %v3392 = vld [vmem:[%s3021 + $0x30] sm:$0xe]
        %v3393 = vld [vmem:[%s3021 + $0x34] sm:$0xf]
        %v3394 = vld [vmem:[%s3021 + $0x38] sm:$0x1]
        %v3395 = vld [vmem:[%s3021 + $0x3c] sm:$0xe]
        %v3396 = vld [vmem:[%s3021 + $0x40] sm:$0xf]
        %v3397 = vld [vmem:[%s3021 + $0x44] sm:$0x1]
        %v3398 = vld [vmem:[%s3021 + $0x48] sm:$0xe]
        %v3399 = vld [vmem:[%s3021 + $0x4c] sm:$0xf]
        %v3400 = vld [vmem:[%s3021 + $0x50] sm:$0x1]
        %v3401 = vld [vmem:[%s3021 + $0x54] sm:$0xe]
        %v3402 = vld [vmem:[%s3021 + $0x58] sm:$0xf]
        %v3403 = vld [vmem:[%s3021 + $0x5c] sm:$0x1]
        %v3404 = vld [vmem:[%s3021 + $0x60] sm:$0xe]
        %v3405 = vld [vmem:[%s3021 + $0x64] sm:$0xf]
        %v3406 = vld [vmem:[%s3021 + $0x68] sm:$0x1]
        %v3407 = vld [vmem:[%s3021 + $0x6c] sm:$0xe]
        %v3408 = vld [vmem:[%s3021 + $0x70] sm:$0xf]
        %v3409 = vld [vmem:[%s3021 + $0x74] sm:$0x1]
        %v3410 = vld [vmem:[%s3021 + $0x78] sm:$0xe]
        %v3411 = vld [vmem:[%s3021 + $0x7c] sm:$0xf]
        %v3412 = vld [vmem:[%s3021 + $0x80] sm:$0x1]
        %v3413 = vld [vmem:[%s3021 + $0x84] sm:$0xe]
        %v3414 = vld [vmem:[%s3021 + $0x88] sm:$0xf]
        %v3415 = vld [vmem:[%s3021 + $0x8c] sm:$0x1]
        %v3416 = vld [vmem:[%s3021 + $0x90] sm:$0xe]
        %v3417 = vld [vmem:[%s3021 + $0x94] sm:$0xf]
        %v3418 = vld [vmem:[%s3021 + $0x98] sm:$0x1]
        %v3419 = vld [vmem:[%s3021 + $0x9c] sm:$0xe]
        %v3420 = vld [vmem:[%s3021 + $0xa0] sm:$0xf]
        %v3421 = vld [vmem:[%s3021 + $0xa4] sm:$0x1]
        %v3422 = vld [vmem:[%s3021 + $0xa8] sm:$0xe]
        %v3423 = vld [vmem:[%s3021 + $0xac] sm:$0xf]
        %v3424 = vld [vmem:[%s3021 + $0xb0] sm:$0x1]
        %v3425 = vld [vmem:[%s3021 + $0xb4] sm:$0xe]
        %v3426 = vld [vmem:[%s3021 + $0xb8] sm:$0xf]
        %v3427 = vld [vmem:[%s3021 + $0xbc] sm:$0x1]
        %v3476 = vrot.slane %v3380, 5
        %v3477 = vrot.slane %v3476, 4
        %v3478 = vrot.slane %v3381, 5
        %v3479 = vsel %vm810, %v3477, %v3478
        %v3480 = vrot.slane %v3478, 4
        %v3481 = vrot.slane %v3382, 5
        %v3482 = vsel %vm810, %v3480, %v3481
        %v3483 = vrot.slane %v3383, 5
        %v3484 = vrot.slane %v3483, 4
        %v3485 = vrot.slane %v3384, 5
        %v3486 = vsel %vm810, %v3484, %v3485
        %v3487 = vrot.slane %v3485, 4
        %v3488 = vrot.slane %v3385, 5
        %v3489 = vsel %vm810, %v3487, %v3488
        %v3490 = vrot.slane %v3386, 5
        %v3491 = vrot.slane %v3490, 4
        %v3492 = vrot.slane %v3387, 5
        %v3493 = vsel %vm810, %v3491, %v3492
        %v3494 = vrot.slane %v3492, 4
        %v3495 = vrot.slane %v3388, 5
        %v3496 = vsel %vm810, %v3494, %v3495
        %v3497 = vrot.slane %v3389, 5
        %v3498 = vrot.slane %v3497, 4
        %v3499 = vrot.slane %v3390, 5
        %v3500 = vsel %vm810, %v3498, %v3499
        %v3501 = vrot.slane %v3499, 4
        %v3502 = vrot.slane %v3391, 5
        %v3503 = vsel %vm810, %v3501, %v3502
        %v3504 = vrot.slane %v3392, 5
        %v3505 = vrot.slane %v3504, 4
        %v3506 = vrot.slane %v3393, 5
        %v3507 = vsel %vm810, %v3505, %v3506
        %v3508 = vrot.slane %v3506, 4
        %v3509 = vrot.slane %v3394, 5
        %v3510 = vsel %vm810, %v3508, %v3509
        %v3511 = vrot.slane %v3395, 5
        %v3512 = vrot.slane %v3511, 4
        %v3513 = vrot.slane %v3396, 5
        %v3514 = vsel %vm810, %v3512, %v3513
        %v3515 = vrot.slane %v3513, 4
        %v3516 = vrot.slane %v3397, 5
        %v3517 = vsel %vm810, %v3515, %v3516
        %v3518 = vrot.slane %v3398, 5
        %v3519 = vrot.slane %v3518, 4
        %v3520 = vrot.slane %v3399, 5
        %v3521 = vsel %vm810, %v3519, %v3520
        %v3522 = vrot.slane %v3520, 4
        %v3523 = vrot.slane %v3400, 5
        %v3524 = vsel %vm810, %v3522, %v3523
        %v3525 = vrot.slane %v3401, 5
        %v3526 = vrot.slane %v3525, 4
        %v3527 = vrot.slane %v3402, 5
        %v3528 = vsel %vm810, %v3526, %v3527
        %v3529 = vrot.slane %v3527, 4
        %v3530 = vrot.slane %v3403, 5
        %v3531 = vsel %vm810, %v3529, %v3530
        %v3532 = vrot.slane %v3404, 5
        %v3533 = vrot.slane %v3532, 4
        %v3534 = vrot.slane %v3405, 5
        %v3535 = vsel %vm810, %v3533, %v3534
        %v3536 = vrot.slane %v3534, 4
        %v3537 = vrot.slane %v3406, 5
        %v3538 = vsel %vm810, %v3536, %v3537
        %v3539 = vrot.slane %v3407, 5
        %v3540 = vrot.slane %v3539, 4
        %v3541 = vrot.slane %v3408, 5
        %v3542 = vsel %vm810, %v3540, %v3541
        %v3543 = vrot.slane %v3541, 4
        %v3544 = vrot.slane %v3409, 5
        %v3545 = vsel %vm810, %v3543, %v3544
        %v3546 = vrot.slane %v3410, 5
        %v3547 = vrot.slane %v3546, 4
        %v3548 = vrot.slane %v3411, 5
        %v3549 = vsel %vm810, %v3547, %v3548
        %v3550 = vrot.slane %v3548, 4
        %v3551 = vrot.slane %v3412, 5
        %v3552 = vsel %vm810, %v3550, %v3551
        %v3553 = vrot.slane %v3413, 5
        %v3554 = vrot.slane %v3553, 4
        %v3555 = vrot.slane %v3414, 5
        %v3556 = vsel %vm810, %v3554, %v3555
        %v3557 = vrot.slane %v3555, 4
        %v3558 = vrot.slane %v3415, 5
        %v3559 = vsel %vm810, %v3557, %v3558
        %v3560 = vrot.slane %v3416, 5
        %v3561 = vrot.slane %v3560, 4
        %v3562 = vrot.slane %v3417, 5
        %v3563 = vsel %vm810, %v3561, %v3562
        %v3564 = vrot.slane %v3562, 4
        %v3565 = vrot.slane %v3418, 5
        %v3566 = vsel %vm810, %v3564, %v3565
        %v3567 = vrot.slane %v3419, 5
        %v3568 = vrot.slane %v3567, 4
        %v3569 = vrot.slane %v3420, 5
        %v3570 = vsel %vm810, %v3568, %v3569
        %v3571 = vrot.slane %v3569, 4
        %v3572 = vrot.slane %v3421, 5
        %v3573 = vsel %vm810, %v3571, %v3572
        %v3574 = vrot.slane %v3422, 5
        %v3575 = vrot.slane %v3574, 4
        %v3576 = vrot.slane %v3423, 5
        %v3577 = vsel %vm810, %v3575, %v3576
        %v3578 = vrot.slane %v3576, 4
        %v3579 = vrot.slane %v3424, 5
        %v3580 = vsel %vm810, %v3578, %v3579
        %v3581 = vrot.slane %v3425, 5
        %v3582 = vrot.slane %v3581, 4
        %v3583 = vrot.slane %v3426, 5
        %v3584 = vsel %vm810, %v3582, %v3583
        %v3585 = vrot.slane %v3583, 4
        %v3586 = vrot.slane %v3427, 5
        %v3587 = vsel %vm810, %v3585, %v3586
        %s3588 = scalar_lea.vmem %s277, 14
        %v3589 = vld [vmem:[%s3588] sm:$0x3]
        %v3590 = vunpack.c.l.b16 %v3479
        %v3591 = vunpack.c.l.b16 %v3482
        %v3592 = vunpack.c.l.b16 %v3486
        %v3593 = vunpack.c.l.b16 %v3489
        %v3594 = vunpack.c.l.b16 %v3493
        %v3595 = vunpack.c.l.b16 %v3496
        %v3596 = vunpack.c.l.b16 %v3500
        %v3597 = vunpack.c.l.b16 %v3503
        %v3598 = vunpack.c.l.b16 %v3507
        %v3599 = vunpack.c.l.b16 %v3510
        %v3600 = vunpack.c.l.b16 %v3514
        %v3601 = vunpack.c.l.b16 %v3517
        %v3602 = vunpack.c.l.b16 %v3521
        %v3603 = vunpack.c.l.b16 %v3524
        %v3604 = vunpack.c.l.b16 %v3528
        %v3605 = vunpack.c.l.b16 %v3531
        %v3606 = vunpack.c.l.b16 %v3535
        %v3607 = vunpack.c.l.b16 %v3538
        %v3608 = vunpack.c.l.b16 %v3542
        %v3609 = vunpack.c.l.b16 %v3545
        %v3610 = vunpack.c.l.b16 %v3549
        %v3611 = vunpack.c.l.b16 %v3552
        %v3612 = vunpack.c.l.b16 %v3556
        %v3613 = vunpack.c.l.b16 %v3559
        %v3614 = vunpack.c.l.b16 %v3563
        %v3615 = vunpack.c.l.b16 %v3566
        %v3616 = vunpack.c.l.b16 %v3570
        %v3617 = vunpack.c.l.b16 %v3573
        %v3618 = vunpack.c.l.b16 %v3577
        %v3619 = vunpack.c.l.b16 %v3580
        %v3620 = vunpack.c.l.b16 %v3584
        %v3621 = vunpack.c.l.b16 %v3587
        %v3622 = vpack.c.b16 %v3591, %v3590
        %v3623 = vpack.c.b16 %v3593, %v3592
        %v3624 = vpack.c.b16 %v3595, %v3594
        %v3625 = vpack.c.b16 %v3597, %v3596
        %v3626 = vpack.c.b16 %v3599, %v3598
        %v3627 = vpack.c.b16 %v3601, %v3600
        %v3628 = vpack.c.b16 %v3603, %v3602
        %v3629 = vpack.c.b16 %v3605, %v3604
        %v3630 = vpack.c.b16 %v3607, %v3606
        %v3631 = vpack.c.b16 %v3609, %v3608
        %v3632 = vpack.c.b16 %v3611, %v3610
        %v3633 = vpack.c.b16 %v3613, %v3612
        %v3634 = vpack.c.b16 %v3615, %v3614
        %v3635 = vpack.c.b16 %v3617, %v3616
        %v3636 = vpack.c.b16 %v3619, %v3618
        %v3637 = vpack.c.b16 %v3621, %v3620
        %v3639 = vsel %vm466, %v3622, 0
        %v3642 = vsel %vm466, %v3623, 0
        %v3645 = vsel %vm466, %v3624, 0
        %v3648 = vsel %vm466, %v3625, 0
        %v3651 = vsel %vm466, %v3626, 0
        %v3654 = vsel %vm466, %v3627, 0
        %v3657 = vsel %vm466, %v3628, 0
        %v3660 = vsel %vm466, %v3629, 0
        %v3663 = vsel %vm466, %v3630, 0
        %v3666 = vsel %vm466, %v3631, 0
        %v3669 = vsel %vm466, %v3632, 0
        %v3672 = vsel %vm466, %v3633, 0
        %v3675 = vsel %vm466, %v3634, 0
        %v3678 = vsel %vm466, %v3635, 0
        %v3681 = vsel %vm466, %v3636, 0
        %v3684 = vsel %vm466, %v3637, 0
        %v3687 = vsel %vm515, %v3589, 0
        %3689 = vmatprep.subr.bf16.mxu0 0
        %3690 = vmatpush1.bf16.msra.mxu0 %v3687
        %3691 = vmatprep.subr.bf16.mxu0 0
        %3692 = vmatpush1.bf16.msra.mxu0 0
        %3693 = vmatprep.subr.bf16.mxu0 0
        %3694 = vmatpush1.bf16.msra.mxu0 0
        %3695 = vmatprep.subr.bf16.mxu0 0
        %3696 = vmatpush1.bf16.msra.mxu0 0
        %3697 = vmatprep.subr.bf16.mxu0 0
        %3698 = vmatpush1.bf16.msra.mxu0 0
        %3699 = vmatprep.subr.bf16.mxu0 0
        %3700 = vmatpush1.bf16.msra.mxu0 0
        %3701 = vmatprep.subr.bf16.mxu0 0
        %3702 = vmatpush1.bf16.msra.mxu0 0
        %3703 = vmatprep.subr.bf16.mxu0 0
        %3704 = vmatpush1.bf16.msra.mxu0 0
        %3705 = vmatprep.subr.bf16.mxu0 0
        %3706 = vmatpush1.bf16.msra.mxu0 0
        %3707 = vmatprep.subr.bf16.mxu0 0
        %3708 = vmatpush1.bf16.msra.mxu0 0
        %3709 = vmatprep.subr.bf16.mxu0 0
        %3710 = vmatpush1.bf16.msra.mxu0 0
        %3711 = vmatprep.subr.bf16.mxu0 0
        %3712 = vmatpush1.bf16.msra.mxu0 0
        %3713 = vmatprep.subr.bf16.mxu0 0
        %3714 = vmatpush1.bf16.msra.mxu0 0
        %3715 = vmatprep.subr.bf16.mxu0 0
        %3716 = vmatpush1.bf16.msra.mxu0 0
        %3717 = vmatprep.subr.bf16.mxu0 0
        %3718 = vmatpush1.bf16.msra.mxu0 0
        %3719 = vmatprep.subr.bf16.mxu0 0
        %3720 = vmatpush1.bf16.msra.mxu0 0
        %3721 = vmatprep.mubr.bf16.mxu0 0
        %3722 = vmatmul.mubr.bf16.gmra.mrb[0].mxu0 %v3639
        %v3723 = vpop.f32.mrb[0].mxu0
        %v3724 = vadd.f32 0.0, %v3723
        %v3725 = vpop.f32.mrb[0].mxu0
        %v3726 = vpop.f32.mrb[0].mxu0
        %v3727 = vadd.f32 0.0, %v3726
        %v3728 = vpop.f32.mrb[0].mxu0
        %3729 = vmatprep.mubr.bf16.mxu0 0
        %3730 = vmatmul.mubr.bf16.gmra.mrb[0].mxu0 %v3642
        %v3731 = vpop.f32.mrb[0].mxu0
        %v3732 = vadd.f32 0.0, %v3731
        %v3733 = vpop.f32.mrb[0].mxu0
        %v3734 = vpop.f32.mrb[0].mxu0
        %v3735 = vadd.f32 0.0, %v3734
        %v3736 = vpop.f32.mrb[0].mxu0
        %3737 = vmatprep.mubr.bf16.mxu0 0
        %3738 = vmatmul.mubr.bf16.gmra.mrb[0].mxu0 %v3645
        %v3739 = vpop.f32.mrb[0].mxu0
        %v3740 = vadd.f32 0.0, %v3739
        %v3741 = vpop.f32.mrb[0].mxu0
        %v3742 = vpop.f32.mrb[0].mxu0
        %v3743 = vadd.f32 0.0, %v3742
        %v3744 = vpop.f32.mrb[0].mxu0
        %3745 = vmatprep.mubr.bf16.mxu0 0
        %3746 = vmatmul.mubr.bf16.gmra.mrb[0].mxu0 %v3648
        %v3747 = vpop.f32.mrb[0].mxu0
        %v3748 = vadd.f32 0.0, %v3747
        %v3749 = vpop.f32.mrb[0].mxu0
        %v3750 = vpop.f32.mrb[0].mxu0
        %v3751 = vadd.f32 0.0, %v3750
        %v3752 = vpop.f32.mrb[0].mxu0
        %3753 = vmatprep.mubr.bf16.mxu0 0
        %3754 = vmatmul.mubr.bf16.gmra.mrb[0].mxu0 %v3651
        %v3755 = vpop.f32.mrb[0].mxu0
        %v3756 = vadd.f32 0.0, %v3755
        %v3757 = vpop.f32.mrb[0].mxu0
        %v3758 = vpop.f32.mrb[0].mxu0
        %v3759 = vadd.f32 0.0, %v3758
        %v3760 = vpop.f32.mrb[0].mxu0
        %3761 = vmatprep.mubr.bf16.mxu0 0
        %3762 = vmatmul.mubr.bf16.gmra.mrb[0].mxu0 %v3654
        %v3763 = vpop.f32.mrb[0].mxu0
        %v3764 = vadd.f32 0.0, %v3763
        %v3765 = vpop.f32.mrb[0].mxu0
        %v3766 = vpop.f32.mrb[0].mxu0
        %v3767 = vadd.f32 0.0, %v3766
        %v3768 = vpop.f32.mrb[0].mxu0
        %3769 = vmatprep.mubr.bf16.mxu0 0
        %3770 = vmatmul.mubr.bf16.gmra.mrb[0].mxu0 %v3657
        %v3771 = vpop.f32.mrb[0].mxu0
        %v3772 = vadd.f32 0.0, %v3771
        %v3773 = vpop.f32.mrb[0].mxu0
        %v3774 = vpop.f32.mrb[0].mxu0
        %v3775 = vadd.f32 0.0, %v3774
        %v3776 = vpop.f32.mrb[0].mxu0
        %3777 = vmatprep.mubr.bf16.mxu0 0
        %3778 = vmatmul.mubr.bf16.gmra.mrb[0].mxu0 %v3660
        %v3779 = vpop.f32.mrb[0].mxu0
        %v3780 = vadd.f32 0.0, %v3779
        %v3781 = vpop.f32.mrb[0].mxu0
        %v3782 = vpop.f32.mrb[0].mxu0
        %v3783 = vadd.f32 0.0, %v3782
        %v3784 = vpop.f32.mrb[0].mxu0
        %3785 = vmatprep.mubr.bf16.mxu0 0
        %3786 = vmatmul.mubr.bf16.gmra.mrb[0].mxu0 %v3663
        %v3787 = vpop.f32.mrb[0].mxu0
        %v3788 = vadd.f32 0.0, %v3787
        %v3789 = vpop.f32.mrb[0].mxu0
        %v3790 = vpop.f32.mrb[0].mxu0
        %v3791 = vadd.f32 0.0, %v3790
        %v3792 = vpop.f32.mrb[0].mxu0
        %3793 = vmatprep.mubr.bf16.mxu0 0
        %3794 = vmatmul.mubr.bf16.gmra.mrb[0].mxu0 %v3666
        %v3795 = vpop.f32.mrb[0].mxu0
        %v3796 = vadd.f32 0.0, %v3795
        %v3797 = vpop.f32.mrb[0].mxu0
        %v3798 = vpop.f32.mrb[0].mxu0
        %v3799 = vadd.f32 0.0, %v3798
        %v3800 = vpop.f32.mrb[0].mxu0
        %3801 = vmatprep.mubr.bf16.mxu0 0
        %3802 = vmatmul.mubr.bf16.gmra.mrb[0].mxu0 %v3669
        %v3803 = vpop.f32.mrb[0].mxu0
        %v3804 = vadd.f32 0.0, %v3803
        %v3805 = vpop.f32.mrb[0].mxu0
        %v3806 = vpop.f32.mrb[0].mxu0
        %v3807 = vadd.f32 0.0, %v3806
        %v3808 = vpop.f32.mrb[0].mxu0
        %3809 = vmatprep.mubr.bf16.mxu0 0
        %3810 = vmatmul.mubr.bf16.gmra.mrb[0].mxu0 %v3672
        %v3811 = vpop.f32.mrb[0].mxu0
        %v3812 = vadd.f32 0.0, %v3811
        %v3813 = vpop.f32.mrb[0].mxu0
        %v3814 = vpop.f32.mrb[0].mxu0
        %v3815 = vadd.f32 0.0, %v3814
        %v3816 = vpop.f32.mrb[0].mxu0
        %3817 = vmatprep.mubr.bf16.mxu0 0
        %3818 = vmatmul.mubr.bf16.gmra.mrb[0].mxu0 %v3675
        %v3819 = vpop.f32.mrb[0].mxu0
        %v3820 = vadd.f32 0.0, %v3819
        %v3821 = vpop.f32.mrb[0].mxu0
        %v3822 = vpop.f32.mrb[0].mxu0
        %v3823 = vadd.f32 0.0, %v3822
        %v3824 = vpop.f32.mrb[0].mxu0
        %3825 = vmatprep.mubr.bf16.mxu0 0
        %3826 = vmatmul.mubr.bf16.gmra.mrb[0].mxu0 %v3678
        %v3827 = vpop.f32.mrb[0].mxu0
        %v3828 = vadd.f32 0.0, %v3827
        %v3829 = vpop.f32.mrb[0].mxu0
        %v3830 = vpop.f32.mrb[0].mxu0
        %v3831 = vadd.f32 0.0, %v3830
        %v3832 = vpop.f32.mrb[0].mxu0
        %3833 = vmatprep.mubr.bf16.mxu0 0
        %3834 = vmatmul.mubr.bf16.gmra.mrb[0].mxu0 %v3681
        %v3835 = vpop.f32.mrb[0].mxu0
        %v3836 = vadd.f32 0.0, %v3835
        %v3837 = vpop.f32.mrb[0].mxu0
        %v3838 = vpop.f32.mrb[0].mxu0
        %v3839 = vadd.f32 0.0, %v3838
        %v3840 = vpop.f32.mrb[0].mxu0
        %3841 = vmatprep.mubr.bf16.mxu0 0
        %3842 = vmatmul.mubr.bf16.gmra.mrb[0].mxu0 %v3684
        %v3843 = vpop.f32.mrb[0].mxu0
        %v3844 = vadd.f32 0.0, %v3843
        %v3845 = vpop.f32.mrb[0].mxu0
        %v3846 = vpop.f32.mrb[0].mxu0
        %v3847 = vadd.f32 0.0, %v3846
        %v3848 = vpop.f32.mrb[0].mxu0
        %3849 = vdwg.mxu0
        %v3850 = vadd.f32 %v3348, %v3724
        %v3851 = vadd.f32 %v3349, %v3727
        %v3852 = vadd.f32 %v3350, %v3732
        %v3853 = vadd.f32 %v3351, %v3735
        %v3854 = vadd.f32 %v3352, %v3740
        %v3855 = vadd.f32 %v3353, %v3743
        %v3856 = vadd.f32 %v3354, %v3748
        %v3857 = vadd.f32 %v3355, %v3751
        %v3858 = vadd.f32 %v3356, %v3756
        %v3859 = vadd.f32 %v3357, %v3759
        %v3860 = vadd.f32 %v3358, %v3764
        %v3861 = vadd.f32 %v3359, %v3767
        %v3862 = vadd.f32 %v3360, %v3772
        %v3863 = vadd.f32 %v3361, %v3775
        %v3864 = vadd.f32 %v3362, %v3780
        %v3865 = vadd.f32 %v3363, %v3783
        %v3866 = vadd.f32 %v3364, %v3788
        %v3867 = vadd.f32 %v3365, %v3791
        %v3868 = vadd.f32 %v3366, %v3796
        %v3869 = vadd.f32 %v3367, %v3799
        %v3870 = vadd.f32 %v3368, %v3804
        %v3871 = vadd.f32 %v3369, %v3807
        %v3872 = vadd.f32 %v3370, %v3812
        %v3873 = vadd.f32 %v3371, %v3815
        %v3874 = vadd.f32 %v3372, %v3820
        %v3875 = vadd.f32 %v3373, %v3823
        %v3876 = vadd.f32 %v3374, %v3828
        %v3877 = vadd.f32 %v3375, %v3831
        %v3878 = vadd.f32 %v3376, %v3836
        %v3879 = vadd.f32 %v3377, %v3839
        %v3880 = vadd.f32 %v3378, %v3844
        %v3881 = vadd.f32 %v3379, %v3847
        %v3882 = vld [vmem:[%s3021] sm:$0xc]
        %v3883 = vld [vmem:[%s3021 + $0x8] sm:$0x3]
        %v3884 = vld [vmem:[%s3021 + $0xc] sm:$0xc]
        %v3885 = vld [vmem:[%s3021 + $0x14] sm:$0x3]
        %v3886 = vld [vmem:[%s3021 + $0x18] sm:$0xc]
        %v3887 = vld [vmem:[%s3021 + $0x20] sm:$0x3]
        %v3888 = vld [vmem:[%s3021 + $0x24] sm:$0xc]
        %v3889 = vld [vmem:[%s3021 + $0x2c] sm:$0x3]
        %v3890 = vld [vmem:[%s3021 + $0x30] sm:$0xc]
        %v3891 = vld [vmem:[%s3021 + $0x38] sm:$0x3]
        %v3892 = vld [vmem:[%s3021 + $0x3c] sm:$0xc]
        %v3893 = vld [vmem:[%s3021 + $0x44] sm:$0x3]
        %v3894 = vld [vmem:[%s3021 + $0x48] sm:$0xc]
        %v3895 = vld [vmem:[%s3021 + $0x50] sm:$0x3]
        %v3896 = vld [vmem:[%s3021 + $0x54] sm:$0xc]
        %v3897 = vld [vmem:[%s3021 + $0x5c] sm:$0x3]
        %v3898 = vld [vmem:[%s3021 + $0x60] sm:$0xc]
        %v3899 = vld [vmem:[%s3021 + $0x68] sm:$0x3]
        %v3900 = vld [vmem:[%s3021 + $0x6c] sm:$0xc]
        %v3901 = vld [vmem:[%s3021 + $0x74] sm:$0x3]
        %v3902 = vld [vmem:[%s3021 + $0x78] sm:$0xc]
        %v3903 = vld [vmem:[%s3021 + $0x80] sm:$0x3]
        %v3904 = vld [vmem:[%s3021 + $0x84] sm:$0xc]
        %v3905 = vld [vmem:[%s3021 + $0x8c] sm:$0x3]
        %v3906 = vld [vmem:[%s3021 + $0x90] sm:$0xc]
        %v3907 = vld [vmem:[%s3021 + $0x98] sm:$0x3]
        %v3908 = vld [vmem:[%s3021 + $0x9c] sm:$0xc]
        %v3909 = vld [vmem:[%s3021 + $0xa4] sm:$0x3]
        %v3910 = vld [vmem:[%s3021 + $0xa8] sm:$0xc]
        %v3911 = vld [vmem:[%s3021 + $0xb0] sm:$0x3]
        %v3912 = vld [vmem:[%s3021 + $0xb4] sm:$0xc]
        %v3913 = vld [vmem:[%s3021 + $0xbc] sm:$0x3]
        %v3946 = vrot.slane %v3882, 6
        %v3947 = vrot.slane %v3946, 4
        %v3948 = vrot.slane %v3381, 6
        %v3949 = vsel %vm1283, %v3947, %v3948
        %v3950 = vrot.slane %v3948, 4
        %v3951 = vrot.slane %v3883, 6
        %v3952 = vsel %vm1283, %v3950, %v3951
        %v3953 = vrot.slane %v3884, 6
        %v3954 = vrot.slane %v3953, 4
        %v3955 = vrot.slane %v3384, 6
        %v3956 = vsel %vm1283, %v3954, %v3955
        %v3957 = vrot.slane %v3955, 4
        %v3958 = vrot.slane %v3885, 6
        %v3959 = vsel %vm1283, %v3957, %v3958
        %v3960 = vrot.slane %v3886, 6
        %v3961 = vrot.slane %v3960, 4
        %v3962 = vrot.slane %v3387, 6
        %v3963 = vsel %vm1283, %v3961, %v3962
        %v3964 = vrot.slane %v3962, 4
        %v3965 = vrot.slane %v3887, 6
        %v3966 = vsel %vm1283, %v3964, %v3965
        %v3967 = vrot.slane %v3888, 6
        %v3968 = vrot.slane %v3967, 4
        %v3969 = vrot.slane %v3390, 6
        %v3970 = vsel %vm1283, %v3968, %v3969
        %v3971 = vrot.slane %v3969, 4
        %v3972 = vrot.slane %v3889, 6
        %v3973 = vsel %vm1283, %v3971, %v3972
        %v3974 = vrot.slane %v3890, 6
        %v3975 = vrot.slane %v3974, 4
        %v3976 = vrot.slane %v3393, 6
        %v3977 = vsel %vm1283, %v3975, %v3976
        %v3978 = vrot.slane %v3976, 4
        %v3979 = vrot.slane %v3891, 6
        %v3980 = vsel %vm1283, %v3978, %v3979
        %v3981 = vrot.slane %v3892, 6
        %v3982 = vrot.slane %v3981, 4
        %v3983 = vrot.slane %v3396, 6
        %v3984 = vsel %vm1283, %v3982, %v3983
        %v3985 = vrot.slane %v3983, 4
        %v3986 = vrot.slane %v3893, 6
        %v3987 = vsel %vm1283, %v3985, %v3986
        %v3988 = vrot.slane %v3894, 6
        %v3989 = vrot.slane %v3988, 4
        %v3990 = vrot.slane %v3399, 6
        %v3991 = vsel %vm1283, %v3989, %v3990
        %v3992 = vrot.slane %v3990, 4
        %v3993 = vrot.slane %v3895, 6
        %v3994 = vsel %vm1283, %v3992, %v3993
        %v3995 = vrot.slane %v3896, 6
        %v3996 = vrot.slane %v3995, 4
        %v3997 = vrot.slane %v3402, 6
        %v3998 = vsel %vm1283, %v3996, %v3997
        %v3999 = vrot.slane %v3997, 4
        %v4000 = vrot.slane %v3897, 6
        %v4001 = vsel %vm1283, %v3999, %v4000
        %v4002 = vrot.slane %v3898, 6
        %v4003 = vrot.slane %v4002, 4
        %v4004 = vrot.slane %v3405, 6
        %v4005 = vsel %vm1283, %v4003, %v4004
        %v4006 = vrot.slane %v4004, 4
        %v4007 = vrot.slane %v3899, 6
        %v4008 = vsel %vm1283, %v4006, %v4007
        %v4009 = vrot.slane %v3900, 6
        %v4010 = vrot.slane %v4009, 4
        %v4011 = vrot.slane %v3408, 6
        %v4012 = vsel %vm1283, %v4010, %v4011
        %v4013 = vrot.slane %v4011, 4
        %v4014 = vrot.slane %v3901, 6
        %v4015 = vsel %vm1283, %v4013, %v4014
        %v4016 = vrot.slane %v3902, 6
        %v4017 = vrot.slane %v4016, 4
        %v4018 = vrot.slane %v3411, 6
        %v4019 = vsel %vm1283, %v4017, %v4018
        %v4020 = vrot.slane %v4018, 4
        %v4021 = vrot.slane %v3903, 6
        %v4022 = vsel %vm1283, %v4020, %v4021
        %v4023 = vrot.slane %v3904, 6
        %v4024 = vrot.slane %v4023, 4
        %v4025 = vrot.slane %v3414, 6
        %v4026 = vsel %vm1283, %v4024, %v4025
        %v4027 = vrot.slane %v4025, 4
        %v4028 = vrot.slane %v3905, 6
        %v4029 = vsel %vm1283, %v4027, %v4028
        %v4030 = vrot.slane %v3906, 6
        %v4031 = vrot.slane %v4030, 4
        %v4032 = vrot.slane %v3417, 6
        %v4033 = vsel %vm1283, %v4031, %v4032
        %v4034 = vrot.slane %v4032, 4
        %v4035 = vrot.slane %v3907, 6
        %v4036 = vsel %vm1283, %v4034, %v4035
        %v4037 = vrot.slane %v3908, 6
        %v4038 = vrot.slane %v4037, 4
        %v4039 = vrot.slane %v3420, 6
        %v4040 = vsel %vm1283, %v4038, %v4039
        %v4041 = vrot.slane %v4039, 4
        %v4042 = vrot.slane %v3909, 6
        %v4043 = vsel %vm1283, %v4041, %v4042
        %v4044 = vrot.slane %v3910, 6
        %v4045 = vrot.slane %v4044, 4
        %v4046 = vrot.slane %v3423, 6
        %v4047 = vsel %vm1283, %v4045, %v4046
        %v4048 = vrot.slane %v4046, 4
        %v4049 = vrot.slane %v3911, 6
        %v4050 = vsel %vm1283, %v4048, %v4049
        %v4051 = vrot.slane %v3912, 6
        %v4052 = vrot.slane %v4051, 4
        %v4053 = vrot.slane %v3426, 6
        %v4054 = vsel %vm1283, %v4052, %v4053
        %v4055 = vrot.slane %v4053, 4
        %v4056 = vrot.slane %v3913, 6
        %v4057 = vsel %vm1283, %v4055, %v4056
        %s4058 = scalar_lea.vmem %s277, 16
        %v4059 = vld [vmem:[%s4058] sm:$0x3]
        %v4060 = vunpack.c.l.b16 %v3949
        %v4061 = vunpack.c.l.b16 %v3952
        %v4062 = vunpack.c.l.b16 %v3956
        %v4063 = vunpack.c.l.b16 %v3959
        %v4064 = vunpack.c.l.b16 %v3963
        %v4065 = vunpack.c.l.b16 %v3966
        %v4066 = vunpack.c.l.b16 %v3970
        %v4067 = vunpack.c.l.b16 %v3973
        %v4068 = vunpack.c.l.b16 %v3977
        %v4069 = vunpack.c.l.b16 %v3980
        %v4070 = vunpack.c.l.b16 %v3984
        %v4071 = vunpack.c.l.b16 %v3987
        %v4072 = vunpack.c.l.b16 %v3991
        %v4073 = vunpack.c.l.b16 %v3994
        %v4074 = vunpack.c.l.b16 %v3998
        %v4075 = vunpack.c.l.b16 %v4001
        %v4076 = vunpack.c.l.b16 %v4005
        %v4077 = vunpack.c.l.b16 %v4008
        %v4078 = vunpack.c.l.b16 %v4012
        %v4079 = vunpack.c.l.b16 %v4015
        %v4080 = vunpack.c.l.b16 %v4019
        %v4081 = vunpack.c.l.b16 %v4022
        %v4082 = vunpack.c.l.b16 %v4026
        %v4083 = vunpack.c.l.b16 %v4029
        %v4084 = vunpack.c.l.b16 %v4033
        %v4085 = vunpack.c.l.b16 %v4036
        %v4086 = vunpack.c.l.b16 %v4040
        %v4087 = vunpack.c.l.b16 %v4043
        %v4088 = vunpack.c.l.b16 %v4047
        %v4089 = vunpack.c.l.b16 %v4050
        %v4090 = vunpack.c.l.b16 %v4054
        %v4091 = vunpack.c.l.b16 %v4057
        %v4092 = vpack.c.b16 %v4061, %v4060
        %v4093 = vpack.c.b16 %v4063, %v4062
        %v4094 = vpack.c.b16 %v4065, %v4064
        %v4095 = vpack.c.b16 %v4067, %v4066
        %v4096 = vpack.c.b16 %v4069, %v4068
        %v4097 = vpack.c.b16 %v4071, %v4070
        %v4098 = vpack.c.b16 %v4073, %v4072
        %v4099 = vpack.c.b16 %v4075, %v4074
        %v4100 = vpack.c.b16 %v4077, %v4076
        %v4101 = vpack.c.b16 %v4079, %v4078
        %v4102 = vpack.c.b16 %v4081, %v4080
        %v4103 = vpack.c.b16 %v4083, %v4082
        %v4104 = vpack.c.b16 %v4085, %v4084
        %v4105 = vpack.c.b16 %v4087, %v4086
        %v4106 = vpack.c.b16 %v4089, %v4088
        %v4107 = vpack.c.b16 %v4091, %v4090
        %v4109 = vsel %vm466, %v4092, 0
        %v4112 = vsel %vm466, %v4093, 0
        %v4115 = vsel %vm466, %v4094, 0
        %v4118 = vsel %vm466, %v4095, 0
        %v4121 = vsel %vm466, %v4096, 0
        %v4124 = vsel %vm466, %v4097, 0
        %v4127 = vsel %vm466, %v4098, 0
        %v4130 = vsel %vm466, %v4099, 0
        %v4133 = vsel %vm466, %v4100, 0
        %v4136 = vsel %vm466, %v4101, 0
        %v4139 = vsel %vm466, %v4102, 0
        %v4142 = vsel %vm466, %v4103, 0
        %v4145 = vsel %vm466, %v4104, 0
        %v4148 = vsel %vm466, %v4105, 0
        %v4151 = vsel %vm466, %v4106, 0
        %v4154 = vsel %vm466, %v4107, 0
        %v4157 = vsel %vm515, %v4059, 0
        %4159 = vmatprep.subr.bf16.mxu0 0
        %4160 = vmatpush1.bf16.msra.mxu0 %v4157
        %4161 = vmatprep.subr.bf16.mxu0 0
        %4162 = vmatpush1.bf16.msra.mxu0 0
        %4163 = vmatprep.subr.bf16.mxu0 0
        %4164 = vmatpush1.bf16.msra.mxu0 0
        %4165 = vmatprep.subr.bf16.mxu0 0
        %4166 = vmatpush1.bf16.msra.mxu0 0
        %4167 = vmatprep.subr.bf16.mxu0 0
        %4168 = vmatpush1.bf16.msra.mxu0 0
        %4169 = vmatprep.subr.bf16.mxu0 0
        %4170 = vmatpush1.bf16.msra.mxu0 0
        %4171 = vmatprep.subr.bf16.mxu0 0
        %4172 = vmatpush1.bf16.msra.mxu0 0
        %4173 = vmatprep.subr.bf16.mxu0 0
        %4174 = vmatpush1.bf16.msra.mxu0 0
        %4175 = vmatprep.subr.bf16.mxu0 0
        %4176 = vmatpush1.bf16.msra.mxu0 0
        %4177 = vmatprep.subr.bf16.mxu0 0
        %4178 = vmatpush1.bf16.msra.mxu0 0
        %4179 = vmatprep.subr.bf16.mxu0 0
        %4180 = vmatpush1.bf16.msra.mxu0 0
        %4181 = vmatprep.subr.bf16.mxu0 0
        %4182 = vmatpush1.bf16.msra.mxu0 0
        %4183 = vmatprep.subr.bf16.mxu0 0
        %4184 = vmatpush1.bf16.msra.mxu0 0
        %4185 = vmatprep.subr.bf16.mxu0 0
        %4186 = vmatpush1.bf16.msra.mxu0 0
        %4187 = vmatprep.subr.bf16.mxu0 0
        %4188 = vmatpush1.bf16.msra.mxu0 0
        %4189 = vmatprep.subr.bf16.mxu0 0
        %4190 = vmatpush1.bf16.msra.mxu0 0
        %4191 = vmatprep.mubr.bf16.mxu0 0
        %4192 = vmatmul.mubr.bf16.gmra.mrb[0].mxu0 %v4109
        %v4193 = vpop.f32.mrb[0].mxu0
        %v4194 = vadd.f32 0.0, %v4193
        %v4195 = vpop.f32.mrb[0].mxu0
        %v4196 = vpop.f32.mrb[0].mxu0
        %v4197 = vadd.f32 0.0, %v4196
        %v4198 = vpop.f32.mrb[0].mxu0
        %4199 = vmatprep.mubr.bf16.mxu0 0
        %4200 = vmatmul.mubr.bf16.gmra.mrb[0].mxu0 %v4112
        %v4201 = vpop.f32.mrb[0].mxu0
        %v4202 = vadd.f32 0.0, %v4201
        %v4203 = vpop.f32.mrb[0].mxu0
        %v4204 = vpop.f32.mrb[0].mxu0
        %v4205 = vadd.f32 0.0, %v4204
        %v4206 = vpop.f32.mrb[0].mxu0
        %4207 = vmatprep.mubr.bf16.mxu0 0
        %4208 = vmatmul.mubr.bf16.gmra.mrb[0].mxu0 %v4115
        %v4209 = vpop.f32.mrb[0].mxu0
        %v4210 = vadd.f32 0.0, %v4209
        %v4211 = vpop.f32.mrb[0].mxu0
        %v4212 = vpop.f32.mrb[0].mxu0
        %v4213 = vadd.f32 0.0, %v4212
        %v4214 = vpop.f32.mrb[0].mxu0
        %4215 = vmatprep.mubr.bf16.mxu0 0
        %4216 = vmatmul.mubr.bf16.gmra.mrb[0].mxu0 %v4118
        %v4217 = vpop.f32.mrb[0].mxu0
        %v4218 = vadd.f32 0.0, %v4217
        %v4219 = vpop.f32.mrb[0].mxu0
        %v4220 = vpop.f32.mrb[0].mxu0
        %v4221 = vadd.f32 0.0, %v4220
        %v4222 = vpop.f32.mrb[0].mxu0
        %4223 = vmatprep.mubr.bf16.mxu0 0
        %4224 = vmatmul.mubr.bf16.gmra.mrb[0].mxu0 %v4121
        %v4225 = vpop.f32.mrb[0].mxu0
        %v4226 = vadd.f32 0.0, %v4225
        %v4227 = vpop.f32.mrb[0].mxu0
        %v4228 = vpop.f32.mrb[0].mxu0
        %v4229 = vadd.f32 0.0, %v4228
        %v4230 = vpop.f32.mrb[0].mxu0
        %4231 = vmatprep.mubr.bf16.mxu0 0
        %4232 = vmatmul.mubr.bf16.gmra.mrb[0].mxu0 %v4124
        %v4233 = vpop.f32.mrb[0].mxu0
        %v4234 = vadd.f32 0.0, %v4233
        %v4235 = vpop.f32.mrb[0].mxu0
        %v4236 = vpop.f32.mrb[0].mxu0
        %v4237 = vadd.f32 0.0, %v4236
        %v4238 = vpop.f32.mrb[0].mxu0
        %4239 = vmatprep.mubr.bf16.mxu0 0
        %4240 = vmatmul.mubr.bf16.gmra.mrb[0].mxu0 %v4127
        %v4241 = vpop.f32.mrb[0].mxu0
        %v4242 = vadd.f32 0.0, %v4241
        %v4243 = vpop.f32.mrb[0].mxu0
        %v4244 = vpop.f32.mrb[0].mxu0
        %v4245 = vadd.f32 0.0, %v4244
        %v4246 = vpop.f32.mrb[0].mxu0
        %4247 = vmatprep.mubr.bf16.mxu0 0
        %4248 = vmatmul.mubr.bf16.gmra.mrb[0].mxu0 %v4130
        %v4249 = vpop.f32.mrb[0].mxu0
        %v4250 = vadd.f32 0.0, %v4249
        %v4251 = vpop.f32.mrb[0].mxu0
        %v4252 = vpop.f32.mrb[0].mxu0
        %v4253 = vadd.f32 0.0, %v4252
        %v4254 = vpop.f32.mrb[0].mxu0
        %4255 = vmatprep.mubr.bf16.mxu0 0
        %4256 = vmatmul.mubr.bf16.gmra.mrb[0].mxu0 %v4133
        %v4257 = vpop.f32.mrb[0].mxu0
        %v4258 = vadd.f32 0.0, %v4257
        %v4259 = vpop.f32.mrb[0].mxu0
        %v4260 = vpop.f32.mrb[0].mxu0
        %v4261 = vadd.f32 0.0, %v4260
        %v4262 = vpop.f32.mrb[0].mxu0
        %4263 = vmatprep.mubr.bf16.mxu0 0
        %4264 = vmatmul.mubr.bf16.gmra.mrb[0].mxu0 %v4136
        %v4265 = vpop.f32.mrb[0].mxu0
        %v4266 = vadd.f32 0.0, %v4265
        %v4267 = vpop.f32.mrb[0].mxu0
        %v4268 = vpop.f32.mrb[0].mxu0
        %v4269 = vadd.f32 0.0, %v4268
        %v4270 = vpop.f32.mrb[0].mxu0
        %4271 = vmatprep.mubr.bf16.mxu0 0
        %4272 = vmatmul.mubr.bf16.gmra.mrb[0].mxu0 %v4139
        %v4273 = vpop.f32.mrb[0].mxu0
        %v4274 = vadd.f32 0.0, %v4273
        %v4275 = vpop.f32.mrb[0].mxu0
        %v4276 = vpop.f32.mrb[0].mxu0
        %v4277 = vadd.f32 0.0, %v4276
        %v4278 = vpop.f32.mrb[0].mxu0
        %4279 = vmatprep.mubr.bf16.mxu0 0
        %4280 = vmatmul.mubr.bf16.gmra.mrb[0].mxu0 %v4142
        %v4281 = vpop.f32.mrb[0].mxu0
        %v4282 = vadd.f32 0.0, %v4281
        %v4283 = vpop.f32.mrb[0].mxu0
        %v4284 = vpop.f32.mrb[0].mxu0
        %v4285 = vadd.f32 0.0, %v4284
        %v4286 = vpop.f32.mrb[0].mxu0
        %4287 = vmatprep.mubr.bf16.mxu0 0
        %4288 = vmatmul.mubr.bf16.gmra.mrb[0].mxu0 %v4145
        %v4289 = vpop.f32.mrb[0].mxu0
        %v4290 = vadd.f32 0.0, %v4289
        %v4291 = vpop.f32.mrb[0].mxu0
        %v4292 = vpop.f32.mrb[0].mxu0
        %v4293 = vadd.f32 0.0, %v4292
        %v4294 = vpop.f32.mrb[0].mxu0
        %4295 = vmatprep.mubr.bf16.mxu0 0
        %4296 = vmatmul.mubr.bf16.gmra.mrb[0].mxu0 %v4148
        %v4297 = vpop.f32.mrb[0].mxu0
        %v4298 = vadd.f32 0.0, %v4297
        %v4299 = vpop.f32.mrb[0].mxu0
        %v4300 = vpop.f32.mrb[0].mxu0
        %v4301 = vadd.f32 0.0, %v4300
        %v4302 = vpop.f32.mrb[0].mxu0
        %4303 = vmatprep.mubr.bf16.mxu0 0
        %4304 = vmatmul.mubr.bf16.gmra.mrb[0].mxu0 %v4151
        %v4305 = vpop.f32.mrb[0].mxu0
        %v4306 = vadd.f32 0.0, %v4305
        %v4307 = vpop.f32.mrb[0].mxu0
        %v4308 = vpop.f32.mrb[0].mxu0
        %v4309 = vadd.f32 0.0, %v4308
        %v4310 = vpop.f32.mrb[0].mxu0
        %4311 = vmatprep.mubr.bf16.mxu0 0
        %4312 = vmatmul.mubr.bf16.gmra.mrb[0].mxu0 %v4154
        %v4313 = vpop.f32.mrb[0].mxu0
        %v4314 = vadd.f32 0.0, %v4313
        %v4315 = vpop.f32.mrb[0].mxu0
        %v4316 = vpop.f32.mrb[0].mxu0
        %v4317 = vadd.f32 0.0, %v4316
        %v4318 = vpop.f32.mrb[0].mxu0
        %4319 = vdwg.mxu0
        %v4320 = vadd.f32 %v3850, %v4194
        %v4321 = vadd.f32 %v3851, %v4197
        %v4322 = vadd.f32 %v3852, %v4202
        %v4323 = vadd.f32 %v3853, %v4205
        %v4324 = vadd.f32 %v3854, %v4210
        %v4325 = vadd.f32 %v3855, %v4213
        %v4326 = vadd.f32 %v3856, %v4218
        %v4327 = vadd.f32 %v3857, %v4221
        %v4328 = vadd.f32 %v3858, %v4226
        %v4329 = vadd.f32 %v3859, %v4229
        %v4330 = vadd.f32 %v3860, %v4234
        %v4331 = vadd.f32 %v3861, %v4237
        %v4332 = vadd.f32 %v3862, %v4242
        %v4333 = vadd.f32 %v3863, %v4245
        %v4334 = vadd.f32 %v3864, %v4250
        %v4335 = vadd.f32 %v3865, %v4253
        %v4336 = vadd.f32 %v3866, %v4258
        %v4337 = vadd.f32 %v3867, %v4261
        %v4338 = vadd.f32 %v3868, %v4266
        %v4339 = vadd.f32 %v3869, %v4269
        %v4340 = vadd.f32 %v3870, %v4274
        %v4341 = vadd.f32 %v3871, %v4277
        %v4342 = vadd.f32 %v3872, %v4282
        %v4343 = vadd.f32 %v3873, %v4285
        %v4344 = vadd.f32 %v3874, %v4290
        %v4345 = vadd.f32 %v3875, %v4293
        %v4346 = vadd.f32 %v3876, %v4298
        %v4347 = vadd.f32 %v3877, %v4301
        %v4348 = vadd.f32 %v3878, %v4306
        %v4349 = vadd.f32 %v3879, %v4309
        %v4350 = vadd.f32 %v3880, %v4314
        %v4351 = vadd.f32 %v3881, %v4317
        %4352 = vst [vmem:[#allocation2] sm:$0xff] %v4320
        %4353 = vst [vmem:[#allocation2 + $0x8] sm:$0xff] %v4321
        %4354 = vst [vmem:[#allocation2 + $0x10] sm:$0xff] %v4322
        %4355 = vst [vmem:[#allocation2 + $0x18] sm:$0xff] %v4323
        %4356 = vst [vmem:[#allocation2 + $0x20] sm:$0xff] %v4324
        %4357 = vst [vmem:[#allocation2 + $0x28] sm:$0xff] %v4325
        %4358 = vst [vmem:[#allocation2 + $0x30] sm:$0xff] %v4326
        %4359 = vst [vmem:[#allocation2 + $0x38] sm:$0xff] %v4327
        %4360 = vst [vmem:[#allocation2 + $0x40] sm:$0xff] %v4328
        %4361 = vst [vmem:[#allocation2 + $0x48] sm:$0xff] %v4329
        %4362 = vst [vmem:[#allocation2 + $0x50] sm:$0xff] %v4330
        %4363 = vst [vmem:[#allocation2 + $0x58] sm:$0xff] %v4331
        %4364 = vst [vmem:[#allocation2 + $0x60] sm:$0xff] %v4332
        %4365 = vst [vmem:[#allocation2 + $0x68] sm:$0xff] %v4333
        %4366 = vst [vmem:[#allocation2 + $0x70] sm:$0xff] %v4334
        %4367 = vst [vmem:[#allocation2 + $0x78] sm:$0xff] %v4335
        %4368 = vst [vmem:[#allocation2 + $0x80] sm:$0xff] %v4336
        %4369 = vst [vmem:[#allocation2 + $0x88] sm:$0xff] %v4337
        %4370 = vst [vmem:[#allocation2 + $0x90] sm:$0xff] %v4338
        %4371 = vst [vmem:[#allocation2 + $0x98] sm:$0xff] %v4339
        %4372 = vst [vmem:[#allocation2 + $0xa0] sm:$0xff] %v4340
        %4373 = vst [vmem:[#allocation2 + $0xa8] sm:$0xff] %v4341
        %4374 = vst [vmem:[#allocation2 + $0xb0] sm:$0xff] %v4342
        %4375 = vst [vmem:[#allocation2 + $0xb8] sm:$0xff] %v4343
        %4376 = vst [vmem:[#allocation2 + $0xc0] sm:$0xff] %v4344
        %4377 = vst [vmem:[#allocation2 + $0xc8] sm:$0xff] %v4345
        %4378 = vst [vmem:[#allocation2 + $0xd0] sm:$0xff] %v4346
        %4379 = vst [vmem:[#allocation2 + $0xd8] sm:$0xff] %v4347
        %4380 = vst [vmem:[#allocation2 + $0xe0] sm:$0xff] %v4348
        %4381 = vst [vmem:[#allocation2 + $0xe8] sm:$0xff] %v4349
        %4382 = vst [vmem:[#allocation2 + $0xf0] sm:$0xff] %v4350
        %4383 = vst [vmem:[#allocation2 + $0xf8] sm:$0xff] %v4351
        // Predicated region
        $region41: #{tpu_custom_call.1} parent=35 // pred_check
          %p4384 = pneg %p285
        $region42: #{tpu_custom_call.1} parent=35 // pred_check_branch
          %4386 = sbr.rel (%p4384) target = $region44
        $region43: #{tpu_custom_call.1} parent=35 // pred_region
          %v4387 = vld [vmem:[%s280] sm:$0x1]
          %v4389 = vlaneseq
          %v4390 = vshrl.u32 %v4389, 7
          %v4391 = vsub.s32 0, %v4390
          %v4392 = vrot.slane %v4387, %v4391
          %v4394 = vmul.f32 %v4320, %v4392
          %v4395 = vmul.f32 %v4321, %v4392
          %v4396 = vmul.f32 %v4322, %v4392
          %v4397 = vmul.f32 %v4323, %v4392
          %v4398 = vmul.f32 %v4324, %v4392
          %v4399 = vmul.f32 %v4325, %v4392
          %v4400 = vmul.f32 %v4326, %v4392
          %v4401 = vmul.f32 %v4327, %v4392
          %v4402 = vmul.f32 %v4328, %v4392
          %v4403 = vmul.f32 %v4329, %v4392
          %v4404 = vmul.f32 %v4330, %v4392
          %v4405 = vmul.f32 %v4331, %v4392
          %v4406 = vmul.f32 %v4332, %v4392
          %v4407 = vmul.f32 %v4333, %v4392
          %v4408 = vmul.f32 %v4334, %v4392
          %v4409 = vmul.f32 %v4335, %v4392
          %v4410 = vmul.f32 %v4336, %v4392
          %v4411 = vmul.f32 %v4337, %v4392
          %v4412 = vmul.f32 %v4338, %v4392
          %v4413 = vmul.f32 %v4339, %v4392
          %v4414 = vmul.f32 %v4340, %v4392
          %v4415 = vmul.f32 %v4341, %v4392
          %v4416 = vmul.f32 %v4342, %v4392
          %v4417 = vmul.f32 %v4343, %v4392
          %v4418 = vmul.f32 %v4344, %v4392
          %v4419 = vmul.f32 %v4345, %v4392
          %v4420 = vmul.f32 %v4346, %v4392
          %v4421 = vmul.f32 %v4347, %v4392
          %v4422 = vmul.f32 %v4348, %v4392
          %v4423 = vmul.f32 %v4349, %v4392
          %v4424 = vmul.f32 %v4350, %v4392
          %v4425 = vmul.f32 %v4351, %v4392
          %v4426 = vld [vmem:[%s283] sm:$0x1]
          %v4428 = vlaneseq
          %v4429 = vshrl.u32 %v4428, 7
          %v4430 = vsub.s32 0, %v4429
          %v4431 = vrot.slane %v4426, %v4430
          %v4433 = vadd.f32 %v4394, %v4431
          %v4434 = vadd.f32 %v4395, %v4431
          %v4435 = vadd.f32 %v4396, %v4431
          %v4436 = vadd.f32 %v4397, %v4431
          %v4437 = vadd.f32 %v4398, %v4431
          %v4438 = vadd.f32 %v4399, %v4431
          %v4439 = vadd.f32 %v4400, %v4431
          %v4440 = vadd.f32 %v4401, %v4431
          %v4441 = vadd.f32 %v4402, %v4431
          %v4442 = vadd.f32 %v4403, %v4431
          %v4443 = vadd.f32 %v4404, %v4431
          %v4444 = vadd.f32 %v4405, %v4431
          %v4445 = vadd.f32 %v4406, %v4431
          %v4446 = vadd.f32 %v4407, %v4431
          %v4447 = vadd.f32 %v4408, %v4431
          %v4448 = vadd.f32 %v4409, %v4431
          %v4449 = vadd.f32 %v4410, %v4431
          %v4450 = vadd.f32 %v4411, %v4431
          %v4451 = vadd.f32 %v4412, %v4431
          %v4452 = vadd.f32 %v4413, %v4431
          %v4453 = vadd.f32 %v4414, %v4431
          %v4454 = vadd.f32 %v4415, %v4431
          %v4455 = vadd.f32 %v4416, %v4431
          %v4456 = vadd.f32 %v4417, %v4431
          %v4457 = vadd.f32 %v4418, %v4431
          %v4458 = vadd.f32 %v4419, %v4431
          %v4459 = vadd.f32 %v4420, %v4431
          %v4460 = vadd.f32 %v4421, %v4431
          %v4461 = vadd.f32 %v4422, %v4431
          %v4462 = vadd.f32 %v4423, %v4431
          %v4463 = vadd.f32 %v4424, %v4431
          %v4464 = vadd.f32 %v4425, %v4431
          %v4465 = vmax.f32 %v4433, 0.0
          %v4466 = vmax.f32 %v4434, 0.0
          %v4467 = vmax.f32 %v4435, 0.0
          %v4468 = vmax.f32 %v4436, 0.0
          %v4469 = vmax.f32 %v4437, 0.0
          %v4470 = vmax.f32 %v4438, 0.0
          %v4471 = vmax.f32 %v4439, 0.0
          %v4472 = vmax.f32 %v4440, 0.0
          %v4473 = vmax.f32 %v4441, 0.0
          %v4474 = vmax.f32 %v4442, 0.0
          %v4475 = vmax.f32 %v4443, 0.0
          %v4476 = vmax.f32 %v4444, 0.0
          %v4477 = vmax.f32 %v4445, 0.0
          %v4478 = vmax.f32 %v4446, 0.0
          %v4479 = vmax.f32 %v4447, 0.0
          %v4480 = vmax.f32 %v4448, 0.0
          %v4481 = vmax.f32 %v4449, 0.0
          %v4482 = vmax.f32 %v4450, 0.0
          %v4483 = vmax.f32 %v4451, 0.0
          %v4484 = vmax.f32 %v4452, 0.0
          %v4485 = vmax.f32 %v4453, 0.0
          %v4486 = vmax.f32 %v4454, 0.0
          %v4487 = vmax.f32 %v4455, 0.0
          %v4488 = vmax.f32 %v4456, 0.0
          %v4489 = vmax.f32 %v4457, 0.0
          %v4490 = vmax.f32 %v4458, 0.0
          %v4491 = vmax.f32 %v4459, 0.0
          %v4492 = vmax.f32 %v4460, 0.0
          %v4493 = vmax.f32 %v4461, 0.0
          %v4494 = vmax.f32 %v4462, 0.0
          %v4495 = vmax.f32 %v4463, 0.0
          %v4496 = vmax.f32 %v4464, 0.0
          %4497 = vst [vmem:[%s262] sm:$0xff] %v4465
          %4498 = vst [vmem:[%s262 + $0x8] sm:$0xff] %v4466
          %4499 = vst [vmem:[%s262 + $0x10] sm:$0xff] %v4467
          %4500 = vst [vmem:[%s262 + $0x18] sm:$0xff] %v4468
          %4501 = vst [vmem:[%s262 + $0x20] sm:$0xff] %v4469
          %4502 = vst [vmem:[%s262 + $0x28] sm:$0xff] %v4470
          %4503 = vst [vmem:[%s262 + $0x30] sm:$0xff] %v4471
          %4504 = vst [vmem:[%s262 + $0x38] sm:$0xff] %v4472
          %4505 = vst [vmem:[%s262 + $0x40] sm:$0xff] %v4473
          %4506 = vst [vmem:[%s262 + $0x48] sm:$0xff] %v4474
          %4507 = vst [vmem:[%s262 + $0x50] sm:$0xff] %v4475
          %4508 = vst [vmem:[%s262 + $0x58] sm:$0xff] %v4476
          %4509 = vst [vmem:[%s262 + $0x60] sm:$0xff] %v4477
          %4510 = vst [vmem:[%s262 + $0x68] sm:$0xff] %v4478
          %4511 = vst [vmem:[%s262 + $0x70] sm:$0xff] %v4479
          %4512 = vst [vmem:[%s262 + $0x78] sm:$0xff] %v4480
          %4513 = vst [vmem:[%s262 + $0x80] sm:$0xff] %v4481
          %4514 = vst [vmem:[%s262 + $0x88] sm:$0xff] %v4482
          %4515 = vst [vmem:[%s262 + $0x90] sm:$0xff] %v4483
          %4516 = vst [vmem:[%s262 + $0x98] sm:$0xff] %v4484
          %4517 = vst [vmem:[%s262 + $0xa0] sm:$0xff] %v4485
          %4518 = vst [vmem:[%s262 + $0xa8] sm:$0xff] %v4486
          %4519 = vst [vmem:[%s262 + $0xb0] sm:$0xff] %v4487
          %4520 = vst [vmem:[%s262 + $0xb8] sm:$0xff] %v4488
          %4521 = vst [vmem:[%s262 + $0xc0] sm:$0xff] %v4489
          %4522 = vst [vmem:[%s262 + $0xc8] sm:$0xff] %v4490
          %4523 = vst [vmem:[%s262 + $0xd0] sm:$0xff] %v4491
          %4524 = vst [vmem:[%s262 + $0xd8] sm:$0xff] %v4492
          %4525 = vst [vmem:[%s262 + $0xe0] sm:$0xff] %v4493
          %4526 = vst [vmem:[%s262 + $0xe8] sm:$0xff] %v4494
          %4527 = vst [vmem:[%s262 + $0xf0] sm:$0xff] %v4495
          %4528 = vst [vmem:[%s262 + $0xf8] sm:$0xff] %v4496
        $region44: #{tpu_custom_call.1} parent=35 // pred_fallthru
          _
        %s4529 = sand.u32 %s155, 1
        %s4530 = scalar_lea.sflag [#allocation4], %s4529
        %s4531 = sand.u32 %s155, 1
        %s4532 = smul.addr %s4531, 256
        %s4533 = scalar_lea.vmem [#allocation3], %s4532
        // Predicated region
        $region45: #{tpu_custom_call.1} parent=35 // pred_check
          %p4534 = pneg %p165
        $region46: #{tpu_custom_call.1} parent=35 // pred_check_branch
          %4536 = sbr.rel (%p4534) target = $region48
        $region47: #{tpu_custom_call.1} parent=35 // pred_region
          %s4538 = ssub.s32 4096, 4096
          %4539 = vsyncadd %s4530, %s4538
          %s4540 = smul.addr %s23, 32
          %s4541 = sadd.s32 %s24, %s4540
          %s4542 = smul.addr %s4541, 128
          %s4543 = scalar_lea.hbm %s4, %s4542
          %s4544 = sshll.u32 %s4533, 4
          %s4545 = int_to_ptr.vmem [resolvable:$true] %s4544
          %4550 = dma.vmem_to_hbm [thread:$0]  %s4545, 4096, %s4543, %s4530, 128, 128, 8
        $region48: #{tpu_custom_call.1} parent=35 // pred_fallthru
          _
      $region36: #{tpu_custom_call.1} parent=5 // pred_fallthru
        _
      %p4551 = scmp.le.s32.totalorder 2, %s13
      // Predicated region
      $region49: #{tpu_custom_call.1} parent=5 // pred_check
        %p4552 = pneg %p4551
      $region50: #{tpu_custom_call.1} parent=5 // pred_check_branch
        %4554 = sbr.rel (%p4552) target = $region52
      $region51: #{tpu_custom_call.1} parent=5 // pred_region
        %s4555 = ssub.s32 %s13, 2
        // Predicated region
        $region53: #{tpu_custom_call.1} parent=51 // pred_check
          %p4556 = pneg %p171
        $region54: #{tpu_custom_call.1} parent=51 // pred_check_branch
          %4558 = sbr.rel (%p4556) target = $region56
        $region55: #{tpu_custom_call.1} parent=51 // pred_region
          %s4559 = sand.u32 %s156, 1
          %s4560 = scalar_lea.sflag [#allocation4], %s4559
          %s4561 = sand.u32 %s156, 1
          %s4562 = smul.addr %s4561, 256
          %s4563 = scalar_lea.vmem [#allocation3], %s4562
          %4564 = dma.done %s4560, 4096
        $region56: #{tpu_custom_call.1} parent=51 // pred_fallthru
          _
      $region52: #{tpu_custom_call.1} parent=5 // pred_fallthru
        _
    $region6: #{tpu_custom_call.1} parent=1 // loop_footer
      %s17 = sadd.s32 1, %s13
    $region7: #{tpu_custom_call.1} parent=1 // loop_footer_branch
      %12 = sbr.rel target = $region3
    $region8: #{tpu_custom_call.1} parent=1 // loop_exit
      _
    %4565 = vsyncpa [#allocation4], 1
    %s4566 = scalar_lea.sflag [#allocation4], 1
    %4567 = vsyncpa %s4566, 1

</llo_original>
